<compile_context>
chip_gen: v7x
topology: tpu7x:2x2x1
jax: 0.10.0
libtpu: 0.0.40
codegen_flags: <defaults>
</compile_context>

<pallas_src>
import jax
import jax.numpy as jnp
from jax.experimental import pallas as pl
from jax.experimental.pallas import tpu as pltpu


# ----------------------------- fused conv kernel -----------------------------

def fused_conv(patches, wm, scale, shift, identity=None, want_raw=True, m_tile=512):
    """One pallas_call: bf16 matmul + (optional residual add) + BN/ReLU epilogue.

    patches : (K, M)     bf16  im2col'd conv input (already activated / raw image)
    wm      : (Cout, K)  bf16  conv weight reshaped to match the patch row order
    scale   : (Cout, 1)  f32   BN scale of the *next* op (epilogue)
    shift   : (Cout, 1)  f32   BN shift of the *next* op (epilogue)
    identity: (Cout, M)  f32   optional residual added before the epilogue
    returns : (raw f32, act bf16) if want_raw else act bf16, each (Cout, M)
    """
    K, M = patches.shape
    Cout = wm.shape[0]
    tm = m_tile if (M >= m_tile and M % m_tile == 0) else M
    grid = (M // tm,)
    has_id = identity is not None

    def kernel(*refs):
        if has_id:
            p_ref, w_ref, sc_ref, sh_ref, id_ref = refs[:5]
            out_refs = refs[5:]
        else:
            p_ref, w_ref, sc_ref, sh_ref = refs[:4]
            out_refs = refs[4:]
        acc = jnp.dot(w_ref[...], p_ref[...], preferred_element_type=jnp.float32)
        if has_id:
            acc = acc + id_ref[...]
        act = jnp.maximum(acc * sc_ref[...] + sh_ref[...], 0.0).astype(jnp.bfloat16)
        if want_raw:
            out_refs[0][...] = acc          # raw (pre-BN) value, feeds identity path
            out_refs[1][...] = act          # relu(bn_next(raw)), feeds next conv
        else:
            out_refs[0][...] = act

    in_specs = [pl.BlockSpec((K, tm), lambda i: (0, i)),
                pl.BlockSpec((Cout, K), lambda i: (0, 0)),
                pl.BlockSpec((Cout, 1), lambda i: (0, 0)),
                pl.BlockSpec((Cout, 1), lambda i: (0, 0))]
    args = [patches, wm, scale, shift]
    if has_id:
        in_specs.append(pl.BlockSpec((Cout, tm), lambda i: (0, i)))
        args.append(identity)

    o_spec = pl.BlockSpec((Cout, tm), lambda i: (0, i))
    if want_raw:
        out_shape = (jax.ShapeDtypeStruct((Cout, M), jnp.float32),
                     jax.ShapeDtypeStruct((Cout, M), jnp.bfloat16))
        out_specs = (o_spec, o_spec)
    else:
        out_shape = jax.ShapeDtypeStruct((Cout, M), jnp.bfloat16)
        out_specs = o_spec

    return pl.pallas_call(
        kernel,
        out_shape=out_shape,
        grid=grid,
        in_specs=in_specs,
        out_specs=out_specs,
        compiler_params=pltpu.CompilerParams(dimension_semantics=("parallel",)),
    )(*args)


# ----------------------------- fused tail kernel (avgpool + fc) -----------------------------

def _tail_kernel(x_ref, p_ref, wt_ref, b_ref, o_ref):
    # x: (C, N*HW) already = relu(bn(x));  pooling expressed as matmul with P.
    pooled = jnp.dot(x_ref[...], p_ref[...], preferred_element_type=jnp.float32)   # (C, N)
    o_ref[...] = jnp.dot(wt_ref[...], pooled,
                         preferred_element_type=jnp.float32) + b_ref[...]          # (cls, N)


def tail_pool_fc(x_act, N, HW, fc_w, fc_b):
    """AvgPool2d(sqrt(HW)) + flatten + Linear fused into one kernel."""
    classes = fc_w.shape[1]
    pool = (jnp.repeat(jnp.eye(N, dtype=jnp.float32), HW, axis=0) / HW).astype(jnp.bfloat16)
    out_t = pl.pallas_call(
        _tail_kernel,
        out_shape=jax.ShapeDtypeStruct((classes, N), jnp.float32),
    )(x_act, pool, fc_w.T.astype(jnp.float32), fc_b.reshape(classes, 1).astype(jnp.float32))
    return out_t.T                                                                   # (N, classes)


# ----------------------------- XLA glue (tiny tensors) -----------------------------

def im2col(x2d, C, N, H, W, stride):
    """(C, N*H*W) -> (9*C, N*Ho*Wo) patches for a 3x3, pad=1 conv."""
    x = x2d.reshape(C, N, H, W)
    Ho = (H + 2 - 3) // stride + 1
    Wo = (W + 2 - 3) // stride + 1
    xp = jnp.pad(x, ((0, 0), (0, 0), (1, 1), (1, 1)))
    taps = []
    for kh in range(3):
        for kw in range(3):
            t = xp[:, :, kh:kh + (Ho - 1) * stride + 1:stride,
                         kw:kw + (Wo - 1) * stride + 1:stride]
            taps.append(t.reshape(C, N * Ho * Wo))
    return jnp.concatenate(taps, axis=0), Ho, Wo          # row order: (kh, kw, cin)


def wmat(w):
    """(3,3,Cin,Cout) -> (Cout, 9*Cin) matching the im2col row order, bf16."""
    cout = w.shape[-1]
    return jnp.transpose(w, (3, 0, 1, 2)).reshape(cout, -1).astype(jnp.bfloat16)


def bn_scale_shift(bn, eps=1e-5):
    gamma, beta, mean, var = bn
    inv = 1.0 / jnp.sqrt(var + eps)
    scale = (gamma * inv).reshape(-1, 1).astype(jnp.float32)
    shift = (beta - mean * gamma * inv).reshape(-1, 1).astype(jnp.float32)
    return scale, shift


# ----------------------------- forward pass -----------------------------

def resnet_forward(x_nchw, params):
    N, Cin, H, W = x_nchw.shape
    x = jnp.transpose(x_nchw, (1, 0, 2, 3)).reshape(Cin, N * H * W).astype(jnp.bfloat16)

    all_blocks = params['layer1'] + params['layer2'] + params['layer3']

    # ---- stem: conv1 of the network; epilogue applies bn1 of the first block ----
    patches, H, W = im2col(x, Cin, N, H, W, 1)
    sc, sh = bn_scale_shift(all_blocks[0]['bn1'])
    x_raw, x_act = fused_conv(patches, wmat(params['conv1']), sc, sh)
    C = params['conv1'].shape[-1]

    # ---- residual blocks ----
    for bi, bp in enumerate(all_blocks):
        s = bp['stride']
        planes = bp['conv1'].shape[-1]

        # conv1 of the block (input is already relu(bn1(x))); epilogue = bn2
        patches, Ho, Wo = im2col(x_act, C, N, H, W, s)
        sc, sh = bn_scale_shift(bp['bn2'])
        r_act = fused_conv(patches, wmat(bp['conv1']), sc, sh, want_raw=False)

        # identity path: Downsample = AvgPool2d(stride) + zero-channel expansion
        if bp['expand'] is not None:
            idn = x_raw.reshape(C, N, Ho, s, Wo, s).mean(axis=(3, 5)).reshape(C, N * Ho * Wo)
            idn = jnp.concatenate([idn] + [jnp.zeros_like(idn)] * (bp['expand'] - 1), axis=0)
        else:
            idn = x_raw
        # TODO(synk): the adaptive_avg_pool2d size-mismatch branch of BasicBlock never
        # triggers for the 32x32 CIFAR geometry used here and is not implemented.

        # conv2 of the block + residual add; epilogue = next block's bn1 (or the final bn)
        patches, _, _ = im2col(r_act, planes, N, Ho, Wo, 1)
        nxt = all_blocks[bi + 1]['bn1'] if bi + 1 < len(all_blocks) else params['bn']
        sc, sh = bn_scale_shift(nxt)
        x_raw, x_act = fused_conv(patches, wmat(bp['conv2']), sc, sh, identity=idn)

        C, H, W = planes, Ho, Wo

    # ---- tail: x_act already equals relu(bn(x)); fuse avgpool(8) + fc ----
    return tail_pool_fc(x_act, N, H * W, params['fc_w'], params['fc_b'])


# ----------------------------- deterministic parameters -----------------------------

def make_params(key, depth=8, width=1, classes=10, channels=3):
    assert (depth - 2) % 6 == 0
    nblocks = (depth - 2) // 6
    keys = iter(jax.random.split(key, 256))

    def conv_init(cin, cout):
        n = 3 * 3 * cout                                          # PyTorch init: N(0, sqrt(2/n))
        return jax.random.normal(next(keys), (3, 3, cin, cout), jnp.float32) * jnp.sqrt(2.0 / n)

    def bn_init(c):                                               # (gamma, beta, mean, var)
        return (jnp.ones((c,), jnp.float32), jnp.zeros((c,), jnp.float32),
                jnp.zeros((c,), jnp.float32), jnp.ones((c,), jnp.float32))

    params = {'conv1': conv_init(channels, 16)}
    inplanes = 16
    for name, planes, stride in (('layer1', 16 * width, 1),
                                 ('layer2', 32 * width, 2),
                                 ('layer3', 64 * width, 2)):
        blocks = []
        for i in range(nblocks):
            s = stride if i == 0 else 1
            ds = (s != 1 or inplanes != planes)
            blocks.append({
                'bn1': bn_init(inplanes),
                'conv1': conv_init(inplanes, planes),
                'bn2': bn_init(planes),
                'conv2': conv_init(planes, planes),
                'stride': s,
                'expand': (planes // inplanes) if ds else None,
            })
            inplanes = planes
        params[name] = blocks
    params['bn'] = bn_init(64 * width)
    fan_in = 64 * width
    bound = 1.0 / (fan_in ** 0.5)
    params['fc_w'] = jax.random.uniform(next(keys), (fan_in, classes), jnp.float32, -bound, bound)
    params['fc_b'] = jax.random.uniform(next(keys), (classes,), jnp.float32, -bound, bound)
    return params


# ----------------------------- main -----------------------------

if __name__ == "__main__":
    key = jax.random.PRNGKey(0)
    pkey, xkey = jax.random.split(key)
    params = make_params(pkey, depth=8, width=1, classes=10, channels=3)

    # CIFAR-style input, NCHW like the PyTorch module.
    x = jax.random.normal(xkey, (2, 3, 32, 32), jnp.float32)

    fwd = jax.jit(lambda inp: resnet_forward(inp, params))
    out = jax.block_until_ready(fwd(x))

    assert out.shape == (2, 10) and out.dtype == jnp.float32
    assert bool(jnp.all(jnp.isfinite(out)))
    print("KERNEL_OK")
</pallas_src>

<mosaic_0001>
module attributes {stable_mosaic.version = 11 : i64} {
  func.func @kernel(%arg0: i32, %arg1: memref<27x512xbf16, #tpu.memory_space<vmem>>, %arg2: memref<16x27xbf16, #tpu.memory_space<vmem>>, %arg3: memref<16x1xf32, #tpu.memory_space<vmem>>, %arg4: memref<16x1xf32, #tpu.memory_space<vmem>>, %arg5: memref<16x512xf32, #tpu.memory_space<vmem>>, %arg6: memref<16x512xbf16, #tpu.memory_space<vmem>>) attributes {dimension_semantics = [#tpu.dimension_semantics<parallel>], iteration_bounds = array<i64: 4>, scalar_prefetch = 0 : i64, scratch_operands = 0 : i64, tpu.core_type = #tpu.core_type<tc>, window_params = [{transform_indices = @transform_0, window_bounds = array<i64: 27, 512>}, {pipeline_mode = #tpu.pipeline_mode<synchronous>, transform_indices = @transform_1, window_bounds = array<i64: 16, 27>}, {pipeline_mode = #tpu.pipeline_mode<synchronous>, transform_indices = @transform_2, window_bounds = array<i64: 16, 1>}, {pipeline_mode = #tpu.pipeline_mode<synchronous>, transform_indices = @transform_3, window_bounds = array<i64: 16, 1>}, {transform_indices = @transform_4, window_bounds = array<i64: 16, 512>}, {transform_indices = @transform_5, window_bounds = array<i64: 16, 512>}]} {
    %c0 = arith.constant 0 : index
    %c0_0 = arith.constant 0 : index
    %0 = vector.load %arg2[%c0, %c0_0] : memref<16x27xbf16, #tpu.memory_space<vmem>>, vector<16x27xbf16>
    %c0_1 = arith.constant 0 : index
    %c0_2 = arith.constant 0 : index
    %1 = vector.load %arg1[%c0_1, %c0_2] : memref<27x512xbf16, #tpu.memory_space<vmem>>, vector<27x512xbf16>
    %cst = arith.constant dense<0.000000e+00> : vector<16x512xf32>
    %2 = tpu.matmul %0, %1, %cst {dimension_numbers = #tpu.dot_dimension_numbers<[1], [0], [0], [1], [0, 0, 1, 1], [], []>} : vector<16x27xbf16>, vector<27x512xbf16>, vector<16x512xf32> -> vector<16x512xf32>
    %c0_3 = arith.constant 0 : index
    %c0_4 = arith.constant 0 : index
    %3 = vector.load %arg3[%c0_3, %c0_4] : memref<16x1xf32, #tpu.memory_space<vmem>>, vector<16x1xf32>
    %4 = vector.broadcast %3 : vector<16x1xf32> to vector<16x512xf32>
    %5 = arith.mulf %2, %4 : vector<16x512xf32>
    %c0_5 = arith.constant 0 : index
    %c0_6 = arith.constant 0 : index
    %6 = vector.load %arg4[%c0_5, %c0_6] : memref<16x1xf32, #tpu.memory_space<vmem>>, vector<16x1xf32>
    %7 = vector.broadcast %6 : vector<16x1xf32> to vector<16x512xf32>
    %8 = arith.addf %5, %7 : vector<16x512xf32>
    %cst_7 = arith.constant 0.000000e+00 : f32
    %9 = vector.broadcast %cst_7 : f32 to vector<16x512xf32>
    %10 = arith.maximumf %8, %9 : vector<16x512xf32>
    %11 = arith.truncf %10 : vector<16x512xf32> to vector<16x512xbf16>
    %c0_8 = arith.constant 0 : index
    %c0_9 = arith.constant 0 : index
    %12 = vector.load %arg5[%c0_8, %c0_9] : memref<16x512xf32, #tpu.memory_space<vmem>>, vector<16x512xf32>
    tpu.vector_store %arg5[%c0_8, %c0_9], %2 {strides = array<i32>} : memref<16x512xf32, #tpu.memory_space<vmem>>, vector<16x512xf32>,
    %c0_10 = arith.constant 0 : index
    %c0_11 = arith.constant 0 : index
    %13 = vector.load %arg6[%c0_10, %c0_11] : memref<16x512xbf16, #tpu.memory_space<vmem>>, vector<16x512xbf16>
    tpu.vector_store %arg6[%c0_10, %c0_11], %11 {strides = array<i32>} : memref<16x512xbf16, #tpu.memory_space<vmem>>, vector<16x512xbf16>,
    return
  }
  func.func @transform_0(%arg0: i32) -> (i32, i32) {
    %c0_i32 = arith.constant 0 : i32
    %c0_i32_0 = arith.constant 0 : i32
    return %c0_i32, %arg0 : i32, i32
  }
  func.func @transform_1(%arg0: i32) -> (i32, i32) {
    %c0_i32 = arith.constant 0 : i32
    %c0_i32_0 = arith.constant 0 : i32
    %c0_i32_1 = arith.constant 0 : i32
    return %c0_i32, %c0_i32_0 : i32, i32
  }
  func.func @transform_2(%arg0: i32) -> (i32, i32) {
    %c0_i32 = arith.constant 0 : i32
    %c0_i32_0 = arith.constant 0 : i32
    %c0_i32_1 = arith.constant 0 : i32
    return %c0_i32, %c0_i32_0 : i32, i32
  }
  func.func @transform_3(%arg0: i32) -> (i32, i32) {
    %c0_i32 = arith.constant 0 : i32
    %c0_i32_0 = arith.constant 0 : i32
    %c0_i32_1 = arith.constant 0 : i32
    return %c0_i32, %c0_i32_0 : i32, i32
  }
  func.func @transform_4(%arg0: i32) -> (i32, i32) {
    %c0_i32 = arith.constant 0 : i32
    %c0_i32_0 = arith.constant 0 : i32
    return %c0_i32, %arg0 : i32, i32
  }
  func.func @transform_5(%arg0: i32) -> (i32, i32) {
    %c0_i32 = arith.constant 0 : i32
    %c0_i32_0 = arith.constant 0 : i32
    return %c0_i32, %arg0 : i32, i32
  }
}

module attributes {stable_mosaic.version = 11 : i64} {
  func.func @kernel(%arg0: i32, %arg1: memref<144x512xbf16, #tpu.memory_space<vmem>>, %arg2: memref<16x144xbf16, #tpu.memory_space<vmem>>, %arg3: memref<16x1xf32, #tpu.memory_space<vmem>>, %arg4: memref<16x1xf32, #tpu.memory_space<vmem>>, %arg5: memref<16x512xf32, #tpu.memory_space<vmem>>, %arg6: memref<16x512xf32, #tpu.memory_space<vmem>>, %arg7: memref<16x512xbf16, #tpu.memory_space<vmem>>) attributes {dimension_semantics = [#tpu.dimension_semantics<parallel>], iteration_bounds = array<i64: 4>, scalar_prefetch = 0 : i64, scratch_operands = 0 : i64, tpu.core_type = #tpu.core_type<tc>, window_params = [{transform_indices = @transform_0, window_bounds = array<i64: 144, 512>}, {pipeline_mode = #tpu.pipeline_mode<synchronous>, transform_indices = @transform_1, window_bounds = array<i64: 16, 144>}, {pipeline_mode = #tpu.pipeline_mode<synchronous>, transform_indices = @transform_2, window_bounds = array<i64: 16, 1>}, {pipeline_mode = #tpu.pipeline_mode<synchronous>, transform_indices = @transform_3, window_bounds = array<i64: 16, 1>}, {transform_indices = @transform_4, window_bounds = array<i64: 16, 512>}, {transform_indices = @transform_5, window_bounds = array<i64: 16, 512>}, {transform_indices = @transform_6, window_bounds = array<i64: 16, 512>}]} {
    %c0 = arith.constant 0 : index
    %c0_0 = arith.constant 0 : index
    %0 = vector.load %arg2[%c0, %c0_0] : memref<16x144xbf16, #tpu.memory_space<vmem>>, vector<16x144xbf16>
    %c0_1 = arith.constant 0 : index
    %c0_2 = arith.constant 0 : index
    %1 = vector.load %arg1[%c0_1, %c0_2] : memref<144x512xbf16, #tpu.memory_space<vmem>>, vector<144x512xbf16>
    %cst = arith.constant dense<0.000000e+00> : vector<16x512xf32>
    %2 = tpu.matmul %0, %1, %cst {dimension_numbers = #tpu.dot_dimension_numbers<[1], [0], [0], [1], [0, 0, 1, 1], [], []>} : vector<16x144xbf16>, vector<144x512xbf16>, vector<16x512xf32> -> vector<16x512xf32>
    %c0_3 = arith.constant 0 : index
    %c0_4 = arith.constant 0 : index
    %3 = vector.load %arg5[%c0_3, %c0_4] : memref<16x512xf32, #tpu.memory_space<vmem>>, vector<16x512xf32>
    %4 = arith.addf %2, %3 : vector<16x512xf32>
    %c0_5 = arith.constant 0 : index
    %c0_6 = arith.constant 0 : index
    %5 = vector.load %arg3[%c0_5, %c0_6] : memref<16x1xf32, #tpu.memory_space<vmem>>, vector<16x1xf32>
    %6 = vector.broadcast %5 : vector<16x1xf32> to vector<16x512xf32>
    %7 = arith.mulf %4, %6 : vector<16x512xf32>
    %c0_7 = arith.constant 0 : index
    %c0_8 = arith.constant 0 : index
    %8 = vector.load %arg4[%c0_7, %c0_8] : memref<16x1xf32, #tpu.memory_space<vmem>>, vector<16x1xf32>
    %9 = vector.broadcast %8 : vector<16x1xf32> to vector<16x512xf32>
    %10 = arith.addf %7, %9 : vector<16x512xf32>
    %cst_9 = arith.constant 0.000000e+00 : f32
    %11 = vector.broadcast %cst_9 : f32 to vector<16x512xf32>
    %12 = arith.maximumf %10, %11 : vector<16x512xf32>
    %13 = arith.truncf %12 : vector<16x512xf32> to vector<16x512xbf16>
    %c0_10 = arith.constant 0 : index
    %c0_11 = arith.constant 0 : index
    %14 = vector.load %arg6[%c0_10, %c0_11] : memref<16x512xf32, #tpu.memory_space<vmem>>, vector<16x512xf32>
    tpu.vector_store %arg6[%c0_10, %c0_11], %4 {strides = array<i32>} : memref<16x512xf32, #tpu.memory_space<vmem>>, vector<16x512xf32>,
    %c0_12 = arith.constant 0 : index
    %c0_13 = arith.constant 0 : index
    %15 = vector.load %arg7[%c0_12, %c0_13] : memref<16x512xbf16, #tpu.memory_space<vmem>>, vector<16x512xbf16>
    tpu.vector_store %arg7[%c0_12, %c0_13], %13 {strides = array<i32>} : memref<16x512xbf16, #tpu.memory_space<vmem>>, vector<16x512xbf16>,
    return
  }
  func.func @transform_0(%arg0: i32) -> (i32, i32) {
    %c0_i32 = arith.constant 0 : i32
    %c0_i32_0 = arith.constant 0 : i32
    return %c0_i32, %arg0 : i32, i32
  }
  func.func @transform_1(%arg0: i32) -> (i32, i32) {
    %c0_i32 = arith.constant 0 : i32
    %c0_i32_0 = arith.constant 0 : i32
    %c0_i32_1 = arith.constant 0 : i32
    return %c0_i32, %c0_i32_0 : i32, i32
  }
  func.func @transform_2(%arg0: i32) -> (i32, i32) {
    %c0_i32 = arith.constant 0 : i32
    %c0_i32_0 = arith.constant 0 : i32
    %c0_i32_1 = arith.constant 0 : i32
    return %c0_i32, %c0_i32_0 : i32, i32
  }
  func.func @transform_3(%arg0: i32) -> (i32, i32) {
    %c0_i32 = arith.constant 0 : i32
    %c0_i32_0 = arith.constant 0 : i32
    %c0_i32_1 = arith.constant 0 : i32
    return %c0_i32, %c0_i32_0 : i32, i32
  }
  func.func @transform_4(%arg0: i32) -> (i32, i32) {
    %c0_i32 = arith.constant 0 : i32
    %c0_i32_0 = arith.constant 0 : i32
    return %c0_i32, %arg0 : i32, i32
  }
  func.func @transform_5(%arg0: i32) -> (i32, i32) {
    %c0_i32 = arith.constant 0 : i32
    %c0_i32_0 = arith.constant 0 : i32
    return %c0_i32, %arg0 : i32, i32
  }
  func.func @transform_6(%arg0: i32) -> (i32, i32) {
    %c0_i32 = arith.constant 0 : i32
    %c0_i32_0 = arith.constant 0 : i32
    return %c0_i32, %arg0 : i32, i32
  }
}

module attributes {stable_mosaic.version = 11 : i64} {
  func.func @kernel(%arg0: i32, %arg1: memref<144x512xbf16, #tpu.memory_space<vmem>>, %arg2: memref<16x144xbf16, #tpu.memory_space<vmem>>, %arg3: memref<16x1xf32, #tpu.memory_space<vmem>>, %arg4: memref<16x1xf32, #tpu.memory_space<vmem>>, %arg5: memref<16x512xbf16, #tpu.memory_space<vmem>>) attributes {dimension_semantics = [#tpu.dimension_semantics<parallel>], iteration_bounds = array<i64: 4>, scalar_prefetch = 0 : i64, scratch_operands = 0 : i64, tpu.core_type = #tpu.core_type<tc>, window_params = [{transform_indices = @transform_0, window_bounds = array<i64: 144, 512>}, {pipeline_mode = #tpu.pipeline_mode<synchronous>, transform_indices = @transform_1, window_bounds = array<i64: 16, 144>}, {pipeline_mode = #tpu.pipeline_mode<synchronous>, transform_indices = @transform_2, window_bounds = array<i64: 16, 1>}, {pipeline_mode = #tpu.pipeline_mode<synchronous>, transform_indices = @transform_3, window_bounds = array<i64: 16, 1>}, {transform_indices = @transform_4, window_bounds = array<i64: 16, 512>}]} {
    %c0 = arith.constant 0 : index
    %c0_0 = arith.constant 0 : index
    %0 = vector.load %arg2[%c0, %c0_0] : memref<16x144xbf16, #tpu.memory_space<vmem>>, vector<16x144xbf16>
    %c0_1 = arith.constant 0 : index
    %c0_2 = arith.constant 0 : index
    %1 = vector.load %arg1[%c0_1, %c0_2] : memref<144x512xbf16, #tpu.memory_space<vmem>>, vector<144x512xbf16>
    %cst = arith.constant dense<0.000000e+00> : vector<16x512xf32>
    %2 = tpu.matmul %0, %1, %cst {dimension_numbers = #tpu.dot_dimension_numbers<[1], [0], [0], [1], [0, 0, 1, 1], [], []>} : vector<16x144xbf16>, vector<144x512xbf16>, vector<16x512xf32> -> vector<16x512xf32>
    %c0_3 = arith.constant 0 : index
    %c0_4 = arith.constant 0 : index
    %3 = vector.load %arg3[%c0_3, %c0_4] : memref<16x1xf32, #tpu.memory_space<vmem>>, vector<16x1xf32>
    %4 = vector.broadcast %3 : vector<16x1xf32> to vector<16x512xf32>
    %5 = arith.mulf %2, %4 : vector<16x512xf32>
    %c0_5 = arith.constant 0 : index
    %c0_6 = arith.constant 0 : index
    %6 = vector.load %arg4[%c0_5, %c0_6] : memref<16x1xf32, #tpu.memory_space<vmem>>, vector<16x1xf32>
    %7 = vector.broadcast %6 : vector<16x1xf32> to vector<16x512xf32>
    %8 = arith.addf %5, %7 : vector<16x512xf32>
    %cst_7 = arith.constant 0.000000e+00 : f32
    %9 = vector.broadcast %cst_7 : f32 to vector<16x512xf32>
    %10 = arith.maximumf %8, %9 : vector<16x512xf32>
    %11 = arith.truncf %10 : vector<16x512xf32> to vector<16x512xbf16>
    %c0_8 = arith.constant 0 : index
    %c0_9 = arith.constant 0 : index
    %12 = vector.load %arg5[%c0_8, %c0_9] : memref<16x512xbf16, #tpu.memory_space<vmem>>, vector<16x512xbf16>
    tpu.vector_store %arg5[%c0_8, %c0_9], %11 {strides = array<i32>} : memref<16x512xbf16, #tpu.memory_space<vmem>>, vector<16x512xbf16>,
    return
  }
  func.func @transform_0(%arg0: i32) -> (i32, i32) {
    %c0_i32 = arith.constant 0 : i32
    %c0_i32_0 = arith.constant 0 : i32
    return %c0_i32, %arg0 : i32, i32
  }
  func.func @transform_1(%arg0: i32) -> (i32, i32) {
    %c0_i32 = arith.constant 0 : i32
    %c0_i32_0 = arith.constant 0 : i32
    %c0_i32_1 = arith.constant 0 : i32
    return %c0_i32, %c0_i32_0 : i32, i32
  }
  func.func @transform_2(%arg0: i32) -> (i32, i32) {
    %c0_i32 = arith.constant 0 : i32
    %c0_i32_0 = arith.constant 0 : i32
    %c0_i32_1 = arith.constant 0 : i32
    return %c0_i32, %c0_i32_0 : i32, i32
  }
  func.func @transform_3(%arg0: i32) -> (i32, i32) {
    %c0_i32 = arith.constant 0 : i32
    %c0_i32_0 = arith.constant 0 : i32
    %c0_i32_1 = arith.constant 0 : i32
    return %c0_i32, %c0_i32_0 : i32, i32
  }
  func.func @transform_4(%arg0: i32) -> (i32, i32) {
    %c0_i32 = arith.constant 0 : i32
    %c0_i32_0 = arith.constant 0 : i32
    return %c0_i32, %arg0 : i32, i32
  }
}

module attributes {stable_mosaic.version = 11 : i64} {
  func.func @kernel(%arg0: i32, %arg1: memref<144x512xbf16, #tpu.memory_space<vmem>>, %arg2: memref<32x144xbf16, #tpu.memory_space<vmem>>, %arg3: memref<32x1xf32, #tpu.memory_space<vmem>>, %arg4: memref<32x1xf32, #tpu.memory_space<vmem>>, %arg5: memref<32x512xbf16, #tpu.memory_space<vmem>>) attributes {dimension_semantics = [#tpu.dimension_semantics<parallel>], iteration_bounds = array<i64: 1>, scalar_prefetch = 0 : i64, scratch_operands = 0 : i64, tpu.core_type = #tpu.core_type<tc>, window_params = [{transform_indices = @transform_0, window_bounds = array<i64: 144, 512>}, {pipeline_mode = #tpu.pipeline_mode<synchronous>, transform_indices = @transform_1, window_bounds = array<i64: 32, 144>}, {pipeline_mode = #tpu.pipeline_mode<synchronous>, transform_indices = @transform_2, window_bounds = array<i64: 32, 1>}, {pipeline_mode = #tpu.pipeline_mode<synchronous>, transform_indices = @transform_3, window_bounds = array<i64: 32, 1>}, {transform_indices = @transform_4, window_bounds = array<i64: 32, 512>}]} {
    %c0 = arith.constant 0 : index
    %c0_0 = arith.constant 0 : index
    %0 = vector.load %arg2[%c0, %c0_0] : memref<32x144xbf16, #tpu.memory_space<vmem>>, vector<32x144xbf16>
    %c0_1 = arith.constant 0 : index
    %c0_2 = arith.constant 0 : index
    %1 = vector.load %arg1[%c0_1, %c0_2] : memref<144x512xbf16, #tpu.memory_space<vmem>>, vector<144x512xbf16>
    %cst = arith.constant dense<0.000000e+00> : vector<32x512xf32>
    %2 = tpu.matmul %0, %1, %cst {dimension_numbers = #tpu.dot_dimension_numbers<[1], [0], [0], [1], [0, 0, 1, 1], [], []>} : vector<32x144xbf16>, vector<144x512xbf16>, vector<32x512xf32> -> vector<32x512xf32>
    %c0_3 = arith.constant 0 : index
    %c0_4 = arith.constant 0 : index
    %3 = vector.load %arg3[%c0_3, %c0_4] : memref<32x1xf32, #tpu.memory_space<vmem>>, vector<32x1xf32>
    %4 = vector.broadcast %3 : vector<32x1xf32> to vector<32x512xf32>
    %5 = arith.mulf %2, %4 : vector<32x512xf32>
    %c0_5 = arith.constant 0 : index
    %c0_6 = arith.constant 0 : index
    %6 = vector.load %arg4[%c0_5, %c0_6] : memref<32x1xf32, #tpu.memory_space<vmem>>, vector<32x1xf32>
    %7 = vector.broadcast %6 : vector<32x1xf32> to vector<32x512xf32>
    %8 = arith.addf %5, %7 : vector<32x512xf32>
    %cst_7 = arith.constant 0.000000e+00 : f32
    %9 = vector.broadcast %cst_7 : f32 to vector<32x512xf32>
    %10 = arith.maximumf %8, %9 : vector<32x512xf32>
    %11 = arith.truncf %10 : vector<32x512xf32> to vector<32x512xbf16>
    %c0_8 = arith.constant 0 : index
    %c0_9 = arith.constant 0 : index
    %12 = vector.load %arg5[%c0_8, %c0_9] : memref<32x512xbf16, #tpu.memory_space<vmem>>, vector<32x512xbf16>
    tpu.vector_store %arg5[%c0_8, %c0_9], %11 {strides = array<i32>} : memref<32x512xbf16, #tpu.memory_space<vmem>>, vector<32x512xbf16>,
    return
  }
  func.func @transform_0(%arg0: i32) -> (i32, i32) {
    %c0_i32 = arith.constant 0 : i32
    %c0_i32_0 = arith.constant 0 : i32
    return %c0_i32, %arg0 : i32, i32
  }
  func.func @transform_1(%arg0: i32) -> (i32, i32) {
    %c0_i32 = arith.constant 0 : i32
    %c0_i32_0 = arith.constant 0 : i32
    %c0_i32_1 = arith.constant 0 : i32
    return %c0_i32, %c0_i32_0 : i32, i32
  }
  func.func @transform_2(%arg0: i32) -> (i32, i32) {
    %c0_i32 = arith.constant 0 : i32
    %c0_i32_0 = arith.constant 0 : i32
    %c0_i32_1 = arith.constant 0 : i32
    return %c0_i32, %c0_i32_0 : i32, i32
  }
  func.func @transform_3(%arg0: i32) -> (i32, i32) {
    %c0_i32 = arith.constant 0 : i32
    %c0_i32_0 = arith.constant 0 : i32
    %c0_i32_1 = arith.constant 0 : i32
    return %c0_i32, %c0_i32_0 : i32, i32
  }
  func.func @transform_4(%arg0: i32) -> (i32, i32) {
    %c0_i32 = arith.constant 0 : i32
    %c0_i32_0 = arith.constant 0 : i32
    return %c0_i32, %arg0 : i32, i32
  }
}

module attributes {stable_mosaic.version = 11 : i64} {
  func.func @kernel(%arg0: i32, %arg1: memref<288x512xbf16, #tpu.memory_space<vmem>>, %arg2: memref<32x288xbf16, #tpu.memory_space<vmem>>, %arg3: memref<32x1xf32, #tpu.memory_space<vmem>>, %arg4: memref<32x1xf32, #tpu.memory_space<vmem>>, %arg5: memref<32x512xf32, #tpu.memory_space<vmem>>, %arg6: memref<32x512xf32, #tpu.memory_space<vmem>>, %arg7: memref<32x512xbf16, #tpu.memory_space<vmem>>) attributes {dimension_semantics = [#tpu.dimension_semantics<parallel>], iteration_bounds = array<i64: 1>, scalar_prefetch = 0 : i64, scratch_operands = 0 : i64, tpu.core_type = #tpu.core_type<tc>, window_params = [{transform_indices = @transform_0, window_bounds = array<i64: 288, 512>}, {pipeline_mode = #tpu.pipeline_mode<synchronous>, transform_indices = @transform_1, window_bounds = array<i64: 32, 288>}, {pipeline_mode = #tpu.pipeline_mode<synchronous>, transform_indices = @transform_2, window_bounds = array<i64: 32, 1>}, {pipeline_mode = #tpu.pipeline_mode<synchronous>, transform_indices = @transform_3, window_bounds = array<i64: 32, 1>}, {transform_indices = @transform_4, window_bounds = array<i64: 32, 512>}, {transform_indices = @transform_5, window_bounds = array<i64: 32, 512>}, {transform_indices = @transform_6, window_bounds = array<i64: 32, 512>}]} {
    %c0 = arith.constant 0 : index
    %c0_0 = arith.constant 0 : index
    %0 = vector.load %arg2[%c0, %c0_0] : memref<32x288xbf16, #tpu.memory_space<vmem>>, vector<32x288xbf16>
    %c0_1 = arith.constant 0 : index
    %c0_2 = arith.constant 0 : index
    %1 = vector.load %arg1[%c0_1, %c0_2] : memref<288x512xbf16, #tpu.memory_space<vmem>>, vector<288x512xbf16>
    %cst = arith.constant dense<0.000000e+00> : vector<32x512xf32>
    %2 = tpu.matmul %0, %1, %cst {dimension_numbers = #tpu.dot_dimension_numbers<[1], [0], [0], [1], [0, 0, 1, 1], [], []>} : vector<32x288xbf16>, vector<288x512xbf16>, vector<32x512xf32> -> vector<32x512xf32>
    %c0_3 = arith.constant 0 : index
    %c0_4 = arith.constant 0 : index
    %3 = vector.load %arg5[%c0_3, %c0_4] : memref<32x512xf32, #tpu.memory_space<vmem>>, vector<32x512xf32>
    %4 = arith.addf %2, %3 : vector<32x512xf32>
    %c0_5 = arith.constant 0 : index
    %c0_6 = arith.constant 0 : index
    %5 = vector.load %arg3[%c0_5, %c0_6] : memref<32x1xf32, #tpu.memory_space<vmem>>, vector<32x1xf32>
    %6 = vector.broadcast %5 : vector<32x1xf32> to vector<32x512xf32>
    %7 = arith.mulf %4, %6 : vector<32x512xf32>
    %c0_7 = arith.constant 0 : index
    %c0_8 = arith.constant 0 : index
    %8 = vector.load %arg4[%c0_7, %c0_8] : memref<32x1xf32, #tpu.memory_space<vmem>>, vector<32x1xf32>
    %9 = vector.broadcast %8 : vector<32x1xf32> to vector<32x512xf32>
    %10 = arith.addf %7, %9 : vector<32x512xf32>
    %cst_9 = arith.constant 0.000000e+00 : f32
    %11 = vector.broadcast %cst_9 : f32 to vector<32x512xf32>
    %12 = arith.maximumf %10, %11 : vector<32x512xf32>
    %13 = arith.truncf %12 : vector<32x512xf32> to vector<32x512xbf16>
    %c0_10 = arith.constant 0 : index
    %c0_11 = arith.constant 0 : index
    %14 = vector.load %arg6[%c0_10, %c0_11] : memref<32x512xf32, #tpu.memory_space<vmem>>, vector<32x512xf32>
    tpu.vector_store %arg6[%c0_10, %c0_11], %4 {strides = array<i32>} : memref<32x512xf32, #tpu.memory_space<vmem>>, vector<32x512xf32>,
    %c0_12 = arith.constant 0 : index
    %c0_13 = arith.constant 0 : index
    %15 = vector.load %arg7[%c0_12, %c0_13] : memref<32x512xbf16, #tpu.memory_space<vmem>>, vector<32x512xbf16>
    tpu.vector_store %arg7[%c0_12, %c0_13], %13 {strides = array<i32>} : memref<32x512xbf16, #tpu.memory_space<vmem>>, vector<32x512xbf16>,
    return
  }
  func.func @transform_0(%arg0: i32) -> (i32, i32) {
    %c0_i32 = arith.constant 0 : i32
    %c0_i32_0 = arith.constant 0 : i32
    return %c0_i32, %arg0 : i32, i32
  }
  func.func @transform_1(%arg0: i32) -> (i32, i32) {
    %c0_i32 = arith.constant 0 : i32
    %c0_i32_0 = arith.constant 0 : i32
    %c0_i32_1 = arith.constant 0 : i32
    return %c0_i32, %c0_i32_0 : i32, i32
  }
  func.func @transform_2(%arg0: i32) -> (i32, i32) {
    %c0_i32 = arith.constant 0 : i32
    %c0_i32_0 = arith.constant 0 : i32
    %c0_i32_1 = arith.constant 0 : i32
    return %c0_i32, %c0_i32_0 : i32, i32
  }
  func.func @transform_3(%arg0: i32) -> (i32, i32) {
    %c0_i32 = arith.constant 0 : i32
    %c0_i32_0 = arith.constant 0 : i32
    %c0_i32_1 = arith.constant 0 : i32
    return %c0_i32, %c0_i32_0 : i32, i32
  }
  func.func @transform_4(%arg0: i32) -> (i32, i32) {
    %c0_i32 = arith.constant 0 : i32
    %c0_i32_0 = arith.constant 0 : i32
    return %c0_i32, %arg0 : i32, i32
  }
  func.func @transform_5(%arg0: i32) -> (i32, i32) {
    %c0_i32 = arith.constant 0 : i32
    %c0_i32_0 = arith.constant 0 : i32
    return %c0_i32, %arg0 : i32, i32
  }
  func.func @transform_6(%arg0: i32) -> (i32, i32) {
    %c0_i32 = arith.constant 0 : i32
    %c0_i32_0 = arith.constant 0 : i32
    return %c0_i32, %arg0 : i32, i32
  }
}

module attributes {stable_mosaic.version = 11 : i64} {
  func.func @kernel(%arg0: i32, %arg1: memref<288x128xbf16, #tpu.memory_space<vmem>>, %arg2: memref<64x288xbf16, #tpu.memory_space<vmem>>, %arg3: memref<64x1xf32, #tpu.memory_space<vmem>>, %arg4: memref<64x1xf32, #tpu.memory_space<vmem>>, %arg5: memref<64x128xbf16, #tpu.memory_space<vmem>>) attributes {dimension_semantics = [#tpu.dimension_semantics<parallel>], iteration_bounds = array<i64: 1>, scalar_prefetch = 0 : i64, scratch_operands = 0 : i64, tpu.core_type = #tpu.core_type<tc>, window_params = [{transform_indices = @transform_0, window_bounds = array<i64: 288, 128>}, {pipeline_mode = #tpu.pipeline_mode<synchronous>, transform_indices = @transform_1, window_bounds = array<i64: 64, 288>}, {pipeline_mode = #tpu.pipeline_mode<synchronous>, transform_indices = @transform_2, window_bounds = array<i64: 64, 1>}, {pipeline_mode = #tpu.pipeline_mode<synchronous>, transform_indices = @transform_3, window_bounds = array<i64: 64, 1>}, {transform_indices = @transform_4, window_bounds = array<i64: 64, 128>}]} {
    %c0 = arith.constant 0 : index
    %c0_0 = arith.constant 0 : index
    %0 = vector.load %arg2[%c0, %c0_0] : memref<64x288xbf16, #tpu.memory_space<vmem>>, vector<64x288xbf16>
    %c0_1 = arith.constant 0 : index
    %c0_2 = arith.constant 0 : index
    %1 = vector.load %arg1[%c0_1, %c0_2] : memref<288x128xbf16, #tpu.memory_space<vmem>>, vector<288x128xbf16>
    %cst = arith.constant dense<0.000000e+00> : vector<64x128xf32>
    %2 = tpu.matmul %0, %1, %cst {dimension_numbers = #tpu.dot_dimension_numbers<[1], [0], [0], [1], [0, 0, 1, 1], [], []>} : vector<64x288xbf16>, vector<288x128xbf16>, vector<64x128xf32> -> vector<64x128xf32>
    %c0_3 = arith.constant 0 : index
    %c0_4 = arith.constant 0 : index
    %3 = vector.load %arg3[%c0_3, %c0_4] : memref<64x1xf32, #tpu.memory_space<vmem>>, vector<64x1xf32>
    %4 = vector.broadcast %3 : vector<64x1xf32> to vector<64x128xf32>
    %5 = arith.mulf %2, %4 : vector<64x128xf32>
    %c0_5 = arith.constant 0 : index
    %c0_6 = arith.constant 0 : index
    %6 = vector.load %arg4[%c0_5, %c0_6] : memref<64x1xf32, #tpu.memory_space<vmem>>, vector<64x1xf32>
    %7 = vector.broadcast %6 : vector<64x1xf32> to vector<64x128xf32>
    %8 = arith.addf %5, %7 : vector<64x128xf32>
    %cst_7 = arith.constant 0.000000e+00 : f32
    %9 = vector.broadcast %cst_7 : f32 to vector<64x128xf32>
    %10 = arith.maximumf %8, %9 : vector<64x128xf32>
    %11 = arith.truncf %10 : vector<64x128xf32> to vector<64x128xbf16>
    %c0_8 = arith.constant 0 : index
    %c0_9 = arith.constant 0 : index
    %12 = vector.load %arg5[%c0_8, %c0_9] : memref<64x128xbf16, #tpu.memory_space<vmem>>, vector<64x128xbf16>
    tpu.vector_store %arg5[%c0_8, %c0_9], %11 {strides = array<i32>} : memref<64x128xbf16, #tpu.memory_space<vmem>>, vector<64x128xbf16>,
    return
  }
  func.func @transform_0(%arg0: i32) -> (i32, i32) {
    %c0_i32 = arith.constant 0 : i32
    %c0_i32_0 = arith.constant 0 : i32
    return %c0_i32, %arg0 : i32, i32
  }
  func.func @transform_1(%arg0: i32) -> (i32, i32) {
    %c0_i32 = arith.constant 0 : i32
    %c0_i32_0 = arith.constant 0 : i32
    %c0_i32_1 = arith.constant 0 : i32
    return %c0_i32, %c0_i32_0 : i32, i32
  }
  func.func @transform_2(%arg0: i32) -> (i32, i32) {
    %c0_i32 = arith.constant 0 : i32
    %c0_i32_0 = arith.constant 0 : i32
    %c0_i32_1 = arith.constant 0 : i32
    return %c0_i32, %c0_i32_0 : i32, i32
  }
  func.func @transform_3(%arg0: i32) -> (i32, i32) {
    %c0_i32 = arith.constant 0 : i32
    %c0_i32_0 = arith.constant 0 : i32
    %c0_i32_1 = arith.constant 0 : i32
    return %c0_i32, %c0_i32_0 : i32, i32
  }
  func.func @transform_4(%arg0: i32) -> (i32, i32) {
    %c0_i32 = arith.constant 0 : i32
    %c0_i32_0 = arith.constant 0 : i32
    return %c0_i32, %arg0 : i32, i32
  }
}

module attributes {stable_mosaic.version = 11 : i64} {
  func.func @kernel(%arg0: i32, %arg1: memref<576x128xbf16, #tpu.memory_space<vmem>>, %arg2: memref<64x576xbf16, #tpu.memory_space<vmem>>, %arg3: memref<64x1xf32, #tpu.memory_space<vmem>>, %arg4: memref<64x1xf32, #tpu.memory_space<vmem>>, %arg5: memref<64x128xf32, #tpu.memory_space<vmem>>, %arg6: memref<64x128xf32, #tpu.memory_space<vmem>>, %arg7: memref<64x128xbf16, #tpu.memory_space<vmem>>) attributes {dimension_semantics = [#tpu.dimension_semantics<parallel>], iteration_bounds = array<i64: 1>, scalar_prefetch = 0 : i64, scratch_operands = 0 : i64, tpu.core_type = #tpu.core_type<tc>, window_params = [{transform_indices = @transform_0, window_bounds = array<i64: 576, 128>}, {pipeline_mode = #tpu.pipeline_mode<synchronous>, transform_indices = @transform_1, window_bounds = array<i64: 64, 576>}, {pipeline_mode = #tpu.pipeline_mode<synchronous>, transform_indices = @transform_2, window_bounds = array<i64: 64, 1>}, {pipeline_mode = #tpu.pipeline_mode<synchronous>, transform_indices = @transform_3, window_bounds = array<i64: 64, 1>}, {transform_indices = @transform_4, window_bounds = array<i64: 64, 128>}, {transform_indices = @transform_5, window_bounds = array<i64: 64, 128>}, {transform_indices = @transform_6, window_bounds = array<i64: 64, 128>}]} {
    %c0 = arith.constant 0 : index
    %c0_0 = arith.constant 0 : index
    %0 = vector.load %arg2[%c0, %c0_0] : memref<64x576xbf16, #tpu.memory_space<vmem>>, vector<64x576xbf16>
    %c0_1 = arith.constant 0 : index
    %c0_2 = arith.constant 0 : index
    %1 = vector.load %arg1[%c0_1, %c0_2] : memref<576x128xbf16, #tpu.memory_space<vmem>>, vector<576x128xbf16>
    %cst = arith.constant dense<0.000000e+00> : vector<64x128xf32>
    %2 = tpu.matmul %0, %1, %cst {dimension_numbers = #tpu.dot_dimension_numbers<[1], [0], [0], [1], [0, 0, 1, 1], [], []>} : vector<64x576xbf16>, vector<576x128xbf16>, vector<64x128xf32> -> vector<64x128xf32>
    %c0_3 = arith.constant 0 : index
    %c0_4 = arith.constant 0 : index
    %3 = vector.load %arg5[%c0_3, %c0_4] : memref<64x128xf32, #tpu.memory_space<vmem>>, vector<64x128xf32>
    %4 = arith.addf %2, %3 : vector<64x128xf32>
    %c0_5 = arith.constant 0 : index
    %c0_6 = arith.constant 0 : index
    %5 = vector.load %arg3[%c0_5, %c0_6] : memref<64x1xf32, #tpu.memory_space<vmem>>, vector<64x1xf32>
    %6 = vector.broadcast %5 : vector<64x1xf32> to vector<64x128xf32>
    %7 = arith.mulf %4, %6 : vector<64x128xf32>
    %c0_7 = arith.constant 0 : index
    %c0_8 = arith.constant 0 : index
    %8 = vector.load %arg4[%c0_7, %c0_8] : memref<64x1xf32, #tpu.memory_space<vmem>>, vector<64x1xf32>
    %9 = vector.broadcast %8 : vector<64x1xf32> to vector<64x128xf32>
    %10 = arith.addf %7, %9 : vector<64x128xf32>
    %cst_9 = arith.constant 0.000000e+00 : f32
    %11 = vector.broadcast %cst_9 : f32 to vector<64x128xf32>
    %12 = arith.maximumf %10, %11 : vector<64x128xf32>
    %13 = arith.truncf %12 : vector<64x128xf32> to vector<64x128xbf16>
    %c0_10 = arith.constant 0 : index
    %c0_11 = arith.constant 0 : index
    %14 = vector.load %arg6[%c0_10, %c0_11] : memref<64x128xf32, #tpu.memory_space<vmem>>, vector<64x128xf32>
    tpu.vector_store %arg6[%c0_10, %c0_11], %4 {strides = array<i32>} : memref<64x128xf32, #tpu.memory_space<vmem>>, vector<64x128xf32>,
    %c0_12 = arith.constant 0 : index
    %c0_13 = arith.constant 0 : index
    %15 = vector.load %arg7[%c0_12, %c0_13] : memref<64x128xbf16, #tpu.memory_space<vmem>>, vector<64x128xbf16>
    tpu.vector_store %arg7[%c0_12, %c0_13], %13 {strides = array<i32>} : memref<64x128xbf16, #tpu.memory_space<vmem>>, vector<64x128xbf16>,
    return
  }
  func.func @transform_0(%arg0: i32) -> (i32, i32) {
    %c0_i32 = arith.constant 0 : i32
    %c0_i32_0 = arith.constant 0 : i32
    return %c0_i32, %arg0 : i32, i32
  }
  func.func @transform_1(%arg0: i32) -> (i32, i32) {
    %c0_i32 = arith.constant 0 : i32
    %c0_i32_0 = arith.constant 0 : i32
    %c0_i32_1 = arith.constant 0 : i32
    return %c0_i32, %c0_i32_0 : i32, i32
  }
  func.func @transform_2(%arg0: i32) -> (i32, i32) {
    %c0_i32 = arith.constant 0 : i32
    %c0_i32_0 = arith.constant 0 : i32
    %c0_i32_1 = arith.constant 0 : i32
    return %c0_i32, %c0_i32_0 : i32, i32
  }
  func.func @transform_3(%arg0: i32) -> (i32, i32) {
    %c0_i32 = arith.constant 0 : i32
    %c0_i32_0 = arith.constant 0 : i32
    %c0_i32_1 = arith.constant 0 : i32
    return %c0_i32, %c0_i32_0 : i32, i32
  }
  func.func @transform_4(%arg0: i32) -> (i32, i32) {
    %c0_i32 = arith.constant 0 : i32
    %c0_i32_0 = arith.constant 0 : i32
    return %c0_i32, %arg0 : i32, i32
  }
  func.func @transform_5(%arg0: i32) -> (i32, i32) {
    %c0_i32 = arith.constant 0 : i32
    %c0_i32_0 = arith.constant 0 : i32
    return %c0_i32, %arg0 : i32, i32
  }
  func.func @transform_6(%arg0: i32) -> (i32, i32) {
    %c0_i32 = arith.constant 0 : i32
    %c0_i32_0 = arith.constant 0 : i32
    return %c0_i32, %arg0 : i32, i32
  }
}

module attributes {stable_mosaic.version = 11 : i64} {
  func.func @_tail_kernel(%arg0: memref<64x128xbf16, #tpu.memory_space<vmem>>, %arg1: memref<128x2xbf16, #tpu.memory_space<vmem>>, %arg2: memref<10x64xf32, #tpu.memory_space<vmem>>, %arg3: memref<10x1xf32, #tpu.memory_space<vmem>>, %arg4: memref<10x2xf32, #tpu.memory_space<vmem>>) attributes {dimension_semantics = [], scalar_prefetch = 0 : i64, scratch_operands = 0 : i64, tpu.core_type = #tpu.core_type<tc>} {
    %c0 = arith.constant 0 : index
    %c0_0 = arith.constant 0 : index
    %0 = vector.load %arg0[%c0, %c0_0] : memref<64x128xbf16, #tpu.memory_space<vmem>>, vector<64x128xbf16>
    %c0_1 = arith.constant 0 : index
    %c0_2 = arith.constant 0 : index
    %1 = vector.load %arg1[%c0_1, %c0_2] : memref<128x2xbf16, #tpu.memory_space<vmem>>, vector<128x2xbf16>
    %cst = arith.constant dense<0.000000e+00> : vector<64x2xf32>
    %2 = tpu.matmul %0, %1, %cst {dimension_numbers = #tpu.dot_dimension_numbers<[1], [0], [0], [1], [0, 0, 1, 1], [], []>} : vector<64x128xbf16>, vector<128x2xbf16>, vector<64x2xf32> -> vector<64x2xf32>
    %c0_3 = arith.constant 0 : index
    %c0_4 = arith.constant 0 : index
    %3 = vector.load %arg2[%c0_3, %c0_4] : memref<10x64xf32, #tpu.memory_space<vmem>>, vector<10x64xf32>
    %cst_5 = arith.constant dense<0.000000e+00> : vector<10x2xf32>
    %4 = tpu.matmul %3, %2, %cst_5 {dimension_numbers = #tpu.dot_dimension_numbers<[1], [0], [0], [1], [0, 0, 1, 1], [], []>} : vector<10x64xf32>, vector<64x2xf32>, vector<10x2xf32> -> vector<10x2xf32>
    %c0_6 = arith.constant 0 : index
    %c0_7 = arith.constant 0 : index
    %5 = vector.load %arg3[%c0_6, %c0_7] : memref<10x1xf32, #tpu.memory_space<vmem>>, vector<10x1xf32>
    %6 = vector.broadcast %5 : vector<10x1xf32> to vector<10x2xf32>
    %7 = arith.addf %4, %6 : vector<10x2xf32>
    %c0_8 = arith.constant 0 : index
    %c0_9 = arith.constant 0 : index
    %8 = vector.load %arg4[%c0_8, %c0_9] : memref<10x2xf32, #tpu.memory_space<vmem>>, vector<10x2xf32>
    tpu.vector_store %arg4[%c0_8, %c0_9], %7 {strides = array<i32>} : memref<10x2xf32, #tpu.memory_space<vmem>>, vector<10x2xf32>,
    return
  }
}

</mosaic_0001>

<llo_original>
// kernel: _lambda_.8
$region0: #{_lambda_.8}
  #allocation0 [shape = 'u32[]', space=smem, size = 0x4, offset = 0x4, fixed_abs, tag = 'smem constant byte address 0x4 - core index']
  #allocation1 [shape = 'u32[144,128]{1,0:T(1,128)}', space=vmem, size = 0x12000, scoped, tag = 'internal scratch']
  %s0 = inlined_call_operand.vmem [shape: bf16[27,2048], index: 0, kind: input, shape index: {}]
  %s1 = inlined_call_operand.vmem [shape: bf16[16,27], index: 1, kind: input, shape index: {}]
  %s2 = inlined_call_operand.vmem [shape: f32[16,1], index: 2, kind: input, shape index: {}]
  %s3 = inlined_call_operand.vmem [shape: f32[16,1], index: 3, kind: input, shape index: {}]
  %s4 = inlined_call_operand.vmem [shape: f32[16,2048], index: 4, kind: output, shape index: {0}]
  %s5 = inlined_call_operand.vmem [shape: bf16[16,2048], index: 5, kind: output, shape index: {1}]
  %6 = xla_tuple %s4, %s5
  %s7 = sld [smem:[#allocation0]]
  $region118: #{_lambda_.8} parent=0
    _
  %s9 = ssub.s32 1, %s7
  %s10 = scalar_select 0, %s9, %s7
  $region1: #{_lambda_.8} parent=0
    #allocation2 [shape = 'u8[65536]{0}', space=vmem, size = 0x10000, scoped, tag = 'input window, operand 0']
    #allocation3 [shape = 'u8[65536]{0}', space=vmem, size = 0x10000, scoped, tag = 'output window, operand 0']
    #allocation4 [shape = 'u8[32768]{0}', space=vmem, size = 0x8000, scoped, tag = 'output window, operand 1']
    loop: start=0, step=1, limit=6
    $region2: #{_lambda_.8} parent=1 // loop_pre_header
      _
    $region3: #{_lambda_.8} parent=1 // loop_header
      %s12 = sphi 0, %s16
      %p13 = scmp.ge.s32.totalorder %s12, 6
      %s22 = sphi 0, %s24
      %s25 = sphi 0, %s22
      %s26 = sphi 0, %s25
      %s42 = sphi 0, %s26
      %s46 = sphi 0, %s46
      %s48 = sphi 0, %s46
      %s49 = sphi 0, %s48
      %s63 = sphi 0, %s49
      %s67 = sphi 0, %s67
      %s69 = sphi 0, %s67
      %s70 = sphi 0, %s69
      %s84 = sphi 0, %s70
      %s88 = sphi 0, %s88
      %s90 = sphi 0, %s88
      %s91 = sphi 0, %s90
      %s105 = sphi 0, %s91
      %s111 = sphi 0, %s113
      %s114 = sphi 0, %s111
      %s115 = sphi 0, %s114
      %s131 = sphi 0, %s115
      %s137 = sphi 0, %s139
      %s140 = sphi 0, %s137
      %s141 = sphi 0, %s140
      %s157 = sphi 0, %s141
    $region4: #{_lambda_.8} parent=1 // loop_header_branch
      %15 = sbr.rel (%p13) target = $region8
    $region5: #{_lambda_.8} parent=1 // loop_body
      %s17 = ssub.s32 %s12, 1
      %s18 = ssub.s32 %s12, 2
      %s19 = sadd.s32 %s12, 1
      %s20 = ssub.s32 %s12, %s19
      %p21 = scmp.eq.s32.totalorder %s20, 0
      %s23 = sadd.s32 %s22, 1
      %s24 = scalar_select %p21, %s22, %s23
      %p27 = pneg %p21
      %p28 = scmp.eq.s32.totalorder %s12, 3
      %p29 = por %p27, %p28
      %p30 = scmp.ne.s32.totalorder %s22, %s25
      %p31 = scmp.eq.s32.totalorder %s12, 0
      %p32 = por %p30, %p31
      %p33 = scmp.ne.s32.totalorder %s22, %s25
      %p34 = scmp.eq.s32.totalorder %s17, 3
      %p35 = por %p33, %p34
      %p36 = scmp.ne.s32.totalorder %s25, %s26
      %p37 = scmp.eq.s32.totalorder %s17, 0
      %p38 = por %p36, %p37
      %p39 = scmp.ne.s32.totalorder %s25, %s26
      %p40 = scmp.eq.s32.totalorder %s18, 3
      %p41 = por %p39, %p40
      %p43 = scmp.ne.s32.totalorder %s26, %s42
      %p44 = scmp.eq.s32.totalorder %s18, 0
      %p45 = por %p43, %p44
      %s47 = sadd.s32 %s46, 1
      %p50 = scmp.eq.s32.totalorder %s12, 3
      %p51 = scmp.ne.s32.totalorder %s46, %s48
      %p52 = scmp.eq.s32.totalorder %s12, 0
      %p53 = por %p51, %p52
      %p54 = scmp.ne.s32.totalorder %s46, %s48
      %p55 = scmp.eq.s32.totalorder %s17, 3
      %p56 = por %p54, %p55
      %p57 = scmp.ne.s32.totalorder %s48, %s49
      %p58 = scmp.eq.s32.totalorder %s17, 0
      %p59 = por %p57, %p58
      %p60 = scmp.ne.s32.totalorder %s48, %s49
      %p61 = scmp.eq.s32.totalorder %s18, 3
      %p62 = por %p60, %p61
      %p64 = scmp.ne.s32.totalorder %s49, %s63
      %p65 = scmp.eq.s32.totalorder %s18, 0
      %p66 = por %p64, %p65
      %s68 = sadd.s32 %s67, 1
      %p71 = scmp.eq.s32.totalorder %s12, 3
      %p72 = scmp.ne.s32.totalorder %s67, %s69
      %p73 = scmp.eq.s32.totalorder %s12, 0
      %p74 = por %p72, %p73
      %p75 = scmp.ne.s32.totalorder %s67, %s69
      %p76 = scmp.eq.s32.totalorder %s17, 3
      %p77 = por %p75, %p76
      %p78 = scmp.ne.s32.totalorder %s69, %s70
      %p79 = scmp.eq.s32.totalorder %s17, 0
      %p80 = por %p78, %p79
      %p81 = scmp.ne.s32.totalorder %s69, %s70
      %p82 = scmp.eq.s32.totalorder %s18, 3
      %p83 = por %p81, %p82
      %p85 = scmp.ne.s32.totalorder %s70, %s84
      %p86 = scmp.eq.s32.totalorder %s18, 0
      %p87 = por %p85, %p86
      %s89 = sadd.s32 %s88, 1
      %p92 = scmp.eq.s32.totalorder %s12, 3
      %p93 = scmp.ne.s32.totalorder %s88, %s90
      %p94 = scmp.eq.s32.totalorder %s12, 0
      %p95 = por %p93, %p94
      %p96 = scmp.ne.s32.totalorder %s88, %s90
      %p97 = scmp.eq.s32.totalorder %s17, 3
      %p98 = por %p96, %p97
      %p99 = scmp.ne.s32.totalorder %s90, %s91
      %p100 = scmp.eq.s32.totalorder %s17, 0
      %p101 = por %p99, %p100
      %p102 = scmp.ne.s32.totalorder %s90, %s91
      %p103 = scmp.eq.s32.totalorder %s18, 3
      %p104 = por %p102, %p103
      %p106 = scmp.ne.s32.totalorder %s91, %s105
      %p107 = scmp.eq.s32.totalorder %s18, 0
      %p108 = por %p106, %p107
      %s109 = ssub.s32 %s12, %s19
      %p110 = scmp.eq.s32.totalorder %s109, 0
      %s112 = sadd.s32 %s111, 1
      %s113 = scalar_select %p110, %s111, %s112
      %p116 = pneg %p110
      %p117 = scmp.eq.s32.totalorder %s12, 3
      %p118 = por %p116, %p117
      %p119 = scmp.ne.s32.totalorder %s111, %s114
      %p120 = scmp.eq.s32.totalorder %s12, 0
      %p121 = por %p119, %p120
      %p122 = scmp.ne.s32.totalorder %s111, %s114
      %p123 = scmp.eq.s32.totalorder %s17, 3
      %p124 = por %p122, %p123
      %p125 = scmp.ne.s32.totalorder %s114, %s115
      %p126 = scmp.eq.s32.totalorder %s17, 0
      %p127 = por %p125, %p126
      %p128 = scmp.ne.s32.totalorder %s114, %s115
      %p129 = scmp.eq.s32.totalorder %s18, 3
      %p130 = por %p128, %p129
      %p132 = scmp.ne.s32.totalorder %s115, %s131
      %p133 = scmp.eq.s32.totalorder %s18, 0
      %p134 = por %p132, %p133
      %s135 = ssub.s32 %s12, %s19
      %p136 = scmp.eq.s32.totalorder %s135, 0
      %s138 = sadd.s32 %s137, 1
      %s139 = scalar_select %p136, %s137, %s138
      %p142 = pneg %p136
      %p143 = scmp.eq.s32.totalorder %s12, 3
      %p144 = por %p142, %p143
      %p145 = scmp.ne.s32.totalorder %s137, %s140
      %p146 = scmp.eq.s32.totalorder %s12, 0
      %p147 = por %p145, %p146
      %p148 = scmp.ne.s32.totalorder %s137, %s140
      %p149 = scmp.eq.s32.totalorder %s17, 3
      %p150 = por %p148, %p149
      %p151 = scmp.ne.s32.totalorder %s140, %s141
      %p152 = scmp.eq.s32.totalorder %s17, 0
      %p153 = por %p151, %p152
      %p154 = scmp.ne.s32.totalorder %s140, %s141
      %p155 = scmp.eq.s32.totalorder %s18, 3
      %p156 = por %p154, %p155
      %p158 = scmp.ne.s32.totalorder %s141, %s157
      %p159 = scmp.eq.s32.totalorder %s18, 0
      %p160 = por %p158, %p159
      %p161 = scmp.le.s32.totalorder 1, %s12
      %p162 = scmp.lt.s32.totalorder %s12, 5
      %p163 = pnand %p161, %p162
      %p164 = pneg %p163
      // Predicated region
      $region9: #{_lambda_.8} parent=5 // pred_check
        _
      $region10: #{_lambda_.8} parent=5 // pred_check_branch
        %166 = sbr.rel (%p163) target = $region12
      $region11: #{_lambda_.8} parent=5 // pred_region
        %s167 = ssub.s32 %s12, 1
        // Predicated region
        $region13: #{_lambda_.8} parent=11 // pred_check
          %p168 = pneg %p59
        $region14: #{_lambda_.8} parent=11 // pred_check_branch
          %170 = sbr.rel (%p168) target = $region16
        $region15: #{_lambda_.8} parent=11 // pred_region
          _
        $region16: #{_lambda_.8} parent=11 // pred_fallthru
          _
        // Predicated region
        $region17: #{_lambda_.8} parent=11 // pred_check
          %p171 = pneg %p80
        $region18: #{_lambda_.8} parent=11 // pred_check_branch
          %173 = sbr.rel (%p171) target = $region20
        $region19: #{_lambda_.8} parent=11 // pred_region
          _
        $region20: #{_lambda_.8} parent=11 // pred_fallthru
          _
        // Predicated region
        $region21: #{_lambda_.8} parent=11 // pred_check
          %p174 = pneg %p101
        $region22: #{_lambda_.8} parent=11 // pred_check_branch
          %176 = sbr.rel (%p174) target = $region24
        $region23: #{_lambda_.8} parent=11 // pred_region
          _
        $region24: #{_lambda_.8} parent=11 // pred_fallthru
          _
      $region12: #{_lambda_.8} parent=5 // pred_fallthru
        _
      %p177 = scmp.lt.s32.totalorder %s12, 4
      // Predicated region
      $region25: #{_lambda_.8} parent=5 // pred_check
        %p178 = pneg %p177
      $region26: #{_lambda_.8} parent=5 // pred_check_branch
        %180 = sbr.rel (%p178) target = $region28
      $region27: #{_lambda_.8} parent=5 // pred_region
        // Predicated region
        $region29: #{_lambda_.8} parent=27 // pred_check
          %p181 = pneg %p32
        $region30: #{_lambda_.8} parent=27 // pred_check_branch
          %183 = sbr.rel (%p181) target = $region32
        $region31: #{_lambda_.8} parent=27 // pred_region
          %s184 = sand.u32 %s22, 1
          %s185 = sand.u32 %s22, 1
          %s186 = smul.addr %s185, 64
          %s187 = scalar_lea.vmem [#allocation2], %s186
          %s188 = smul.u32 4, %s12
          %s189 = smul.addr %s188, 4
          %s190 = scalar_lea.vmem %s0, %s189
          // Predicated region
          $region33: #{_lambda_.8} parent=31 // pred_check
            _
          $region34: #{_lambda_.8} parent=31 // pred_check_branch
            %192 = sbr.rel (0) target = $region36
          $region35: #{_lambda_.8} parent=31 // pred_region
            // Predicated region
            $region37: #{_lambda_.8} parent=35 // pred_check
              _
            $region38: #{_lambda_.8} parent=35 // pred_check_branch
              %194 = sbr.rel (0) target = $region40
            $region39: #{_lambda_.8} parent=35 // pred_region
              loop: start=0, step=1, limit=1
              $region41: #{_lambda_.8} parent=39 // loop_pre_header
                _
              $region42: #{_lambda_.8} parent=39 // loop_header
                %s196 = sphi 0, %s200
                %p197 = scmp.ge.s32.totalorder %s196, 1
                %s201 = sphi %s190, %s190
                %s202 = sphi %s187, %s187
              $region43: #{_lambda_.8} parent=39 // loop_header_branch
                %199 = sbr.rel (%p197) target = $region47
              $region44: #{_lambda_.8} parent=39 // loop_body
                %v203 = vld [vmem:[%s201] sm:$0xff]
                %204 = vst [vmem:[%s202] sm:$0xff] %v203
                %v205 = vld [vmem:[%s201 + $0x8] sm:$0xff]
                %206 = vst [vmem:[%s202 + $0x8] sm:$0xff] %v205
                %v207 = vld [vmem:[%s201 + $0x40] sm:$0xff]
                %208 = vst [vmem:[%s202 + $0x10] sm:$0xff] %v207
                %v209 = vld [vmem:[%s201 + $0x48] sm:$0xff]
                %210 = vst [vmem:[%s202 + $0x18] sm:$0xff] %v209
                %v211 = vld [vmem:[%s201 + $0x80] sm:$0xff]
                %212 = vst [vmem:[%s202 + $0x20] sm:$0xff] %v211
                %v213 = vld [vmem:[%s201 + $0x88] sm:$0xff]
                %214 = vst [vmem:[%s202 + $0x28] sm:$0xff] %v213
                %v215 = vld [vmem:[%s201 + $0xc0] sm:$0xff]
                %216 = vst [vmem:[%s202 + $0x30] sm:$0xff] %v215
                %v217 = vld [vmem:[%s201 + $0xc8] sm:$0xff]
                %218 = vst [vmem:[%s202 + $0x38] sm:$0xff] %v217
              $region45: #{_lambda_.8} parent=39 // loop_footer
                %s200 = sadd.s32 1, %s196
              $region46: #{_lambda_.8} parent=39 // loop_footer_branch
                %195 = sbr.rel target = $region42
              $region47: #{_lambda_.8} parent=39 // loop_exit
                _
            $region40: #{_lambda_.8} parent=35 // pred_fallthru
              _
            // Predicated region
            $region48: #{_lambda_.8} parent=35 // pred_check
              _
            $region49: #{_lambda_.8} parent=35 // pred_check_branch
              %220 = sbr.rel target = $region51
            $region50: #{_lambda_.8} parent=35 // pred_region
              _
            $region51: #{_lambda_.8} parent=35 // pred_fallthru
              _
          $region36: #{_lambda_.8} parent=31 // pred_fallthru
            _
          %221 = vnop
        $region32: #{_lambda_.8} parent=27 // pred_fallthru
          _
      $region28: #{_lambda_.8} parent=5 // pred_fallthru
        _
      %p222 = scmp.le.s32.totalorder 1, %s12
      %p223 = scmp.lt.s32.totalorder %s12, 5
      %p224 = pnand %p222, %p223
      %p225 = pneg %p224
      // Predicated region
      $region52: #{_lambda_.8} parent=5 // pred_check
        _
      $region53: #{_lambda_.8} parent=5 // pred_check_branch
        %227 = sbr.rel (%p224) target = $region55
      $region54: #{_lambda_.8} parent=5 // pred_region
        %s228 = ssub.s32 %s12, 1
        %s229 = sand.u32 %s25, 1
        %s230 = sand.u32 %s25, 1
        %s231 = smul.addr %s230, 64
        %s232 = scalar_lea.vmem [#allocation2], %s231
        // Predicated region
        $region56: #{_lambda_.8} parent=54 // pred_check
          %p233 = pneg %p38
        $region57: #{_lambda_.8} parent=54 // pred_check_branch
          %235 = sbr.rel (%p233) target = $region59
        $region58: #{_lambda_.8} parent=54 // pred_region
          _
        $region59: #{_lambda_.8} parent=54 // pred_fallthru
          _
        %s236 = sand.u32 %s25, 1
        %s237 = sand.u32 %s25, 1
        %s238 = smul.addr %s237, 64
        %s239 = scalar_lea.vmem [#allocation2], %s238
        %p240 = pneg %p38
        %p241 = pneg %p35
        %p242 = pneg %p59
        %p243 = pneg %p56
        %p244 = pneg %p80
        %p245 = pneg %p77
        %p246 = pneg %p101
        %p247 = pneg %p98
        %p248 = pneg %p127
        %p249 = pneg %p124
        %s250 = sand.u32 %s114, 1
        %s251 = sand.u32 %s114, 1
        %s252 = smul.addr %s251, 64
        %s253 = scalar_lea.vmem [#allocation3], %s252
        %p254 = pneg %p153
        %p255 = pneg %p150
        %s256 = sand.u32 %s140, 1
        %s257 = sand.u32 %s140, 1
        %s258 = smul.addr %s257, 32
        %s259 = scalar_lea.vmem [#allocation4], %s258
        %s260 = smul.u32 4, %s17
        %s261 = smul.u32 4, %s17
        %s262 = smul.u32 4, %s17
        %v264 = vld [vmem:[%s1] sm:$0xf]
        %v265 = vld [vmem:[%s1 + $0x4] sm:$0xf]
        %v266 = vld [vmem:[%s232] sm:$0xff]
        %v267 = vld [vmem:[%s232 + $0x8] sm:$0xff]
        %v268 = vld [vmem:[%s232 + $0x10] sm:$0xff]
        %v269 = vld [vmem:[%s232 + $0x18] sm:$0xff]
        %v270 = vld [vmem:[%s232 + $0x20] sm:$0xff]
        %v271 = vld [vmem:[%s232 + $0x28] sm:$0xff]
        %v272 = vld [vmem:[%s232 + $0x30] sm:$0x33]
        %v273 = vld [vmem:[%s232 + $0x38] sm:$0x33]
        %v276 = vunpack.c.l.b16 %v264
        %v277 = vunpack.c.l.b16 %v265
        %v278 = vpack.c.b16 %v277, %v276
        %v287 = vunpack.c.l.b16 %v266
        %v288 = vunpack.c.h.b16 %v266
        %v289 = vunpack.c.l.b16 %v267
        %v290 = vunpack.c.h.b16 %v267
        %v291 = vunpack.c.l.b16 %v268
        %v292 = vunpack.c.h.b16 %v268
        %v293 = vunpack.c.l.b16 %v269
        %v294 = vunpack.c.h.b16 %v269
        %v295 = vunpack.c.l.b16 %v270
        %v296 = vunpack.c.h.b16 %v270
        %v297 = vunpack.c.l.b16 %v271
        %v298 = vunpack.c.h.b16 %v271
        %v299 = vunpack.c.l.b16 %v272
        %v300 = vunpack.c.h.b16 %v272
        %v301 = vunpack.c.l.b16 %v273
        %v302 = vunpack.c.h.b16 %v273
        %v303 = vpack.c.b16 %v291, %v287
        %v304 = vpack.c.b16 %v292, %v288
        %v305 = vpack.c.b16 %v293, %v289
        %v306 = vpack.c.b16 %v294, %v290
        %v307 = vpack.c.b16 %v299, %v295
        %v308 = vpack.c.b16 %v300, %v296
        %v309 = vpack.c.b16 %v301, %v297
        %v310 = vpack.c.b16 %v302, %v298
        %vm315 = vcmask 220160
        %v317 = vsel %vm315, %v278, 0
        %vm319 = vcmask 1044480
        %vm320 = vcmask 1045504
        %v321 = vsel %vm319, 4294967295, 65535
        %v322 = vsel %vm320, %v321, 0
        %v324 = vand.u32 %v307, %v322
        %v327 = vand.u32 %v308, %v322
        %v330 = vand.u32 %v309, %v322
        %v333 = vand.u32 %v310, %v322
        %335 = vmatprep.subr.bf16.mxu0 %v304
        %336 = vmatpush1.bf16.msra.mxu0 %v303
        %337 = vmatprep.subr.bf16.mxu0 %v327
        %338 = vmatpush1.bf16.msra.mxu0 %v324
        %339 = vmatprep.subr.bf16.mxu0 0
        %340 = vmatpush1.bf16.msra.mxu0 0
        %341 = vmatprep.subr.bf16.mxu0 0
        %342 = vmatpush1.bf16.msra.mxu0 0
        %343 = vmatprep.subr.bf16.mxu0 0
        %344 = vmatpush1.bf16.msra.mxu0 0
        %345 = vmatprep.subr.bf16.mxu0 0
        %346 = vmatpush1.bf16.msra.mxu0 0
        %347 = vmatprep.subr.bf16.mxu0 0
        %348 = vmatpush1.bf16.msra.mxu0 0
        %349 = vmatprep.subr.bf16.mxu0 0
        %350 = vmatpush1.bf16.msra.mxu0 0
        %351 = vmatprep.subr.bf16.mxu0 0
        %352 = vmatpush1.bf16.msra.mxu0 0
        %353 = vmatprep.subr.bf16.mxu0 0
        %354 = vmatpush1.bf16.msra.mxu0 0
        %355 = vmatprep.subr.bf16.mxu0 0
        %356 = vmatpush1.bf16.msra.mxu0 0
        %357 = vmatprep.subr.bf16.mxu0 0
        %358 = vmatpush1.bf16.msra.mxu0 0
        %359 = vmatprep.subr.bf16.mxu0 0
        %360 = vmatpush1.bf16.msra.mxu0 0
        %361 = vmatprep.subr.bf16.mxu0 0
        %362 = vmatpush1.bf16.msra.mxu0 0
        %363 = vmatprep.subr.bf16.mxu0 0
        %364 = vmatpush1.bf16.msra.mxu0 0
        %365 = vmatprep.subr.bf16.mxu0 0
        %366 = vmatpush1.bf16.msra.mxu0 0
        %367 = vmatprep.mubr.bf16.mxu0 0
        %368 = vmatmul.mubr.bf16.gmra.mrb[0].mxu0 %v317
        %v369 = vpop.f32.mrb[0].mxu0
        %v370 = vadd.f32 0.0, %v369
        %v371 = vpop.f32.mrb[0].mxu0
        %v372 = vadd.f32 0.0, %v371
        %v373 = vpop.f32.mrb[0].mxu0
        %v374 = vadd.f32 0.0, %v373
        %v375 = vpop.f32.mrb[0].mxu0
        %v376 = vadd.f32 0.0, %v375
        %377 = vdwg.mxu0
        %378 = vmatprep.subr.bf16.mxu0 %v306
        %379 = vmatpush1.bf16.msra.mxu0 %v305
        %380 = vmatprep.subr.bf16.mxu0 %v333
        %381 = vmatpush1.bf16.msra.mxu0 %v330
        %382 = vmatprep.subr.bf16.mxu0 0
        %383 = vmatpush1.bf16.msra.mxu0 0
        %384 = vmatprep.subr.bf16.mxu0 0
        %385 = vmatpush1.bf16.msra.mxu0 0
        %386 = vmatprep.subr.bf16.mxu0 0
        %387 = vmatpush1.bf16.msra.mxu0 0
        %388 = vmatprep.subr.bf16.mxu0 0
        %389 = vmatpush1.bf16.msra.mxu0 0
        %390 = vmatprep.subr.bf16.mxu0 0
        %391 = vmatpush1.bf16.msra.mxu0 0
        %392 = vmatprep.subr.bf16.mxu0 0
        %393 = vmatpush1.bf16.msra.mxu0 0
        %394 = vmatprep.subr.bf16.mxu0 0
        %395 = vmatpush1.bf16.msra.mxu0 0
        %396 = vmatprep.subr.bf16.mxu0 0
        %397 = vmatpush1.bf16.msra.mxu0 0
        %398 = vmatprep.subr.bf16.mxu0 0
        %399 = vmatpush1.bf16.msra.mxu0 0
        %400 = vmatprep.subr.bf16.mxu0 0
        %401 = vmatpush1.bf16.msra.mxu0 0
        %402 = vmatprep.subr.bf16.mxu0 0
        %403 = vmatpush1.bf16.msra.mxu0 0
        %404 = vmatprep.subr.bf16.mxu0 0
        %405 = vmatpush1.bf16.msra.mxu0 0
        %406 = vmatprep.subr.bf16.mxu0 0
        %407 = vmatpush1.bf16.msra.mxu0 0
        %408 = vmatprep.subr.bf16.mxu0 0
        %409 = vmatpush1.bf16.msra.mxu0 0
        %410 = vmatprep.mubr.bf16.mxu0 0
        %411 = vmatmul.mubr.bf16.gmra.mrb[0].mxu0 %v317
        %v412 = vpop.f32.mrb[0].mxu0
        %v413 = vadd.f32 0.0, %v412
        %v414 = vpop.f32.mrb[0].mxu0
        %v415 = vadd.f32 0.0, %v414
        %v416 = vpop.f32.mrb[0].mxu0
        %v417 = vadd.f32 0.0, %v416
        %v418 = vpop.f32.mrb[0].mxu0
        %v419 = vadd.f32 0.0, %v418
        %420 = vdwg.mxu0
        %v421 = vld [vmem:[%s2] sm:$0xff]
        %v422 = vld [vmem:[%s2 + $0x8] sm:$0xff]
        %424 = vset.pattern.permute.xlu0 0
        %425 = vperm.xlu0 %424, %v421
        %v426 = vpop.permute.xlu0 %425
        %429 = vset.pattern.permute.xlu0 0
        %430 = vperm.xlu0 %429, %v422
        %v431 = vpop.permute.xlu0 %430
        %v433 = vmul.f32 %v370, %v426
        %v434 = vmul.f32 %v372, %v426
        %v435 = vmul.f32 %v413, %v426
        %v436 = vmul.f32 %v415, %v426
        %v437 = vmul.f32 %v374, %v431
        %v438 = vmul.f32 %v376, %v431
        %v439 = vmul.f32 %v417, %v431
        %v440 = vmul.f32 %v419, %v431
        %v441 = vld [vmem:[%s3] sm:$0xff]
        %v442 = vld [vmem:[%s3 + $0x8] sm:$0xff]
        %444 = vset.pattern.permute.xlu0 0
        %445 = vperm.xlu0 %444, %v441
        %v446 = vpop.permute.xlu0 %445
        %449 = vset.pattern.permute.xlu0 0
        %450 = vperm.xlu0 %449, %v442
        %v451 = vpop.permute.xlu0 %450
        %v453 = vadd.f32 %v433, %v446
        %v454 = vadd.f32 %v434, %v446
        %v455 = vadd.f32 %v435, %v446
        %v456 = vadd.f32 %v436, %v446
        %v457 = vadd.f32 %v437, %v451
        %v458 = vadd.f32 %v438, %v451
        %v459 = vadd.f32 %v439, %v451
        %v460 = vadd.f32 %v440, %v451
        %v461 = vmax.f32 %v453, 0.0
        %v462 = vmax.f32 %v454, 0.0
        %v463 = vmax.f32 %v455, 0.0
        %v464 = vmax.f32 %v456, 0.0
        %v465 = vmax.f32 %v457, 0.0
        %v466 = vmax.f32 %v458, 0.0
        %v467 = vmax.f32 %v459, 0.0
        %v468 = vmax.f32 %v460, 0.0
        %v469 = vpack.c.bf16 %v465, %v461
        %v470 = vpack.c.bf16 %v466, %v462
        %v471 = vpack.c.bf16 %v467, %v463
        %v472 = vpack.c.bf16 %v468, %v464
        %473 = vst [vmem:[%s253] sm:$0xff] %v370
        %474 = vst [vmem:[%s253 + $0x8] sm:$0xff] %v372
        %475 = vst [vmem:[%s253 + $0x10] sm:$0xff] %v413
        %476 = vst [vmem:[%s253 + $0x18] sm:$0xff] %v415
        %477 = vst [vmem:[%s253 + $0x20] sm:$0xff] %v374
        %478 = vst [vmem:[%s253 + $0x28] sm:$0xff] %v376
        %479 = vst [vmem:[%s253 + $0x30] sm:$0xff] %v417
        %480 = vst [vmem:[%s253 + $0x38] sm:$0xff] %v419
        %v485 = vunpack.c.l.b16 %v469
        %v486 = vunpack.c.l.b16 %v470
        %v487 = vunpack.c.l.b16 %v471
        %v488 = vunpack.c.l.b16 %v472
        %v489 = vunpack.c.h.b16 %v469
        %v490 = vunpack.c.h.b16 %v470
        %v491 = vunpack.c.h.b16 %v471
        %v492 = vunpack.c.h.b16 %v472
        %v493 = vpack.c.b16 %v486, %v485
        %v494 = vpack.c.b16 %v488, %v487
        %v495 = vpack.c.b16 %v490, %v489
        %v496 = vpack.c.b16 %v492, %v491
        %501 = vst [vmem:[%s259] sm:$0xff] %v493
        %502 = vst [vmem:[%s259 + $0x8] sm:$0xff] %v494
        %503 = vst [vmem:[%s259 + $0x10] sm:$0xff] %v495
        %504 = vst [vmem:[%s259 + $0x18] sm:$0xff] %v496
        %s505 = sand.u32 %s114, 1
        %s506 = sand.u32 %s114, 1
        %s507 = smul.addr %s506, 64
        %s508 = scalar_lea.vmem [#allocation3], %s507
        %s509 = sand.u32 %s140, 1
        %s510 = sand.u32 %s140, 1
        %s511 = smul.addr %s510, 32
        %s512 = scalar_lea.vmem [#allocation4], %s511
        // Predicated region
        $region60: #{_lambda_.8} parent=54 // pred_check
          %p513 = pneg %p124
        $region61: #{_lambda_.8} parent=54 // pred_check_branch
          %515 = sbr.rel (%p513) target = $region63
        $region62: #{_lambda_.8} parent=54 // pred_region
          %s516 = smul.u32 4, %s17
          %s517 = smul.addr %s516, 8
          %s518 = scalar_lea.vmem %s4, %s517
          // Predicated region
          $region64: #{_lambda_.8} parent=62 // pred_check
            _
          $region65: #{_lambda_.8} parent=62 // pred_check_branch
            %520 = sbr.rel (0) target = $region67
          $region66: #{_lambda_.8} parent=62 // pred_region
            // Predicated region
            $region68: #{_lambda_.8} parent=66 // pred_check
              _
            $region69: #{_lambda_.8} parent=66 // pred_check_branch
              %522 = sbr.rel (0) target = $region71
            $region70: #{_lambda_.8} parent=66 // pred_region
              loop: start=0, step=1, limit=1
              $region72: #{_lambda_.8} parent=70 // loop_pre_header
                _
              $region73: #{_lambda_.8} parent=70 // loop_header
                %s524 = sphi 0, %s528
                %p525 = scmp.ge.s32.totalorder %s524, 1
                %s529 = sphi %s508, %s508
                %s530 = sphi %s518, %s518
              $region74: #{_lambda_.8} parent=70 // loop_header_branch
                %527 = sbr.rel (%p525) target = $region78
              $region75: #{_lambda_.8} parent=70 // loop_body
                %v531 = vld [vmem:[%s529] sm:$0xff]
                %532 = vst [vmem:[%s530] sm:$0xff] %v531
                %v533 = vld [vmem:[%s529 + $0x8] sm:$0xff]
                %534 = vst [vmem:[%s530 + $0x8] sm:$0xff] %v533
                %v535 = vld [vmem:[%s529 + $0x10] sm:$0xff]
                %536 = vst [vmem:[%s530 + $0x10] sm:$0xff] %v535
                %v537 = vld [vmem:[%s529 + $0x18] sm:$0xff]
                %538 = vst [vmem:[%s530 + $0x18] sm:$0xff] %v537
                %v539 = vld [vmem:[%s529 + $0x20] sm:$0xff]
                %540 = vst [vmem:[%s530 + $0x80] sm:$0xff] %v539
                %v541 = vld [vmem:[%s529 + $0x28] sm:$0xff]
                %542 = vst [vmem:[%s530 + $0x88] sm:$0xff] %v541
                %v543 = vld [vmem:[%s529 + $0x30] sm:$0xff]
                %544 = vst [vmem:[%s530 + $0x90] sm:$0xff] %v543
                %v545 = vld [vmem:[%s529 + $0x38] sm:$0xff]
                %546 = vst [vmem:[%s530 + $0x98] sm:$0xff] %v545
              $region76: #{_lambda_.8} parent=70 // loop_footer
                %s528 = sadd.s32 1, %s524
              $region77: #{_lambda_.8} parent=70 // loop_footer_branch
                %523 = sbr.rel target = $region73
              $region78: #{_lambda_.8} parent=70 // loop_exit
                _
            $region71: #{_lambda_.8} parent=66 // pred_fallthru
              _
            // Predicated region
            $region79: #{_lambda_.8} parent=66 // pred_check
              _
            $region80: #{_lambda_.8} parent=66 // pred_check_branch
              %548 = sbr.rel target = $region82
            $region81: #{_lambda_.8} parent=66 // pred_region
              _
            $region82: #{_lambda_.8} parent=66 // pred_fallthru
              _
          $region67: #{_lambda_.8} parent=62 // pred_fallthru
            _
          %549 = vnop
        $region63: #{_lambda_.8} parent=54 // pred_fallthru
          _
        // Predicated region
        $region83: #{_lambda_.8} parent=54 // pred_check
          %p550 = pneg %p150
        $region84: #{_lambda_.8} parent=54 // pred_check_branch
          %552 = sbr.rel (%p550) target = $region86
        $region85: #{_lambda_.8} parent=54 // pred_region
          %s553 = smul.u32 4, %s17
          %s554 = smul.addr %s553, 4
          %s555 = scalar_lea.vmem %s5, %s554
          // Predicated region
          $region87: #{_lambda_.8} parent=85 // pred_check
            _
          $region88: #{_lambda_.8} parent=85 // pred_check_branch
            %557 = sbr.rel (0) target = $region90
          $region89: #{_lambda_.8} parent=85 // pred_region
            // Predicated region
            $region91: #{_lambda_.8} parent=89 // pred_check
              _
            $region92: #{_lambda_.8} parent=89 // pred_check_branch
              %559 = sbr.rel (0) target = $region94
            $region93: #{_lambda_.8} parent=89 // pred_region
              loop: start=0, step=1, limit=1
              $region95: #{_lambda_.8} parent=93 // loop_pre_header
                _
              $region96: #{_lambda_.8} parent=93 // loop_header
                %s561 = sphi 0, %s565
                %p562 = scmp.ge.s32.totalorder %s561, 1
                %s566 = sphi %s512, %s512
                %s567 = sphi %s555, %s555
              $region97: #{_lambda_.8} parent=93 // loop_header_branch
                %564 = sbr.rel (%p562) target = $region101
              $region98: #{_lambda_.8} parent=93 // loop_body
                %v568 = vld [vmem:[%s566] sm:$0xff]
                %569 = vst [vmem:[%s567] sm:$0xff] %v568
                %v570 = vld [vmem:[%s566 + $0x8] sm:$0xff]
                %571 = vst [vmem:[%s567 + $0x8] sm:$0xff] %v570
                %v572 = vld [vmem:[%s566 + $0x10] sm:$0xff]
                %573 = vst [vmem:[%s567 + $0x40] sm:$0xff] %v572
                %v574 = vld [vmem:[%s566 + $0x18] sm:$0xff]
                %575 = vst [vmem:[%s567 + $0x48] sm:$0xff] %v574
              $region99: #{_lambda_.8} parent=93 // loop_footer
                %s565 = sadd.s32 1, %s561
              $region100: #{_lambda_.8} parent=93 // loop_footer_branch
                %560 = sbr.rel target = $region96
              $region101: #{_lambda_.8} parent=93 // loop_exit
                _
            $region94: #{_lambda_.8} parent=89 // pred_fallthru
              _
            // Predicated region
            $region102: #{_lambda_.8} parent=89 // pred_check
              _
            $region103: #{_lambda_.8} parent=89 // pred_check_branch
              %577 = sbr.rel target = $region105
            $region104: #{_lambda_.8} parent=89 // pred_region
              _
            $region105: #{_lambda_.8} parent=89 // pred_fallthru
              _
          $region90: #{_lambda_.8} parent=85 // pred_fallthru
            _
          %578 = vnop
        $region86: #{_lambda_.8} parent=54 // pred_fallthru
          _
      $region55: #{_lambda_.8} parent=5 // pred_fallthru
        _
      %p579 = scmp.le.s32.totalorder 2, %s12
      // Predicated region
      $region106: #{_lambda_.8} parent=5 // pred_check
        %p580 = pneg %p579
      $region107: #{_lambda_.8} parent=5 // pred_check_branch
        %582 = sbr.rel (%p580) target = $region109
      $region108: #{_lambda_.8} parent=5 // pred_region
        %s583 = ssub.s32 %s12, 2
        // Predicated region
        $region110: #{_lambda_.8} parent=108 // pred_check
          %p584 = pneg %p130
        $region111: #{_lambda_.8} parent=108 // pred_check_branch
          %586 = sbr.rel (%p584) target = $region113
        $region112: #{_lambda_.8} parent=108 // pred_region
          %s587 = sand.u32 %s115, 1
          %s588 = sand.u32 %s115, 1
          %s589 = smul.addr %s588, 64
          %s590 = scalar_lea.vmem [#allocation3], %s589
        $region113: #{_lambda_.8} parent=108 // pred_fallthru
          _
        // Predicated region
        $region114: #{_lambda_.8} parent=108 // pred_check
          %p591 = pneg %p156
        $region115: #{_lambda_.8} parent=108 // pred_check_branch
          %593 = sbr.rel (%p591) target = $region117
        $region116: #{_lambda_.8} parent=108 // pred_region
          %s594 = sand.u32 %s141, 1
          %s595 = sand.u32 %s141, 1
          %s596 = smul.addr %s595, 32
          %s597 = scalar_lea.vmem [#allocation4], %s596
        $region117: #{_lambda_.8} parent=108 // pred_fallthru
          _
      $region109: #{_lambda_.8} parent=5 // pred_fallthru
        _
    $region6: #{_lambda_.8} parent=1 // loop_footer
      %s16 = sadd.s32 1, %s12
    $region7: #{_lambda_.8} parent=1 // loop_footer_branch
      %11 = sbr.rel target = $region3
    $region8: #{_lambda_.8} parent=1 // loop_exit
      _

// kernel: _lambda_.10
$region0: #{_lambda_.10}
  #allocation0 [shape = 'u32[]', space=smem, size = 0x4, offset = 0x4, fixed_abs, tag = 'smem constant byte address 0x4 - core index']
  #allocation1 [shape = 'u32[144,128]{1,0:T(1,128)}', space=vmem, size = 0x12000, scoped, tag = 'internal scratch']
  %s0 = inlined_call_operand.vmem [shape: bf16[144,2048], index: 0, kind: input, shape index: {}]
  %s1 = inlined_call_operand.vmem [shape: bf16[16,144], index: 1, kind: input, shape index: {}]
  %s2 = inlined_call_operand.vmem [shape: f32[16,1], index: 2, kind: input, shape index: {}]
  %s3 = inlined_call_operand.vmem [shape: f32[16,1], index: 3, kind: input, shape index: {}]
  %s4 = inlined_call_operand.vmem [shape: f32[16,2048], index: 4, kind: input, shape index: {}]
  %s5 = inlined_call_operand.vmem [shape: f32[16,2048], index: 5, kind: output, shape index: {0}]
  %s6 = inlined_call_operand.vmem [shape: bf16[16,2048], index: 6, kind: output, shape index: {1}]
  %7 = xla_tuple %s5, %s6
  %s8 = sld [smem:[#allocation0]]
  $region145: #{_lambda_.10} parent=0
    _
  %s10 = ssub.s32 1, %s8
  %s11 = scalar_select 0, %s10, %s8
  $region1: #{_lambda_.10} parent=0
    #allocation2 [shape = 'u8[294912]{0}', space=vmem, size = 0x48000, scoped, tag = 'input window, operand 0']
    #allocation3 [shape = 'u8[65536]{0}', space=vmem, size = 0x10000, scoped, tag = 'input window, operand 4']
    #allocation4 [shape = 'u8[65536]{0}', space=vmem, size = 0x10000, scoped, tag = 'output window, operand 0']
    #allocation5 [shape = 'u8[32768]{0}', space=vmem, size = 0x8000, scoped, tag = 'output window, operand 1']
    loop: start=0, step=1, limit=6
    $region2: #{_lambda_.10} parent=1 // loop_pre_header
      _
    $region3: #{_lambda_.10} parent=1 // loop_header
      %s13 = sphi 0, %s17
      %p14 = scmp.ge.s32.totalorder %s13, 6
      %s23 = sphi 0, %s25
      %s26 = sphi 0, %s23
      %s27 = sphi 0, %s26
      %s43 = sphi 0, %s27
      %s47 = sphi 0, %s47
      %s49 = sphi 0, %s47
      %s50 = sphi 0, %s49
      %s64 = sphi 0, %s50
      %s68 = sphi 0, %s68
      %s70 = sphi 0, %s68
      %s71 = sphi 0, %s70
      %s85 = sphi 0, %s71
      %s89 = sphi 0, %s89
      %s91 = sphi 0, %s89
      %s92 = sphi 0, %s91
      %s106 = sphi 0, %s92
      %s112 = sphi 0, %s114
      %s115 = sphi 0, %s112
      %s116 = sphi 0, %s115
      %s132 = sphi 0, %s116
      %s138 = sphi 0, %s140
      %s141 = sphi 0, %s138
      %s142 = sphi 0, %s141
      %s158 = sphi 0, %s142
      %s164 = sphi 0, %s166
      %s167 = sphi 0, %s164
      %s168 = sphi 0, %s167
      %s184 = sphi 0, %s168
    $region4: #{_lambda_.10} parent=1 // loop_header_branch
      %16 = sbr.rel (%p14) target = $region8
    $region5: #{_lambda_.10} parent=1 // loop_body
      %s18 = ssub.s32 %s13, 1
      %s19 = ssub.s32 %s13, 2
      %s20 = sadd.s32 %s13, 1
      %s21 = ssub.s32 %s13, %s20
      %p22 = scmp.eq.s32.totalorder %s21, 0
      %s24 = sadd.s32 %s23, 1
      %s25 = scalar_select %p22, %s23, %s24
      %p28 = pneg %p22
      %p29 = scmp.eq.s32.totalorder %s13, 3
      %p30 = por %p28, %p29
      %p31 = scmp.ne.s32.totalorder %s23, %s26
      %p32 = scmp.eq.s32.totalorder %s13, 0
      %p33 = por %p31, %p32
      %p34 = scmp.ne.s32.totalorder %s23, %s26
      %p35 = scmp.eq.s32.totalorder %s18, 3
      %p36 = por %p34, %p35
      %p37 = scmp.ne.s32.totalorder %s26, %s27
      %p38 = scmp.eq.s32.totalorder %s18, 0
      %p39 = por %p37, %p38
      %p40 = scmp.ne.s32.totalorder %s26, %s27
      %p41 = scmp.eq.s32.totalorder %s19, 3
      %p42 = por %p40, %p41
      %p44 = scmp.ne.s32.totalorder %s27, %s43
      %p45 = scmp.eq.s32.totalorder %s19, 0
      %p46 = por %p44, %p45
      %s48 = sadd.s32 %s47, 1
      %p51 = scmp.eq.s32.totalorder %s13, 3
      %p52 = scmp.ne.s32.totalorder %s47, %s49
      %p53 = scmp.eq.s32.totalorder %s13, 0
      %p54 = por %p52, %p53
      %p55 = scmp.ne.s32.totalorder %s47, %s49
      %p56 = scmp.eq.s32.totalorder %s18, 3
      %p57 = por %p55, %p56
      %p58 = scmp.ne.s32.totalorder %s49, %s50
      %p59 = scmp.eq.s32.totalorder %s18, 0
      %p60 = por %p58, %p59
      %p61 = scmp.ne.s32.totalorder %s49, %s50
      %p62 = scmp.eq.s32.totalorder %s19, 3
      %p63 = por %p61, %p62
      %p65 = scmp.ne.s32.totalorder %s50, %s64
      %p66 = scmp.eq.s32.totalorder %s19, 0
      %p67 = por %p65, %p66
      %s69 = sadd.s32 %s68, 1
      %p72 = scmp.eq.s32.totalorder %s13, 3
      %p73 = scmp.ne.s32.totalorder %s68, %s70
      %p74 = scmp.eq.s32.totalorder %s13, 0
      %p75 = por %p73, %p74
      %p76 = scmp.ne.s32.totalorder %s68, %s70
      %p77 = scmp.eq.s32.totalorder %s18, 3
      %p78 = por %p76, %p77
      %p79 = scmp.ne.s32.totalorder %s70, %s71
      %p80 = scmp.eq.s32.totalorder %s18, 0
      %p81 = por %p79, %p80
      %p82 = scmp.ne.s32.totalorder %s70, %s71
      %p83 = scmp.eq.s32.totalorder %s19, 3
      %p84 = por %p82, %p83
      %p86 = scmp.ne.s32.totalorder %s71, %s85
      %p87 = scmp.eq.s32.totalorder %s19, 0
      %p88 = por %p86, %p87
      %s90 = sadd.s32 %s89, 1
      %p93 = scmp.eq.s32.totalorder %s13, 3
      %p94 = scmp.ne.s32.totalorder %s89, %s91
      %p95 = scmp.eq.s32.totalorder %s13, 0
      %p96 = por %p94, %p95
      %p97 = scmp.ne.s32.totalorder %s89, %s91
      %p98 = scmp.eq.s32.totalorder %s18, 3
      %p99 = por %p97, %p98
      %p100 = scmp.ne.s32.totalorder %s91, %s92
      %p101 = scmp.eq.s32.totalorder %s18, 0
      %p102 = por %p100, %p101
      %p103 = scmp.ne.s32.totalorder %s91, %s92
      %p104 = scmp.eq.s32.totalorder %s19, 3
      %p105 = por %p103, %p104
      %p107 = scmp.ne.s32.totalorder %s92, %s106
      %p108 = scmp.eq.s32.totalorder %s19, 0
      %p109 = por %p107, %p108
      %s110 = ssub.s32 %s13, %s20
      %p111 = scmp.eq.s32.totalorder %s110, 0
      %s113 = sadd.s32 %s112, 1
      %s114 = scalar_select %p111, %s112, %s113
      %p117 = pneg %p111
      %p118 = scmp.eq.s32.totalorder %s13, 3
      %p119 = por %p117, %p118
      %p120 = scmp.ne.s32.totalorder %s112, %s115
      %p121 = scmp.eq.s32.totalorder %s13, 0
      %p122 = por %p120, %p121
      %p123 = scmp.ne.s32.totalorder %s112, %s115
      %p124 = scmp.eq.s32.totalorder %s18, 3
      %p125 = por %p123, %p124
      %p126 = scmp.ne.s32.totalorder %s115, %s116
      %p127 = scmp.eq.s32.totalorder %s18, 0
      %p128 = por %p126, %p127
      %p129 = scmp.ne.s32.totalorder %s115, %s116
      %p130 = scmp.eq.s32.totalorder %s19, 3
      %p131 = por %p129, %p130
      %p133 = scmp.ne.s32.totalorder %s116, %s132
      %p134 = scmp.eq.s32.totalorder %s19, 0
      %p135 = por %p133, %p134
      %s136 = ssub.s32 %s13, %s20
      %p137 = scmp.eq.s32.totalorder %s136, 0
      %s139 = sadd.s32 %s138, 1
      %s140 = scalar_select %p137, %s138, %s139
      %p143 = pneg %p137
      %p144 = scmp.eq.s32.totalorder %s13, 3
      %p145 = por %p143, %p144
      %p146 = scmp.ne.s32.totalorder %s138, %s141
      %p147 = scmp.eq.s32.totalorder %s13, 0
      %p148 = por %p146, %p147
      %p149 = scmp.ne.s32.totalorder %s138, %s141
      %p150 = scmp.eq.s32.totalorder %s18, 3
      %p151 = por %p149, %p150
      %p152 = scmp.ne.s32.totalorder %s141, %s142
      %p153 = scmp.eq.s32.totalorder %s18, 0
      %p154 = por %p152, %p153
      %p155 = scmp.ne.s32.totalorder %s141, %s142
      %p156 = scmp.eq.s32.totalorder %s19, 3
      %p157 = por %p155, %p156
      %p159 = scmp.ne.s32.totalorder %s142, %s158
      %p160 = scmp.eq.s32.totalorder %s19, 0
      %p161 = por %p159, %p160
      %s162 = ssub.s32 %s13, %s20
      %p163 = scmp.eq.s32.totalorder %s162, 0
      %s165 = sadd.s32 %s164, 1
      %s166 = scalar_select %p163, %s164, %s165
      %p169 = pneg %p163
      %p170 = scmp.eq.s32.totalorder %s13, 3
      %p171 = por %p169, %p170
      %p172 = scmp.ne.s32.totalorder %s164, %s167
      %p173 = scmp.eq.s32.totalorder %s13, 0
      %p174 = por %p172, %p173
      %p175 = scmp.ne.s32.totalorder %s164, %s167
      %p176 = scmp.eq.s32.totalorder %s18, 3
      %p177 = por %p175, %p176
      %p178 = scmp.ne.s32.totalorder %s167, %s168
      %p179 = scmp.eq.s32.totalorder %s18, 0
      %p180 = por %p178, %p179
      %p181 = scmp.ne.s32.totalorder %s167, %s168
      %p182 = scmp.eq.s32.totalorder %s19, 3
      %p183 = por %p181, %p182
      %p185 = scmp.ne.s32.totalorder %s168, %s184
      %p186 = scmp.eq.s32.totalorder %s19, 0
      %p187 = por %p185, %p186
      %p188 = scmp.le.s32.totalorder 1, %s13
      %p189 = scmp.lt.s32.totalorder %s13, 5
      %p190 = pnand %p188, %p189
      %p191 = pneg %p190
      // Predicated region
      $region9: #{_lambda_.10} parent=5 // pred_check
        _
      $region10: #{_lambda_.10} parent=5 // pred_check_branch
        %193 = sbr.rel (%p190) target = $region12
      $region11: #{_lambda_.10} parent=5 // pred_region
        %s194 = ssub.s32 %s13, 1
        // Predicated region
        $region13: #{_lambda_.10} parent=11 // pred_check
          %p195 = pneg %p60
        $region14: #{_lambda_.10} parent=11 // pred_check_branch
          %197 = sbr.rel (%p195) target = $region16
        $region15: #{_lambda_.10} parent=11 // pred_region
          _
        $region16: #{_lambda_.10} parent=11 // pred_fallthru
          _
        // Predicated region
        $region17: #{_lambda_.10} parent=11 // pred_check
          %p198 = pneg %p81
        $region18: #{_lambda_.10} parent=11 // pred_check_branch
          %200 = sbr.rel (%p198) target = $region20
        $region19: #{_lambda_.10} parent=11 // pred_region
          _
        $region20: #{_lambda_.10} parent=11 // pred_fallthru
          _
        // Predicated region
        $region21: #{_lambda_.10} parent=11 // pred_check
          %p201 = pneg %p102
        $region22: #{_lambda_.10} parent=11 // pred_check_branch
          %203 = sbr.rel (%p201) target = $region24
        $region23: #{_lambda_.10} parent=11 // pred_region
          _
        $region24: #{_lambda_.10} parent=11 // pred_fallthru
          _
      $region12: #{_lambda_.10} parent=5 // pred_fallthru
        _
      %p204 = scmp.lt.s32.totalorder %s13, 4
      // Predicated region
      $region25: #{_lambda_.10} parent=5 // pred_check
        %p205 = pneg %p204
      $region26: #{_lambda_.10} parent=5 // pred_check_branch
        %207 = sbr.rel (%p205) target = $region28
      $region27: #{_lambda_.10} parent=5 // pred_region
        // Predicated region
        $region29: #{_lambda_.10} parent=27 // pred_check
          %p208 = pneg %p33
        $region30: #{_lambda_.10} parent=27 // pred_check_branch
          %210 = sbr.rel (%p208) target = $region32
        $region31: #{_lambda_.10} parent=27 // pred_region
          %s211 = sand.u32 %s23, 1
          %s212 = sand.u32 %s23, 1
          %s213 = smul.addr %s212, 288
          %s214 = scalar_lea.vmem [#allocation2], %s213
          %s215 = smul.u32 4, %s13
          %s216 = smul.addr %s215, 4
          %s217 = scalar_lea.vmem %s0, %s216
          // Predicated region
          $region33: #{_lambda_.10} parent=31 // pred_check
            _
          $region34: #{_lambda_.10} parent=31 // pred_check_branch
            %219 = sbr.rel (0) target = $region36
          $region35: #{_lambda_.10} parent=31 // pred_region
            // Predicated region
            $region37: #{_lambda_.10} parent=35 // pred_check
              _
            $region38: #{_lambda_.10} parent=35 // pred_check_branch
              %221 = sbr.rel (0) target = $region40
            $region39: #{_lambda_.10} parent=35 // pred_region
              loop: start=0, step=1, limit=1
              $region41: #{_lambda_.10} parent=39 // loop_pre_header
                _
              $region42: #{_lambda_.10} parent=39 // loop_header
                %s223 = sphi 0, %s227
                %p224 = scmp.ge.s32.totalorder %s223, 1
                %s228 = sphi %s217, %s217
                %s229 = sphi %s214, %s214
              $region43: #{_lambda_.10} parent=39 // loop_header_branch
                %226 = sbr.rel (%p224) target = $region47
              $region44: #{_lambda_.10} parent=39 // loop_body
                %v230 = vld [vmem:[%s228] sm:$0xff]
                %231 = vst [vmem:[%s229] sm:$0xff] %v230
                %v232 = vld [vmem:[%s228 + $0x8] sm:$0xff]
                %233 = vst [vmem:[%s229 + $0x8] sm:$0xff] %v232
                %v234 = vld [vmem:[%s228 + $0x40] sm:$0xff]
                %235 = vst [vmem:[%s229 + $0x10] sm:$0xff] %v234
                %v236 = vld [vmem:[%s228 + $0x48] sm:$0xff]
                %237 = vst [vmem:[%s229 + $0x18] sm:$0xff] %v236
                %v238 = vld [vmem:[%s228 + $0x80] sm:$0xff]
                %239 = vst [vmem:[%s229 + $0x20] sm:$0xff] %v238
                %v240 = vld [vmem:[%s228 + $0x88] sm:$0xff]
                %241 = vst [vmem:[%s229 + $0x28] sm:$0xff] %v240
                %v242 = vld [vmem:[%s228 + $0xc0] sm:$0xff]
                %243 = vst [vmem:[%s229 + $0x30] sm:$0xff] %v242
                %v244 = vld [vmem:[%s228 + $0xc8] sm:$0xff]
                %245 = vst [vmem:[%s229 + $0x38] sm:$0xff] %v244
                %v246 = vld [vmem:[%s228 + $0x100] sm:$0xff]
                %247 = vst [vmem:[%s229 + $0x40] sm:$0xff] %v246
                %v248 = vld [vmem:[%s228 + $0x108] sm:$0xff]
                %249 = vst [vmem:[%s229 + $0x48] sm:$0xff] %v248
                %v250 = vld [vmem:[%s228 + $0x140] sm:$0xff]
                %251 = vst [vmem:[%s229 + $0x50] sm:$0xff] %v250
                %v252 = vld [vmem:[%s228 + $0x148] sm:$0xff]
                %253 = vst [vmem:[%s229 + $0x58] sm:$0xff] %v252
                %v254 = vld [vmem:[%s228 + $0x180] sm:$0xff]
                %255 = vst [vmem:[%s229 + $0x60] sm:$0xff] %v254
                %v256 = vld [vmem:[%s228 + $0x188] sm:$0xff]
                %257 = vst [vmem:[%s229 + $0x68] sm:$0xff] %v256
                %v258 = vld [vmem:[%s228 + $0x1c0] sm:$0xff]
                %259 = vst [vmem:[%s229 + $0x70] sm:$0xff] %v258
                %v260 = vld [vmem:[%s228 + $0x1c8] sm:$0xff]
                %261 = vst [vmem:[%s229 + $0x78] sm:$0xff] %v260
                %v262 = vld [vmem:[%s228 + $0x200] sm:$0xff]
                %263 = vst [vmem:[%s229 + $0x80] sm:$0xff] %v262
                %v264 = vld [vmem:[%s228 + $0x208] sm:$0xff]
                %265 = vst [vmem:[%s229 + $0x88] sm:$0xff] %v264
                %v266 = vld [vmem:[%s228 + $0x240] sm:$0xff]
                %267 = vst [vmem:[%s229 + $0x90] sm:$0xff] %v266
                %v268 = vld [vmem:[%s228 + $0x248] sm:$0xff]
                %269 = vst [vmem:[%s229 + $0x98] sm:$0xff] %v268
                %v270 = vld [vmem:[%s228 + $0x280] sm:$0xff]
                %271 = vst [vmem:[%s229 + $0xa0] sm:$0xff] %v270
                %v272 = vld [vmem:[%s228 + $0x288] sm:$0xff]
                %273 = vst [vmem:[%s229 + $0xa8] sm:$0xff] %v272
                %v274 = vld [vmem:[%s228 + $0x2c0] sm:$0xff]
                %275 = vst [vmem:[%s229 + $0xb0] sm:$0xff] %v274
                %v276 = vld [vmem:[%s228 + $0x2c8] sm:$0xff]
                %277 = vst [vmem:[%s229 + $0xb8] sm:$0xff] %v276
                %v278 = vld [vmem:[%s228 + $0x300] sm:$0xff]
                %279 = vst [vmem:[%s229 + $0xc0] sm:$0xff] %v278
                %v280 = vld [vmem:[%s228 + $0x308] sm:$0xff]
                %281 = vst [vmem:[%s229 + $0xc8] sm:$0xff] %v280
                %v282 = vld [vmem:[%s228 + $0x340] sm:$0xff]
                %283 = vst [vmem:[%s229 + $0xd0] sm:$0xff] %v282
                %v284 = vld [vmem:[%s228 + $0x348] sm:$0xff]
                %285 = vst [vmem:[%s229 + $0xd8] sm:$0xff] %v284
                %v286 = vld [vmem:[%s228 + $0x380] sm:$0xff]
                %287 = vst [vmem:[%s229 + $0xe0] sm:$0xff] %v286
                %v288 = vld [vmem:[%s228 + $0x388] sm:$0xff]
                %289 = vst [vmem:[%s229 + $0xe8] sm:$0xff] %v288
                %v290 = vld [vmem:[%s228 + $0x3c0] sm:$0xff]
                %291 = vst [vmem:[%s229 + $0xf0] sm:$0xff] %v290
                %v292 = vld [vmem:[%s228 + $0x3c8] sm:$0xff]
                %293 = vst [vmem:[%s229 + $0xf8] sm:$0xff] %v292
                %v294 = vld [vmem:[%s228 + $0x400] sm:$0xff]
                %295 = vst [vmem:[%s229 + $0x100] sm:$0xff] %v294
                %v296 = vld [vmem:[%s228 + $0x408] sm:$0xff]
                %297 = vst [vmem:[%s229 + $0x108] sm:$0xff] %v296
                %v298 = vld [vmem:[%s228 + $0x440] sm:$0xff]
                %299 = vst [vmem:[%s229 + $0x110] sm:$0xff] %v298
                %v300 = vld [vmem:[%s228 + $0x448] sm:$0xff]
                %301 = vst [vmem:[%s229 + $0x118] sm:$0xff] %v300
              $region45: #{_lambda_.10} parent=39 // loop_footer
                %s227 = sadd.s32 1, %s223
              $region46: #{_lambda_.10} parent=39 // loop_footer_branch
                %222 = sbr.rel target = $region42
              $region47: #{_lambda_.10} parent=39 // loop_exit
                _
            $region40: #{_lambda_.10} parent=35 // pred_fallthru
              _
            // Predicated region
            $region48: #{_lambda_.10} parent=35 // pred_check
              _
            $region49: #{_lambda_.10} parent=35 // pred_check_branch
              %303 = sbr.rel target = $region51
            $region50: #{_lambda_.10} parent=35 // pred_region
              _
            $region51: #{_lambda_.10} parent=35 // pred_fallthru
              _
          $region36: #{_lambda_.10} parent=31 // pred_fallthru
            _
          %304 = vnop
        $region32: #{_lambda_.10} parent=27 // pred_fallthru
          _
        // Predicated region
        $region52: #{_lambda_.10} parent=27 // pred_check
          %p305 = pneg %p122
        $region53: #{_lambda_.10} parent=27 // pred_check_branch
          %307 = sbr.rel (%p305) target = $region55
        $region54: #{_lambda_.10} parent=27 // pred_region
          %s308 = sand.u32 %s112, 1
          %s309 = sand.u32 %s112, 1
          %s310 = smul.addr %s309, 64
          %s311 = scalar_lea.vmem [#allocation3], %s310
          %s312 = smul.u32 4, %s13
          %s313 = smul.addr %s312, 8
          %s314 = scalar_lea.vmem %s4, %s313
          // Predicated region
          $region56: #{_lambda_.10} parent=54 // pred_check
            _
          $region57: #{_lambda_.10} parent=54 // pred_check_branch
            %316 = sbr.rel (0) target = $region59
          $region58: #{_lambda_.10} parent=54 // pred_region
            // Predicated region
            $region60: #{_lambda_.10} parent=58 // pred_check
              _
            $region61: #{_lambda_.10} parent=58 // pred_check_branch
              %318 = sbr.rel (0) target = $region63
            $region62: #{_lambda_.10} parent=58 // pred_region
              loop: start=0, step=1, limit=1
              $region64: #{_lambda_.10} parent=62 // loop_pre_header
                _
              $region65: #{_lambda_.10} parent=62 // loop_header
                %s320 = sphi 0, %s324
                %p321 = scmp.ge.s32.totalorder %s320, 1
                %s325 = sphi %s314, %s314
                %s326 = sphi %s311, %s311
              $region66: #{_lambda_.10} parent=62 // loop_header_branch
                %323 = sbr.rel (%p321) target = $region70
              $region67: #{_lambda_.10} parent=62 // loop_body
                %v327 = vld [vmem:[%s325] sm:$0xff]
                %328 = vst [vmem:[%s326] sm:$0xff] %v327
                %v329 = vld [vmem:[%s325 + $0x8] sm:$0xff]
                %330 = vst [vmem:[%s326 + $0x8] sm:$0xff] %v329
                %v331 = vld [vmem:[%s325 + $0x10] sm:$0xff]
                %332 = vst [vmem:[%s326 + $0x10] sm:$0xff] %v331
                %v333 = vld [vmem:[%s325 + $0x18] sm:$0xff]
                %334 = vst [vmem:[%s326 + $0x18] sm:$0xff] %v333
                %v335 = vld [vmem:[%s325 + $0x80] sm:$0xff]
                %336 = vst [vmem:[%s326 + $0x20] sm:$0xff] %v335
                %v337 = vld [vmem:[%s325 + $0x88] sm:$0xff]
                %338 = vst [vmem:[%s326 + $0x28] sm:$0xff] %v337
                %v339 = vld [vmem:[%s325 + $0x90] sm:$0xff]
                %340 = vst [vmem:[%s326 + $0x30] sm:$0xff] %v339
                %v341 = vld [vmem:[%s325 + $0x98] sm:$0xff]
                %342 = vst [vmem:[%s326 + $0x38] sm:$0xff] %v341
              $region68: #{_lambda_.10} parent=62 // loop_footer
                %s324 = sadd.s32 1, %s320
              $region69: #{_lambda_.10} parent=62 // loop_footer_branch
                %319 = sbr.rel target = $region65
              $region70: #{_lambda_.10} parent=62 // loop_exit
                _
            $region63: #{_lambda_.10} parent=58 // pred_fallthru
              _
            // Predicated region
            $region71: #{_lambda_.10} parent=58 // pred_check
              _
            $region72: #{_lambda_.10} parent=58 // pred_check_branch
              %344 = sbr.rel target = $region74
            $region73: #{_lambda_.10} parent=58 // pred_region
              _
            $region74: #{_lambda_.10} parent=58 // pred_fallthru
              _
          $region59: #{_lambda_.10} parent=54 // pred_fallthru
            _
          %345 = vnop
        $region55: #{_lambda_.10} parent=27 // pred_fallthru
          _
      $region28: #{_lambda_.10} parent=5 // pred_fallthru
        _
      %p346 = scmp.le.s32.totalorder 1, %s13
      %p347 = scmp.lt.s32.totalorder %s13, 5
      %p348 = pnand %p346, %p347
      %p349 = pneg %p348
      // Predicated region
      $region75: #{_lambda_.10} parent=5 // pred_check
        _
      $region76: #{_lambda_.10} parent=5 // pred_check_branch
        %351 = sbr.rel (%p348) target = $region78
      $region77: #{_lambda_.10} parent=5 // pred_region
        %s352 = ssub.s32 %s13, 1
        %s353 = sand.u32 %s26, 1
        %s354 = sand.u32 %s26, 1
        %s355 = smul.addr %s354, 288
        %s356 = scalar_lea.vmem [#allocation2], %s355
        // Predicated region
        $region79: #{_lambda_.10} parent=77 // pred_check
          %p357 = pneg %p39
        $region80: #{_lambda_.10} parent=77 // pred_check_branch
          %359 = sbr.rel (%p357) target = $region82
        $region81: #{_lambda_.10} parent=77 // pred_region
          _
        $region82: #{_lambda_.10} parent=77 // pred_fallthru
          _
        %s360 = sand.u32 %s115, 1
        %s361 = sand.u32 %s115, 1
        %s362 = smul.addr %s361, 64
        %s363 = scalar_lea.vmem [#allocation3], %s362
        // Predicated region
        $region83: #{_lambda_.10} parent=77 // pred_check
          %p364 = pneg %p128
        $region84: #{_lambda_.10} parent=77 // pred_check_branch
          %366 = sbr.rel (%p364) target = $region86
        $region85: #{_lambda_.10} parent=77 // pred_region
          _
        $region86: #{_lambda_.10} parent=77 // pred_fallthru
          _
        %s367 = sand.u32 %s26, 1
        %s368 = sand.u32 %s26, 1
        %s369 = smul.addr %s368, 288
        %s370 = scalar_lea.vmem [#allocation2], %s369
        %p371 = pneg %p39
        %p372 = pneg %p36
        %p373 = pneg %p60
        %p374 = pneg %p57
        %p375 = pneg %p81
        %p376 = pneg %p78
        %p377 = pneg %p102
        %p378 = pneg %p99
        %s379 = sand.u32 %s115, 1
        %s380 = sand.u32 %s115, 1
        %s381 = smul.addr %s380, 64
        %s382 = scalar_lea.vmem [#allocation3], %s381
        %p383 = pneg %p128
        %p384 = pneg %p125
        %p385 = pneg %p154
        %p386 = pneg %p151
        %s387 = sand.u32 %s141, 1
        %s388 = sand.u32 %s141, 1
        %s389 = smul.addr %s388, 64
        %s390 = scalar_lea.vmem [#allocation4], %s389
        %p391 = pneg %p180
        %p392 = pneg %p177
        %s393 = sand.u32 %s167, 1
        %s394 = sand.u32 %s167, 1
        %s395 = smul.addr %s394, 32
        %s396 = scalar_lea.vmem [#allocation5], %s395
        %s397 = smul.u32 4, %s18
        %s398 = smul.u32 4, %s18
        %s399 = smul.u32 4, %s18
        %s400 = smul.u32 4, %s18
        %v402 = vld [vmem:[%s1] sm:$0xff]
        %v403 = vld [vmem:[%s1 + $0x8] sm:$0xff]
        %v404 = vld [vmem:[%s356] sm:$0xff]
        %v405 = vld [vmem:[%s356 + $0x8] sm:$0xff]
        %v406 = vld [vmem:[%s356 + $0x10] sm:$0xff]
        %v407 = vld [vmem:[%s356 + $0x18] sm:$0xff]
        %v408 = vld [vmem:[%s356 + $0x20] sm:$0xff]
        %v409 = vld [vmem:[%s356 + $0x28] sm:$0xff]
        %v410 = vld [vmem:[%s356 + $0x30] sm:$0xff]
        %v411 = vld [vmem:[%s356 + $0x38] sm:$0xff]
        %v412 = vld [vmem:[%s356 + $0x40] sm:$0xff]
        %v413 = vld [vmem:[%s356 + $0x48] sm:$0xff]
        %v414 = vld [vmem:[%s356 + $0x50] sm:$0xff]
        %v415 = vld [vmem:[%s356 + $0x58] sm:$0xff]
        %v416 = vld [vmem:[%s356 + $0x60] sm:$0xff]
        %v417 = vld [vmem:[%s356 + $0x68] sm:$0xff]
        %v418 = vld [vmem:[%s356 + $0x70] sm:$0xff]
        %v419 = vld [vmem:[%s356 + $0x78] sm:$0xff]
        %v420 = vld [vmem:[%s356 + $0x80] sm:$0xff]
        %v421 = vld [vmem:[%s356 + $0x88] sm:$0xff]
        %v422 = vld [vmem:[%s356 + $0x90] sm:$0xff]
        %v423 = vld [vmem:[%s356 + $0x98] sm:$0xff]
        %v424 = vld [vmem:[%s356 + $0xa0] sm:$0xff]
        %v425 = vld [vmem:[%s356 + $0xa8] sm:$0xff]
        %v426 = vld [vmem:[%s356 + $0xb0] sm:$0xff]
        %v427 = vld [vmem:[%s356 + $0xb8] sm:$0xff]
        %v428 = vld [vmem:[%s356 + $0xc0] sm:$0xff]
        %v429 = vld [vmem:[%s356 + $0xc8] sm:$0xff]
        %v430 = vld [vmem:[%s356 + $0xd0] sm:$0xff]
        %v431 = vld [vmem:[%s356 + $0xd8] sm:$0xff]
        %v432 = vld [vmem:[%s356 + $0xe0] sm:$0xff]
        %v433 = vld [vmem:[%s356 + $0xe8] sm:$0xff]
        %v434 = vld [vmem:[%s356 + $0xf0] sm:$0xff]
        %v435 = vld [vmem:[%s356 + $0xf8] sm:$0xff]
        %v436 = vld [vmem:[%s356 + $0x100] sm:$0xff]
        %v437 = vld [vmem:[%s356 + $0x108] sm:$0xff]
        %v438 = vld [vmem:[%s356 + $0x110] sm:$0xff]
        %v439 = vld [vmem:[%s356 + $0x118] sm:$0xff]
        %v440 = vld [vmem:[%s363] sm:$0xff]
        %v441 = vld [vmem:[%s363 + $0x8] sm:$0xff]
        %v442 = vld [vmem:[%s363 + $0x10] sm:$0xff]
        %v443 = vld [vmem:[%s363 + $0x18] sm:$0xff]
        %v444 = vld [vmem:[%s363 + $0x20] sm:$0xff]
        %v445 = vld [vmem:[%s363 + $0x28] sm:$0xff]
        %v446 = vld [vmem:[%s363 + $0x30] sm:$0xff]
        %v447 = vld [vmem:[%s363 + $0x38] sm:$0xff]
        %v450 = vunpack.c.l.b16 %v402
        %v451 = vunpack.c.h.b16 %v402
        %v452 = vunpack.c.l.b16 %v403
        %v453 = vunpack.c.h.b16 %v403
        %v454 = vpack.c.b16 %v452, %v450
        %v455 = vpack.c.b16 %v453, %v451
        %v493 = vunpack.c.l.b16 %v404
        %v494 = vunpack.c.h.b16 %v404
        %v495 = vunpack.c.l.b16 %v405
        %v496 = vunpack.c.h.b16 %v405
        %v497 = vunpack.c.l.b16 %v406
        %v498 = vunpack.c.h.b16 %v406
        %v499 = vunpack.c.l.b16 %v407
        %v500 = vunpack.c.h.b16 %v407
        %v501 = vunpack.c.l.b16 %v408
        %v502 = vunpack.c.h.b16 %v408
        %v503 = vunpack.c.l.b16 %v409
        %v504 = vunpack.c.h.b16 %v409
        %v505 = vunpack.c.l.b16 %v410
        %v506 = vunpack.c.h.b16 %v410
        %v507 = vunpack.c.l.b16 %v411
        %v508 = vunpack.c.h.b16 %v411
        %v509 = vunpack.c.l.b16 %v412
        %v510 = vunpack.c.h.b16 %v412
        %v511 = vunpack.c.l.b16 %v413
        %v512 = vunpack.c.h.b16 %v413
        %v513 = vunpack.c.l.b16 %v414
        %v514 = vunpack.c.h.b16 %v414
        %v515 = vunpack.c.l.b16 %v415
        %v516 = vunpack.c.h.b16 %v415
        %v517 = vunpack.c.l.b16 %v416
        %v518 = vunpack.c.h.b16 %v416
        %v519 = vunpack.c.l.b16 %v417
        %v520 = vunpack.c.h.b16 %v417
        %v521 = vunpack.c.l.b16 %v418
        %v522 = vunpack.c.h.b16 %v418
        %v523 = vunpack.c.l.b16 %v419
        %v524 = vunpack.c.h.b16 %v419
        %v525 = vunpack.c.l.b16 %v420
        %v526 = vunpack.c.h.b16 %v420
        %v527 = vunpack.c.l.b16 %v421
        %v528 = vunpack.c.h.b16 %v421
        %v529 = vunpack.c.l.b16 %v422
        %v530 = vunpack.c.h.b16 %v422
        %v531 = vunpack.c.l.b16 %v423
        %v532 = vunpack.c.h.b16 %v423
        %v533 = vunpack.c.l.b16 %v424
        %v534 = vunpack.c.h.b16 %v424
        %v535 = vunpack.c.l.b16 %v425
        %v536 = vunpack.c.h.b16 %v425
        %v537 = vunpack.c.l.b16 %v426
        %v538 = vunpack.c.h.b16 %v426
        %v539 = vunpack.c.l.b16 %v427
        %v540 = vunpack.c.h.b16 %v427
        %v541 = vunpack.c.l.b16 %v428
        %v542 = vunpack.c.h.b16 %v428
        %v543 = vunpack.c.l.b16 %v429
        %v544 = vunpack.c.h.b16 %v429
        %v545 = vunpack.c.l.b16 %v430
        %v546 = vunpack.c.h.b16 %v430
        %v547 = vunpack.c.l.b16 %v431
        %v548 = vunpack.c.h.b16 %v431
        %v549 = vunpack.c.l.b16 %v432
        %v550 = vunpack.c.h.b16 %v432
        %v551 = vunpack.c.l.b16 %v433
        %v552 = vunpack.c.h.b16 %v433
        %v553 = vunpack.c.l.b16 %v434
        %v554 = vunpack.c.h.b16 %v434
        %v555 = vunpack.c.l.b16 %v435
        %v556 = vunpack.c.h.b16 %v435
        %v557 = vunpack.c.l.b16 %v436
        %v558 = vunpack.c.h.b16 %v436
        %v559 = vunpack.c.l.b16 %v437
        %v560 = vunpack.c.h.b16 %v437
        %v561 = vunpack.c.l.b16 %v438
        %v562 = vunpack.c.h.b16 %v438
        %v563 = vunpack.c.l.b16 %v439
        %v564 = vunpack.c.h.b16 %v439
        %v565 = vpack.c.b16 %v497, %v493
        %v566 = vpack.c.b16 %v498, %v494
        %v567 = vpack.c.b16 %v499, %v495
        %v568 = vpack.c.b16 %v500, %v496
        %v569 = vpack.c.b16 %v505, %v501
        %v570 = vpack.c.b16 %v506, %v502
        %v571 = vpack.c.b16 %v507, %v503
        %v572 = vpack.c.b16 %v508, %v504
        %v573 = vpack.c.b16 %v513, %v509
        %v574 = vpack.c.b16 %v514, %v510
        %v575 = vpack.c.b16 %v515, %v511
        %v576 = vpack.c.b16 %v516, %v512
        %v577 = vpack.c.b16 %v521, %v517
        %v578 = vpack.c.b16 %v522, %v518
        %v579 = vpack.c.b16 %v523, %v519
        %v580 = vpack.c.b16 %v524, %v520
        %v581 = vpack.c.b16 %v529, %v525
        %v582 = vpack.c.b16 %v530, %v526
        %v583 = vpack.c.b16 %v531, %v527
        %v584 = vpack.c.b16 %v532, %v528
        %v585 = vpack.c.b16 %v537, %v533
        %v586 = vpack.c.b16 %v538, %v534
        %v587 = vpack.c.b16 %v539, %v535
        %v588 = vpack.c.b16 %v540, %v536
        %v589 = vpack.c.b16 %v545, %v541
        %v590 = vpack.c.b16 %v546, %v542
        %v591 = vpack.c.b16 %v547, %v543
        %v592 = vpack.c.b16 %v548, %v544
        %v593 = vpack.c.b16 %v553, %v549
        %v594 = vpack.c.b16 %v554, %v550
        %v595 = vpack.c.b16 %v555, %v551
        %v596 = vpack.c.b16 %v556, %v552
        %v597 = vpack.c.b16 %v561, %v557
        %v598 = vpack.c.b16 %v562, %v558
        %v599 = vpack.c.b16 %v563, %v559
        %v600 = vpack.c.b16 %v564, %v560
        %vm637 = vcmask 130048
        %v639 = vsel %vm637, %v455, 0
        %641 = vmatprep.subr.bf16.mxu0 %v566
        %642 = vmatpush1.bf16.msra.mxu0 %v565
        %643 = vmatprep.subr.bf16.mxu0 %v570
        %644 = vmatpush1.bf16.msra.mxu0 %v569
        %645 = vmatprep.subr.bf16.mxu0 %v574
        %646 = vmatpush1.bf16.msra.mxu0 %v573
        %647 = vmatprep.subr.bf16.mxu0 %v578
        %648 = vmatpush1.bf16.msra.mxu0 %v577
        %649 = vmatprep.subr.bf16.mxu0 %v582
        %650 = vmatpush1.bf16.msra.mxu0 %v581
        %651 = vmatprep.subr.bf16.mxu0 %v586
        %652 = vmatpush1.bf16.msra.mxu0 %v585
        %653 = vmatprep.subr.bf16.mxu0 %v590
        %654 = vmatpush1.bf16.msra.mxu0 %v589
        %655 = vmatprep.subr.bf16.mxu0 %v594
        %656 = vmatpush1.bf16.msra.mxu0 %v593
        %657 = vmatprep.subr.bf16.mxu0 %v598
        %658 = vmatpush1.bf16.msra.mxu0 %v597
        %659 = vmatprep.subr.bf16.mxu0 0
        %660 = vmatpush1.bf16.msra.mxu0 0
        %661 = vmatprep.subr.bf16.mxu0 0
        %662 = vmatpush1.bf16.msra.mxu0 0
        %663 = vmatprep.subr.bf16.mxu0 0
        %664 = vmatpush1.bf16.msra.mxu0 0
        %665 = vmatprep.subr.bf16.mxu0 0
        %666 = vmatpush1.bf16.msra.mxu0 0
        %667 = vmatprep.subr.bf16.mxu0 0
        %668 = vmatpush1.bf16.msra.mxu0 0
        %669 = vmatprep.subr.bf16.mxu0 0
        %670 = vmatpush1.bf16.msra.mxu0 0
        %671 = vmatprep.subr.bf16.mxu0 0
        %672 = vmatpush1.bf16.msra.mxu0 0
        %673 = vmatprep.mubr.bf16.mxu0 %v639
        %674 = vmatmul.mubr.bf16.gmra.mrb[0].mxu0 %v454
        %v675 = vpop.f32.mrb[0].mxu0
        %v676 = vadd.f32 %v440, %v675
        %v677 = vpop.f32.mrb[0].mxu0
        %v678 = vadd.f32 %v441, %v677
        %v679 = vpop.f32.mrb[0].mxu0
        %v680 = vadd.f32 %v444, %v679
        %v681 = vpop.f32.mrb[0].mxu0
        %v682 = vadd.f32 %v445, %v681
        %683 = vdwg.mxu0
        %684 = vmatprep.subr.bf16.mxu0 %v568
        %685 = vmatpush1.bf16.msra.mxu0 %v567
        %686 = vmatprep.subr.bf16.mxu0 %v572
        %687 = vmatpush1.bf16.msra.mxu0 %v571
        %688 = vmatprep.subr.bf16.mxu0 %v576
        %689 = vmatpush1.bf16.msra.mxu0 %v575
        %690 = vmatprep.subr.bf16.mxu0 %v580
        %691 = vmatpush1.bf16.msra.mxu0 %v579
        %692 = vmatprep.subr.bf16.mxu0 %v584
        %693 = vmatpush1.bf16.msra.mxu0 %v583
        %694 = vmatprep.subr.bf16.mxu0 %v588
        %695 = vmatpush1.bf16.msra.mxu0 %v587
        %696 = vmatprep.subr.bf16.mxu0 %v592
        %697 = vmatpush1.bf16.msra.mxu0 %v591
        %698 = vmatprep.subr.bf16.mxu0 %v596
        %699 = vmatpush1.bf16.msra.mxu0 %v595
        %700 = vmatprep.subr.bf16.mxu0 %v600
        %701 = vmatpush1.bf16.msra.mxu0 %v599
        %702 = vmatprep.subr.bf16.mxu0 0
        %703 = vmatpush1.bf16.msra.mxu0 0
        %704 = vmatprep.subr.bf16.mxu0 0
        %705 = vmatpush1.bf16.msra.mxu0 0
        %706 = vmatprep.subr.bf16.mxu0 0
        %707 = vmatpush1.bf16.msra.mxu0 0
        %708 = vmatprep.subr.bf16.mxu0 0
        %709 = vmatpush1.bf16.msra.mxu0 0
        %710 = vmatprep.subr.bf16.mxu0 0
        %711 = vmatpush1.bf16.msra.mxu0 0
        %712 = vmatprep.subr.bf16.mxu0 0
        %713 = vmatpush1.bf16.msra.mxu0 0
        %714 = vmatprep.subr.bf16.mxu0 0
        %715 = vmatpush1.bf16.msra.mxu0 0
        %716 = vmatprep.mubr.bf16.mxu0 %v639
        %717 = vmatmul.mubr.bf16.gmra.mrb[0].mxu0 %v454
        %v718 = vpop.f32.mrb[0].mxu0
        %v719 = vadd.f32 %v442, %v718
        %v720 = vpop.f32.mrb[0].mxu0
        %v721 = vadd.f32 %v443, %v720
        %v722 = vpop.f32.mrb[0].mxu0
        %v723 = vadd.f32 %v446, %v722
        %v724 = vpop.f32.mrb[0].mxu0
        %v725 = vadd.f32 %v447, %v724
        %726 = vdwg.mxu0
        %v727 = vld [vmem:[%s2] sm:$0xff]
        %v728 = vld [vmem:[%s2 + $0x8] sm:$0xff]
        %730 = vset.pattern.permute.xlu0 0
        %731 = vperm.xlu0 %730, %v727
        %v732 = vpop.permute.xlu0 %731
        %735 = vset.pattern.permute.xlu0 0
        %736 = vperm.xlu0 %735, %v728
        %v737 = vpop.permute.xlu0 %736
        %v739 = vmul.f32 %v676, %v732
        %v740 = vmul.f32 %v678, %v732
        %v741 = vmul.f32 %v719, %v732
        %v742 = vmul.f32 %v721, %v732
        %v743 = vmul.f32 %v680, %v737
        %v744 = vmul.f32 %v682, %v737
        %v745 = vmul.f32 %v723, %v737
        %v746 = vmul.f32 %v725, %v737
        %v747 = vld [vmem:[%s3] sm:$0xff]
        %v748 = vld [vmem:[%s3 + $0x8] sm:$0xff]
        %750 = vset.pattern.permute.xlu0 0
        %751 = vperm.xlu0 %750, %v747
        %v752 = vpop.permute.xlu0 %751
        %755 = vset.pattern.permute.xlu0 0
        %756 = vperm.xlu0 %755, %v748
        %v757 = vpop.permute.xlu0 %756
        %v759 = vadd.f32 %v739, %v752
        %v760 = vadd.f32 %v740, %v752
        %v761 = vadd.f32 %v741, %v752
        %v762 = vadd.f32 %v742, %v752
        %v763 = vadd.f32 %v743, %v757
        %v764 = vadd.f32 %v744, %v757
        %v765 = vadd.f32 %v745, %v757
        %v766 = vadd.f32 %v746, %v757
        %v767 = vmax.f32 %v759, 0.0
        %v768 = vmax.f32 %v760, 0.0
        %v769 = vmax.f32 %v761, 0.0
        %v770 = vmax.f32 %v762, 0.0
        %v771 = vmax.f32 %v763, 0.0
        %v772 = vmax.f32 %v764, 0.0
        %v773 = vmax.f32 %v765, 0.0
        %v774 = vmax.f32 %v766, 0.0
        %v775 = vpack.c.bf16 %v771, %v767
        %v776 = vpack.c.bf16 %v772, %v768
        %v777 = vpack.c.bf16 %v773, %v769
        %v778 = vpack.c.bf16 %v774, %v770
        %779 = vst [vmem:[%s390] sm:$0xff] %v676
        %780 = vst [vmem:[%s390 + $0x8] sm:$0xff] %v678
        %781 = vst [vmem:[%s390 + $0x10] sm:$0xff] %v719
        %782 = vst [vmem:[%s390 + $0x18] sm:$0xff] %v721
        %783 = vst [vmem:[%s390 + $0x20] sm:$0xff] %v680
        %784 = vst [vmem:[%s390 + $0x28] sm:$0xff] %v682
        %785 = vst [vmem:[%s390 + $0x30] sm:$0xff] %v723
        %786 = vst [vmem:[%s390 + $0x38] sm:$0xff] %v725
        %v791 = vunpack.c.l.b16 %v775
        %v792 = vunpack.c.l.b16 %v776
        %v793 = vunpack.c.l.b16 %v777
        %v794 = vunpack.c.l.b16 %v778
        %v795 = vunpack.c.h.b16 %v775
        %v796 = vunpack.c.h.b16 %v776
        %v797 = vunpack.c.h.b16 %v777
        %v798 = vunpack.c.h.b16 %v778
        %v799 = vpack.c.b16 %v792, %v791
        %v800 = vpack.c.b16 %v794, %v793
        %v801 = vpack.c.b16 %v796, %v795
        %v802 = vpack.c.b16 %v798, %v797
        %807 = vst [vmem:[%s396] sm:$0xff] %v799
        %808 = vst [vmem:[%s396 + $0x8] sm:$0xff] %v800
        %809 = vst [vmem:[%s396 + $0x10] sm:$0xff] %v801
        %810 = vst [vmem:[%s396 + $0x18] sm:$0xff] %v802
        %s811 = sand.u32 %s141, 1
        %s812 = sand.u32 %s141, 1
        %s813 = smul.addr %s812, 64
        %s814 = scalar_lea.vmem [#allocation4], %s813
        %s815 = sand.u32 %s167, 1
        %s816 = sand.u32 %s167, 1
        %s817 = smul.addr %s816, 32
        %s818 = scalar_lea.vmem [#allocation5], %s817
        // Predicated region
        $region87: #{_lambda_.10} parent=77 // pred_check
          %p819 = pneg %p151
        $region88: #{_lambda_.10} parent=77 // pred_check_branch
          %821 = sbr.rel (%p819) target = $region90
        $region89: #{_lambda_.10} parent=77 // pred_region
          %s822 = smul.u32 4, %s18
          %s823 = smul.addr %s822, 8
          %s824 = scalar_lea.vmem %s5, %s823
          // Predicated region
          $region91: #{_lambda_.10} parent=89 // pred_check
            _
          $region92: #{_lambda_.10} parent=89 // pred_check_branch
            %826 = sbr.rel (0) target = $region94
          $region93: #{_lambda_.10} parent=89 // pred_region
            // Predicated region
            $region95: #{_lambda_.10} parent=93 // pred_check
              _
            $region96: #{_lambda_.10} parent=93 // pred_check_branch
              %828 = sbr.rel (0) target = $region98
            $region97: #{_lambda_.10} parent=93 // pred_region
              loop: start=0, step=1, limit=1
              $region99: #{_lambda_.10} parent=97 // loop_pre_header
                _
              $region100: #{_lambda_.10} parent=97 // loop_header
                %s830 = sphi 0, %s834
                %p831 = scmp.ge.s32.totalorder %s830, 1
                %s835 = sphi %s814, %s814
                %s836 = sphi %s824, %s824
              $region101: #{_lambda_.10} parent=97 // loop_header_branch
                %833 = sbr.rel (%p831) target = $region105
              $region102: #{_lambda_.10} parent=97 // loop_body
                %v837 = vld [vmem:[%s835] sm:$0xff]
                %838 = vst [vmem:[%s836] sm:$0xff] %v837
                %v839 = vld [vmem:[%s835 + $0x8] sm:$0xff]
                %840 = vst [vmem:[%s836 + $0x8] sm:$0xff] %v839
                %v841 = vld [vmem:[%s835 + $0x10] sm:$0xff]
                %842 = vst [vmem:[%s836 + $0x10] sm:$0xff] %v841
                %v843 = vld [vmem:[%s835 + $0x18] sm:$0xff]
                %844 = vst [vmem:[%s836 + $0x18] sm:$0xff] %v843
                %v845 = vld [vmem:[%s835 + $0x20] sm:$0xff]
                %846 = vst [vmem:[%s836 + $0x80] sm:$0xff] %v845
                %v847 = vld [vmem:[%s835 + $0x28] sm:$0xff]
                %848 = vst [vmem:[%s836 + $0x88] sm:$0xff] %v847
                %v849 = vld [vmem:[%s835 + $0x30] sm:$0xff]
                %850 = vst [vmem:[%s836 + $0x90] sm:$0xff] %v849
                %v851 = vld [vmem:[%s835 + $0x38] sm:$0xff]
                %852 = vst [vmem:[%s836 + $0x98] sm:$0xff] %v851
              $region103: #{_lambda_.10} parent=97 // loop_footer
                %s834 = sadd.s32 1, %s830
              $region104: #{_lambda_.10} parent=97 // loop_footer_branch
                %829 = sbr.rel target = $region100
              $region105: #{_lambda_.10} parent=97 // loop_exit
                _
            $region98: #{_lambda_.10} parent=93 // pred_fallthru
              _
            // Predicated region
            $region106: #{_lambda_.10} parent=93 // pred_check
              _
            $region107: #{_lambda_.10} parent=93 // pred_check_branch
              %854 = sbr.rel target = $region109
            $region108: #{_lambda_.10} parent=93 // pred_region
              _
            $region109: #{_lambda_.10} parent=93 // pred_fallthru
              _
          $region94: #{_lambda_.10} parent=89 // pred_fallthru
            _
          %855 = vnop
        $region90: #{_lambda_.10} parent=77 // pred_fallthru
          _
        // Predicated region
        $region110: #{_lambda_.10} parent=77 // pred_check
          %p856 = pneg %p177
        $region111: #{_lambda_.10} parent=77 // pred_check_branch
          %858 = sbr.rel (%p856) target = $region113
        $region112: #{_lambda_.10} parent=77 // pred_region
          %s859 = smul.u32 4, %s18
          %s860 = smul.addr %s859, 4
          %s861 = scalar_lea.vmem %s6, %s860
          // Predicated region
          $region114: #{_lambda_.10} parent=112 // pred_check
            _
          $region115: #{_lambda_.10} parent=112 // pred_check_branch
            %863 = sbr.rel (0) target = $region117
          $region116: #{_lambda_.10} parent=112 // pred_region
            // Predicated region
            $region118: #{_lambda_.10} parent=116 // pred_check
              _
            $region119: #{_lambda_.10} parent=116 // pred_check_branch
              %865 = sbr.rel (0) target = $region121
            $region120: #{_lambda_.10} parent=116 // pred_region
              loop: start=0, step=1, limit=1
              $region122: #{_lambda_.10} parent=120 // loop_pre_header
                _
              $region123: #{_lambda_.10} parent=120 // loop_header
                %s867 = sphi 0, %s871
                %p868 = scmp.ge.s32.totalorder %s867, 1
                %s872 = sphi %s818, %s818
                %s873 = sphi %s861, %s861
              $region124: #{_lambda_.10} parent=120 // loop_header_branch
                %870 = sbr.rel (%p868) target = $region128
              $region125: #{_lambda_.10} parent=120 // loop_body
                %v874 = vld [vmem:[%s872] sm:$0xff]
                %875 = vst [vmem:[%s873] sm:$0xff] %v874
                %v876 = vld [vmem:[%s872 + $0x8] sm:$0xff]
                %877 = vst [vmem:[%s873 + $0x8] sm:$0xff] %v876
                %v878 = vld [vmem:[%s872 + $0x10] sm:$0xff]
                %879 = vst [vmem:[%s873 + $0x40] sm:$0xff] %v878
                %v880 = vld [vmem:[%s872 + $0x18] sm:$0xff]
                %881 = vst [vmem:[%s873 + $0x48] sm:$0xff] %v880
              $region126: #{_lambda_.10} parent=120 // loop_footer
                %s871 = sadd.s32 1, %s867
              $region127: #{_lambda_.10} parent=120 // loop_footer_branch
                %866 = sbr.rel target = $region123
              $region128: #{_lambda_.10} parent=120 // loop_exit
                _
            $region121: #{_lambda_.10} parent=116 // pred_fallthru
              _
            // Predicated region
            $region129: #{_lambda_.10} parent=116 // pred_check
              _
            $region130: #{_lambda_.10} parent=116 // pred_check_branch
              %883 = sbr.rel target = $region132
            $region131: #{_lambda_.10} parent=116 // pred_region
              _
            $region132: #{_lambda_.10} parent=116 // pred_fallthru
              _
          $region117: #{_lambda_.10} parent=112 // pred_fallthru
            _
          %884 = vnop
        $region113: #{_lambda_.10} parent=77 // pred_fallthru
          _
      $region78: #{_lambda_.10} parent=5 // pred_fallthru
        _
      %p885 = scmp.le.s32.totalorder 2, %s13
      // Predicated region
      $region133: #{_lambda_.10} parent=5 // pred_check
        %p886 = pneg %p885
      $region134: #{_lambda_.10} parent=5 // pred_check_branch
        %888 = sbr.rel (%p886) target = $region136
      $region135: #{_lambda_.10} parent=5 // pred_region
        %s889 = ssub.s32 %s13, 2
        // Predicated region
        $region137: #{_lambda_.10} parent=135 // pred_check
          %p890 = pneg %p157
        $region138: #{_lambda_.10} parent=135 // pred_check_branch
          %892 = sbr.rel (%p890) target = $region140
        $region139: #{_lambda_.10} parent=135 // pred_region
          %s893 = sand.u32 %s142, 1
          %s894 = sand.u32 %s142, 1
          %s895 = smul.addr %s894, 64
          %s896 = scalar_lea.vmem [#allocation4], %s895
        $region140: #{_lambda_.10} parent=135 // pred_fallthru
          _
        // Predicated region
        $region141: #{_lambda_.10} parent=135 // pred_check
          %p897 = pneg %p183
        $region142: #{_lambda_.10} parent=135 // pred_check_branch
          %899 = sbr.rel (%p897) target = $region144
        $region143: #{_lambda_.10} parent=135 // pred_region
          %s900 = sand.u32 %s168, 1
          %s901 = sand.u32 %s168, 1
          %s902 = smul.addr %s901, 32
          %s903 = scalar_lea.vmem [#allocation5], %s902
        $region144: #{_lambda_.10} parent=135 // pred_fallthru
          _
      $region136: #{_lambda_.10} parent=5 // pred_fallthru
        _
    $region6: #{_lambda_.10} parent=1 // loop_footer
      %s17 = sadd.s32 1, %s13
    $region7: #{_lambda_.10} parent=1 // loop_footer_branch
      %12 = sbr.rel target = $region3
    $region8: #{_lambda_.10} parent=1 // loop_exit
      _

// kernel: _lambda_.9
$region0: #{_lambda_.9}
  #allocation0 [shape = 'u32[]', space=smem, size = 0x4, offset = 0x4, fixed_abs, tag = 'smem constant byte address 0x4 - core index']
  #allocation1 [shape = 'u32[144,128]{1,0:T(1,128)}', space=vmem, size = 0x12000, scoped, tag = 'internal scratch']
  %s0 = inlined_call_operand.vmem [shape: bf16[144,2048], index: 0, kind: input, shape index: {}]
  %s1 = inlined_call_operand.vmem [shape: bf16[16,144], index: 1, kind: input, shape index: {}]
  %s2 = inlined_call_operand.vmem [shape: f32[16,1], index: 2, kind: input, shape index: {}]
  %s3 = inlined_call_operand.vmem [shape: f32[16,1], index: 3, kind: input, shape index: {}]
  %s4 = inlined_call_operand.vmem [shape: bf16[16,2048], index: 4, kind: output, shape index: {}]
  %s5 = sld [smem:[#allocation0]]
  $region91: #{_lambda_.9} parent=0
    _
  %s7 = ssub.s32 1, %s5
  %s8 = scalar_select 0, %s7, %s5
  $region1: #{_lambda_.9} parent=0
    #allocation2 [shape = 'u8[294912]{0}', space=vmem, size = 0x48000, scoped, tag = 'input window, operand 0']
    #allocation3 [shape = 'u8[32768]{0}', space=vmem, size = 0x8000, scoped, tag = 'output window, operand 0']
    loop: start=0, step=1, limit=6
    $region2: #{_lambda_.9} parent=1 // loop_pre_header
      _
    $region3: #{_lambda_.9} parent=1 // loop_header
      %s10 = sphi 0, %s14
      %p11 = scmp.ge.s32.totalorder %s10, 6
      %s20 = sphi 0, %s22
      %s23 = sphi 0, %s20
      %s24 = sphi 0, %s23
      %s40 = sphi 0, %s24
      %s44 = sphi 0, %s44
      %s46 = sphi 0, %s44
      %s47 = sphi 0, %s46
      %s61 = sphi 0, %s47
      %s65 = sphi 0, %s65
      %s67 = sphi 0, %s65
      %s68 = sphi 0, %s67
      %s82 = sphi 0, %s68
      %s86 = sphi 0, %s86
      %s88 = sphi 0, %s86
      %s89 = sphi 0, %s88
      %s103 = sphi 0, %s89
      %s109 = sphi 0, %s111
      %s112 = sphi 0, %s109
      %s113 = sphi 0, %s112
      %s129 = sphi 0, %s113
    $region4: #{_lambda_.9} parent=1 // loop_header_branch
      %13 = sbr.rel (%p11) target = $region8
    $region5: #{_lambda_.9} parent=1 // loop_body
      %s15 = ssub.s32 %s10, 1
      %s16 = ssub.s32 %s10, 2
      %s17 = sadd.s32 %s10, 1
      %s18 = ssub.s32 %s10, %s17
      %p19 = scmp.eq.s32.totalorder %s18, 0
      %s21 = sadd.s32 %s20, 1
      %s22 = scalar_select %p19, %s20, %s21
      %p25 = pneg %p19
      %p26 = scmp.eq.s32.totalorder %s10, 3
      %p27 = por %p25, %p26
      %p28 = scmp.ne.s32.totalorder %s20, %s23
      %p29 = scmp.eq.s32.totalorder %s10, 0
      %p30 = por %p28, %p29
      %p31 = scmp.ne.s32.totalorder %s20, %s23
      %p32 = scmp.eq.s32.totalorder %s15, 3
      %p33 = por %p31, %p32
      %p34 = scmp.ne.s32.totalorder %s23, %s24
      %p35 = scmp.eq.s32.totalorder %s15, 0
      %p36 = por %p34, %p35
      %p37 = scmp.ne.s32.totalorder %s23, %s24
      %p38 = scmp.eq.s32.totalorder %s16, 3
      %p39 = por %p37, %p38
      %p41 = scmp.ne.s32.totalorder %s24, %s40
      %p42 = scmp.eq.s32.totalorder %s16, 0
      %p43 = por %p41, %p42
      %s45 = sadd.s32 %s44, 1
      %p48 = scmp.eq.s32.totalorder %s10, 3
      %p49 = scmp.ne.s32.totalorder %s44, %s46
      %p50 = scmp.eq.s32.totalorder %s10, 0
      %p51 = por %p49, %p50
      %p52 = scmp.ne.s32.totalorder %s44, %s46
      %p53 = scmp.eq.s32.totalorder %s15, 3
      %p54 = por %p52, %p53
      %p55 = scmp.ne.s32.totalorder %s46, %s47
      %p56 = scmp.eq.s32.totalorder %s15, 0
      %p57 = por %p55, %p56
      %p58 = scmp.ne.s32.totalorder %s46, %s47
      %p59 = scmp.eq.s32.totalorder %s16, 3
      %p60 = por %p58, %p59
      %p62 = scmp.ne.s32.totalorder %s47, %s61
      %p63 = scmp.eq.s32.totalorder %s16, 0
      %p64 = por %p62, %p63
      %s66 = sadd.s32 %s65, 1
      %p69 = scmp.eq.s32.totalorder %s10, 3
      %p70 = scmp.ne.s32.totalorder %s65, %s67
      %p71 = scmp.eq.s32.totalorder %s10, 0
      %p72 = por %p70, %p71
      %p73 = scmp.ne.s32.totalorder %s65, %s67
      %p74 = scmp.eq.s32.totalorder %s15, 3
      %p75 = por %p73, %p74
      %p76 = scmp.ne.s32.totalorder %s67, %s68
      %p77 = scmp.eq.s32.totalorder %s15, 0
      %p78 = por %p76, %p77
      %p79 = scmp.ne.s32.totalorder %s67, %s68
      %p80 = scmp.eq.s32.totalorder %s16, 3
      %p81 = por %p79, %p80
      %p83 = scmp.ne.s32.totalorder %s68, %s82
      %p84 = scmp.eq.s32.totalorder %s16, 0
      %p85 = por %p83, %p84
      %s87 = sadd.s32 %s86, 1
      %p90 = scmp.eq.s32.totalorder %s10, 3
      %p91 = scmp.ne.s32.totalorder %s86, %s88
      %p92 = scmp.eq.s32.totalorder %s10, 0
      %p93 = por %p91, %p92
      %p94 = scmp.ne.s32.totalorder %s86, %s88
      %p95 = scmp.eq.s32.totalorder %s15, 3
      %p96 = por %p94, %p95
      %p97 = scmp.ne.s32.totalorder %s88, %s89
      %p98 = scmp.eq.s32.totalorder %s15, 0
      %p99 = por %p97, %p98
      %p100 = scmp.ne.s32.totalorder %s88, %s89
      %p101 = scmp.eq.s32.totalorder %s16, 3
      %p102 = por %p100, %p101
      %p104 = scmp.ne.s32.totalorder %s89, %s103
      %p105 = scmp.eq.s32.totalorder %s16, 0
      %p106 = por %p104, %p105
      %s107 = ssub.s32 %s10, %s17
      %p108 = scmp.eq.s32.totalorder %s107, 0
      %s110 = sadd.s32 %s109, 1
      %s111 = scalar_select %p108, %s109, %s110
      %p114 = pneg %p108
      %p115 = scmp.eq.s32.totalorder %s10, 3
      %p116 = por %p114, %p115
      %p117 = scmp.ne.s32.totalorder %s109, %s112
      %p118 = scmp.eq.s32.totalorder %s10, 0
      %p119 = por %p117, %p118
      %p120 = scmp.ne.s32.totalorder %s109, %s112
      %p121 = scmp.eq.s32.totalorder %s15, 3
      %p122 = por %p120, %p121
      %p123 = scmp.ne.s32.totalorder %s112, %s113
      %p124 = scmp.eq.s32.totalorder %s15, 0
      %p125 = por %p123, %p124
      %p126 = scmp.ne.s32.totalorder %s112, %s113
      %p127 = scmp.eq.s32.totalorder %s16, 3
      %p128 = por %p126, %p127
      %p130 = scmp.ne.s32.totalorder %s113, %s129
      %p131 = scmp.eq.s32.totalorder %s16, 0
      %p132 = por %p130, %p131
      %p133 = scmp.le.s32.totalorder 1, %s10
      %p134 = scmp.lt.s32.totalorder %s10, 5
      %p135 = pnand %p133, %p134
      %p136 = pneg %p135
      // Predicated region
      $region9: #{_lambda_.9} parent=5 // pred_check
        _
      $region10: #{_lambda_.9} parent=5 // pred_check_branch
        %138 = sbr.rel (%p135) target = $region12
      $region11: #{_lambda_.9} parent=5 // pred_region
        %s139 = ssub.s32 %s10, 1
        // Predicated region
        $region13: #{_lambda_.9} parent=11 // pred_check
          %p140 = pneg %p57
        $region14: #{_lambda_.9} parent=11 // pred_check_branch
          %142 = sbr.rel (%p140) target = $region16
        $region15: #{_lambda_.9} parent=11 // pred_region
          _
        $region16: #{_lambda_.9} parent=11 // pred_fallthru
          _
        // Predicated region
        $region17: #{_lambda_.9} parent=11 // pred_check
          %p143 = pneg %p78
        $region18: #{_lambda_.9} parent=11 // pred_check_branch
          %145 = sbr.rel (%p143) target = $region20
        $region19: #{_lambda_.9} parent=11 // pred_region
          _
        $region20: #{_lambda_.9} parent=11 // pred_fallthru
          _
        // Predicated region
        $region21: #{_lambda_.9} parent=11 // pred_check
          %p146 = pneg %p99
        $region22: #{_lambda_.9} parent=11 // pred_check_branch
          %148 = sbr.rel (%p146) target = $region24
        $region23: #{_lambda_.9} parent=11 // pred_region
          _
        $region24: #{_lambda_.9} parent=11 // pred_fallthru
          _
      $region12: #{_lambda_.9} parent=5 // pred_fallthru
        _
      %p149 = scmp.lt.s32.totalorder %s10, 4
      // Predicated region
      $region25: #{_lambda_.9} parent=5 // pred_check
        %p150 = pneg %p149
      $region26: #{_lambda_.9} parent=5 // pred_check_branch
        %152 = sbr.rel (%p150) target = $region28
      $region27: #{_lambda_.9} parent=5 // pred_region
        // Predicated region
        $region29: #{_lambda_.9} parent=27 // pred_check
          %p153 = pneg %p30
        $region30: #{_lambda_.9} parent=27 // pred_check_branch
          %155 = sbr.rel (%p153) target = $region32
        $region31: #{_lambda_.9} parent=27 // pred_region
          %s156 = sand.u32 %s20, 1
          %s157 = sand.u32 %s20, 1
          %s158 = smul.addr %s157, 288
          %s159 = scalar_lea.vmem [#allocation2], %s158
          %s160 = smul.u32 4, %s10
          %s161 = smul.addr %s160, 4
          %s162 = scalar_lea.vmem %s0, %s161
          // Predicated region
          $region33: #{_lambda_.9} parent=31 // pred_check
            _
          $region34: #{_lambda_.9} parent=31 // pred_check_branch
            %164 = sbr.rel (0) target = $region36
          $region35: #{_lambda_.9} parent=31 // pred_region
            // Predicated region
            $region37: #{_lambda_.9} parent=35 // pred_check
              _
            $region38: #{_lambda_.9} parent=35 // pred_check_branch
              %166 = sbr.rel (0) target = $region40
            $region39: #{_lambda_.9} parent=35 // pred_region
              loop: start=0, step=1, limit=1
              $region41: #{_lambda_.9} parent=39 // loop_pre_header
                _
              $region42: #{_lambda_.9} parent=39 // loop_header
                %s168 = sphi 0, %s172
                %p169 = scmp.ge.s32.totalorder %s168, 1
                %s173 = sphi %s162, %s162
                %s174 = sphi %s159, %s159
              $region43: #{_lambda_.9} parent=39 // loop_header_branch
                %171 = sbr.rel (%p169) target = $region47
              $region44: #{_lambda_.9} parent=39 // loop_body
                %v175 = vld [vmem:[%s173] sm:$0xff]
                %176 = vst [vmem:[%s174] sm:$0xff] %v175
                %v177 = vld [vmem:[%s173 + $0x8] sm:$0xff]
                %178 = vst [vmem:[%s174 + $0x8] sm:$0xff] %v177
                %v179 = vld [vmem:[%s173 + $0x40] sm:$0xff]
                %180 = vst [vmem:[%s174 + $0x10] sm:$0xff] %v179
                %v181 = vld [vmem:[%s173 + $0x48] sm:$0xff]
                %182 = vst [vmem:[%s174 + $0x18] sm:$0xff] %v181
                %v183 = vld [vmem:[%s173 + $0x80] sm:$0xff]
                %184 = vst [vmem:[%s174 + $0x20] sm:$0xff] %v183
                %v185 = vld [vmem:[%s173 + $0x88] sm:$0xff]
                %186 = vst [vmem:[%s174 + $0x28] sm:$0xff] %v185
                %v187 = vld [vmem:[%s173 + $0xc0] sm:$0xff]
                %188 = vst [vmem:[%s174 + $0x30] sm:$0xff] %v187
                %v189 = vld [vmem:[%s173 + $0xc8] sm:$0xff]
                %190 = vst [vmem:[%s174 + $0x38] sm:$0xff] %v189
                %v191 = vld [vmem:[%s173 + $0x100] sm:$0xff]
                %192 = vst [vmem:[%s174 + $0x40] sm:$0xff] %v191
                %v193 = vld [vmem:[%s173 + $0x108] sm:$0xff]
                %194 = vst [vmem:[%s174 + $0x48] sm:$0xff] %v193
                %v195 = vld [vmem:[%s173 + $0x140] sm:$0xff]
                %196 = vst [vmem:[%s174 + $0x50] sm:$0xff] %v195
                %v197 = vld [vmem:[%s173 + $0x148] sm:$0xff]
                %198 = vst [vmem:[%s174 + $0x58] sm:$0xff] %v197
                %v199 = vld [vmem:[%s173 + $0x180] sm:$0xff]
                %200 = vst [vmem:[%s174 + $0x60] sm:$0xff] %v199
                %v201 = vld [vmem:[%s173 + $0x188] sm:$0xff]
                %202 = vst [vmem:[%s174 + $0x68] sm:$0xff] %v201
                %v203 = vld [vmem:[%s173 + $0x1c0] sm:$0xff]
                %204 = vst [vmem:[%s174 + $0x70] sm:$0xff] %v203
                %v205 = vld [vmem:[%s173 + $0x1c8] sm:$0xff]
                %206 = vst [vmem:[%s174 + $0x78] sm:$0xff] %v205
                %v207 = vld [vmem:[%s173 + $0x200] sm:$0xff]
                %208 = vst [vmem:[%s174 + $0x80] sm:$0xff] %v207
                %v209 = vld [vmem:[%s173 + $0x208] sm:$0xff]
                %210 = vst [vmem:[%s174 + $0x88] sm:$0xff] %v209
                %v211 = vld [vmem:[%s173 + $0x240] sm:$0xff]
                %212 = vst [vmem:[%s174 + $0x90] sm:$0xff] %v211
                %v213 = vld [vmem:[%s173 + $0x248] sm:$0xff]
                %214 = vst [vmem:[%s174 + $0x98] sm:$0xff] %v213
                %v215 = vld [vmem:[%s173 + $0x280] sm:$0xff]
                %216 = vst [vmem:[%s174 + $0xa0] sm:$0xff] %v215
                %v217 = vld [vmem:[%s173 + $0x288] sm:$0xff]
                %218 = vst [vmem:[%s174 + $0xa8] sm:$0xff] %v217
                %v219 = vld [vmem:[%s173 + $0x2c0] sm:$0xff]
                %220 = vst [vmem:[%s174 + $0xb0] sm:$0xff] %v219
                %v221 = vld [vmem:[%s173 + $0x2c8] sm:$0xff]
                %222 = vst [vmem:[%s174 + $0xb8] sm:$0xff] %v221
                %v223 = vld [vmem:[%s173 + $0x300] sm:$0xff]
                %224 = vst [vmem:[%s174 + $0xc0] sm:$0xff] %v223
                %v225 = vld [vmem:[%s173 + $0x308] sm:$0xff]
                %226 = vst [vmem:[%s174 + $0xc8] sm:$0xff] %v225
                %v227 = vld [vmem:[%s173 + $0x340] sm:$0xff]
                %228 = vst [vmem:[%s174 + $0xd0] sm:$0xff] %v227
                %v229 = vld [vmem:[%s173 + $0x348] sm:$0xff]
                %230 = vst [vmem:[%s174 + $0xd8] sm:$0xff] %v229
                %v231 = vld [vmem:[%s173 + $0x380] sm:$0xff]
                %232 = vst [vmem:[%s174 + $0xe0] sm:$0xff] %v231
                %v233 = vld [vmem:[%s173 + $0x388] sm:$0xff]
                %234 = vst [vmem:[%s174 + $0xe8] sm:$0xff] %v233
                %v235 = vld [vmem:[%s173 + $0x3c0] sm:$0xff]
                %236 = vst [vmem:[%s174 + $0xf0] sm:$0xff] %v235
                %v237 = vld [vmem:[%s173 + $0x3c8] sm:$0xff]
                %238 = vst [vmem:[%s174 + $0xf8] sm:$0xff] %v237
                %v239 = vld [vmem:[%s173 + $0x400] sm:$0xff]
                %240 = vst [vmem:[%s174 + $0x100] sm:$0xff] %v239
                %v241 = vld [vmem:[%s173 + $0x408] sm:$0xff]
                %242 = vst [vmem:[%s174 + $0x108] sm:$0xff] %v241
                %v243 = vld [vmem:[%s173 + $0x440] sm:$0xff]
                %244 = vst [vmem:[%s174 + $0x110] sm:$0xff] %v243
                %v245 = vld [vmem:[%s173 + $0x448] sm:$0xff]
                %246 = vst [vmem:[%s174 + $0x118] sm:$0xff] %v245
              $region45: #{_lambda_.9} parent=39 // loop_footer
                %s172 = sadd.s32 1, %s168
              $region46: #{_lambda_.9} parent=39 // loop_footer_branch
                %167 = sbr.rel target = $region42
              $region47: #{_lambda_.9} parent=39 // loop_exit
                _
            $region40: #{_lambda_.9} parent=35 // pred_fallthru
              _
            // Predicated region
            $region48: #{_lambda_.9} parent=35 // pred_check
              _
            $region49: #{_lambda_.9} parent=35 // pred_check_branch
              %248 = sbr.rel target = $region51
            $region50: #{_lambda_.9} parent=35 // pred_region
              _
            $region51: #{_lambda_.9} parent=35 // pred_fallthru
              _
          $region36: #{_lambda_.9} parent=31 // pred_fallthru
            _
          %249 = vnop
        $region32: #{_lambda_.9} parent=27 // pred_fallthru
          _
      $region28: #{_lambda_.9} parent=5 // pred_fallthru
        _
      %p250 = scmp.le.s32.totalorder 1, %s10
      %p251 = scmp.lt.s32.totalorder %s10, 5
      %p252 = pnand %p250, %p251
      %p253 = pneg %p252
      // Predicated region
      $region52: #{_lambda_.9} parent=5 // pred_check
        _
      $region53: #{_lambda_.9} parent=5 // pred_check_branch
        %255 = sbr.rel (%p252) target = $region55
      $region54: #{_lambda_.9} parent=5 // pred_region
        %s256 = ssub.s32 %s10, 1
        %s257 = sand.u32 %s23, 1
        %s258 = sand.u32 %s23, 1
        %s259 = smul.addr %s258, 288
        %s260 = scalar_lea.vmem [#allocation2], %s259
        // Predicated region
        $region56: #{_lambda_.9} parent=54 // pred_check
          %p261 = pneg %p36
        $region57: #{_lambda_.9} parent=54 // pred_check_branch
          %263 = sbr.rel (%p261) target = $region59
        $region58: #{_lambda_.9} parent=54 // pred_region
          _
        $region59: #{_lambda_.9} parent=54 // pred_fallthru
          _
        %s264 = sand.u32 %s23, 1
        %s265 = sand.u32 %s23, 1
        %s266 = smul.addr %s265, 288
        %s267 = scalar_lea.vmem [#allocation2], %s266
        %p268 = pneg %p36
        %p269 = pneg %p33
        %p270 = pneg %p57
        %p271 = pneg %p54
        %p272 = pneg %p78
        %p273 = pneg %p75
        %p274 = pneg %p99
        %p275 = pneg %p96
        %p276 = pneg %p125
        %p277 = pneg %p122
        %s278 = sand.u32 %s112, 1
        %s279 = sand.u32 %s112, 1
        %s280 = smul.addr %s279, 32
        %s281 = scalar_lea.vmem [#allocation3], %s280
        %s282 = smul.u32 4, %s15
        %s283 = smul.u32 4, %s15
        %v285 = vld [vmem:[%s1] sm:$0xff]
        %v286 = vld [vmem:[%s1 + $0x8] sm:$0xff]
        %v287 = vld [vmem:[%s260] sm:$0xff]
        %v288 = vld [vmem:[%s260 + $0x8] sm:$0xff]
        %v289 = vld [vmem:[%s260 + $0x10] sm:$0xff]
        %v290 = vld [vmem:[%s260 + $0x18] sm:$0xff]
        %v291 = vld [vmem:[%s260 + $0x20] sm:$0xff]
        %v292 = vld [vmem:[%s260 + $0x28] sm:$0xff]
        %v293 = vld [vmem:[%s260 + $0x30] sm:$0xff]
        %v294 = vld [vmem:[%s260 + $0x38] sm:$0xff]
        %v295 = vld [vmem:[%s260 + $0x40] sm:$0xff]
        %v296 = vld [vmem:[%s260 + $0x48] sm:$0xff]
        %v297 = vld [vmem:[%s260 + $0x50] sm:$0xff]
        %v298 = vld [vmem:[%s260 + $0x58] sm:$0xff]
        %v299 = vld [vmem:[%s260 + $0x60] sm:$0xff]
        %v300 = vld [vmem:[%s260 + $0x68] sm:$0xff]
        %v301 = vld [vmem:[%s260 + $0x70] sm:$0xff]
        %v302 = vld [vmem:[%s260 + $0x78] sm:$0xff]
        %v303 = vld [vmem:[%s260 + $0x80] sm:$0xff]
        %v304 = vld [vmem:[%s260 + $0x88] sm:$0xff]
        %v305 = vld [vmem:[%s260 + $0x90] sm:$0xff]
        %v306 = vld [vmem:[%s260 + $0x98] sm:$0xff]
        %v307 = vld [vmem:[%s260 + $0xa0] sm:$0xff]
        %v308 = vld [vmem:[%s260 + $0xa8] sm:$0xff]
        %v309 = vld [vmem:[%s260 + $0xb0] sm:$0xff]
        %v310 = vld [vmem:[%s260 + $0xb8] sm:$0xff]
        %v311 = vld [vmem:[%s260 + $0xc0] sm:$0xff]
        %v312 = vld [vmem:[%s260 + $0xc8] sm:$0xff]
        %v313 = vld [vmem:[%s260 + $0xd0] sm:$0xff]
        %v314 = vld [vmem:[%s260 + $0xd8] sm:$0xff]
        %v315 = vld [vmem:[%s260 + $0xe0] sm:$0xff]
        %v316 = vld [vmem:[%s260 + $0xe8] sm:$0xff]
        %v317 = vld [vmem:[%s260 + $0xf0] sm:$0xff]
        %v318 = vld [vmem:[%s260 + $0xf8] sm:$0xff]
        %v319 = vld [vmem:[%s260 + $0x100] sm:$0xff]
        %v320 = vld [vmem:[%s260 + $0x108] sm:$0xff]
        %v321 = vld [vmem:[%s260 + $0x110] sm:$0xff]
        %v322 = vld [vmem:[%s260 + $0x118] sm:$0xff]
        %v325 = vunpack.c.l.b16 %v285
        %v326 = vunpack.c.h.b16 %v285
        %v327 = vunpack.c.l.b16 %v286
        %v328 = vunpack.c.h.b16 %v286
        %v329 = vpack.c.b16 %v327, %v325
        %v330 = vpack.c.b16 %v328, %v326
        %v368 = vunpack.c.l.b16 %v287
        %v369 = vunpack.c.h.b16 %v287
        %v370 = vunpack.c.l.b16 %v288
        %v371 = vunpack.c.h.b16 %v288
        %v372 = vunpack.c.l.b16 %v289
        %v373 = vunpack.c.h.b16 %v289
        %v374 = vunpack.c.l.b16 %v290
        %v375 = vunpack.c.h.b16 %v290
        %v376 = vunpack.c.l.b16 %v291
        %v377 = vunpack.c.h.b16 %v291
        %v378 = vunpack.c.l.b16 %v292
        %v379 = vunpack.c.h.b16 %v292
        %v380 = vunpack.c.l.b16 %v293
        %v381 = vunpack.c.h.b16 %v293
        %v382 = vunpack.c.l.b16 %v294
        %v383 = vunpack.c.h.b16 %v294
        %v384 = vunpack.c.l.b16 %v295
        %v385 = vunpack.c.h.b16 %v295
        %v386 = vunpack.c.l.b16 %v296
        %v387 = vunpack.c.h.b16 %v296
        %v388 = vunpack.c.l.b16 %v297
        %v389 = vunpack.c.h.b16 %v297
        %v390 = vunpack.c.l.b16 %v298
        %v391 = vunpack.c.h.b16 %v298
        %v392 = vunpack.c.l.b16 %v299
        %v393 = vunpack.c.h.b16 %v299
        %v394 = vunpack.c.l.b16 %v300
        %v395 = vunpack.c.h.b16 %v300
        %v396 = vunpack.c.l.b16 %v301
        %v397 = vunpack.c.h.b16 %v301
        %v398 = vunpack.c.l.b16 %v302
        %v399 = vunpack.c.h.b16 %v302
        %v400 = vunpack.c.l.b16 %v303
        %v401 = vunpack.c.h.b16 %v303
        %v402 = vunpack.c.l.b16 %v304
        %v403 = vunpack.c.h.b16 %v304
        %v404 = vunpack.c.l.b16 %v305
        %v405 = vunpack.c.h.b16 %v305
        %v406 = vunpack.c.l.b16 %v306
        %v407 = vunpack.c.h.b16 %v306
        %v408 = vunpack.c.l.b16 %v307
        %v409 = vunpack.c.h.b16 %v307
        %v410 = vunpack.c.l.b16 %v308
        %v411 = vunpack.c.h.b16 %v308
        %v412 = vunpack.c.l.b16 %v309
        %v413 = vunpack.c.h.b16 %v309
        %v414 = vunpack.c.l.b16 %v310
        %v415 = vunpack.c.h.b16 %v310
        %v416 = vunpack.c.l.b16 %v311
        %v417 = vunpack.c.h.b16 %v311
        %v418 = vunpack.c.l.b16 %v312
        %v419 = vunpack.c.h.b16 %v312
        %v420 = vunpack.c.l.b16 %v313
        %v421 = vunpack.c.h.b16 %v313
        %v422 = vunpack.c.l.b16 %v314
        %v423 = vunpack.c.h.b16 %v314
        %v424 = vunpack.c.l.b16 %v315
        %v425 = vunpack.c.h.b16 %v315
        %v426 = vunpack.c.l.b16 %v316
        %v427 = vunpack.c.h.b16 %v316
        %v428 = vunpack.c.l.b16 %v317
        %v429 = vunpack.c.h.b16 %v317
        %v430 = vunpack.c.l.b16 %v318
        %v431 = vunpack.c.h.b16 %v318
        %v432 = vunpack.c.l.b16 %v319
        %v433 = vunpack.c.h.b16 %v319
        %v434 = vunpack.c.l.b16 %v320
        %v435 = vunpack.c.h.b16 %v320
        %v436 = vunpack.c.l.b16 %v321
        %v437 = vunpack.c.h.b16 %v321
        %v438 = vunpack.c.l.b16 %v322
        %v439 = vunpack.c.h.b16 %v322
        %v440 = vpack.c.b16 %v372, %v368
        %v441 = vpack.c.b16 %v373, %v369
        %v442 = vpack.c.b16 %v374, %v370
        %v443 = vpack.c.b16 %v375, %v371
        %v444 = vpack.c.b16 %v380, %v376
        %v445 = vpack.c.b16 %v381, %v377
        %v446 = vpack.c.b16 %v382, %v378
        %v447 = vpack.c.b16 %v383, %v379
        %v448 = vpack.c.b16 %v388, %v384
        %v449 = vpack.c.b16 %v389, %v385
        %v450 = vpack.c.b16 %v390, %v386
        %v451 = vpack.c.b16 %v391, %v387
        %v452 = vpack.c.b16 %v396, %v392
        %v453 = vpack.c.b16 %v397, %v393
        %v454 = vpack.c.b16 %v398, %v394
        %v455 = vpack.c.b16 %v399, %v395
        %v456 = vpack.c.b16 %v404, %v400
        %v457 = vpack.c.b16 %v405, %v401
        %v458 = vpack.c.b16 %v406, %v402
        %v459 = vpack.c.b16 %v407, %v403
        %v460 = vpack.c.b16 %v412, %v408
        %v461 = vpack.c.b16 %v413, %v409
        %v462 = vpack.c.b16 %v414, %v410
        %v463 = vpack.c.b16 %v415, %v411
        %v464 = vpack.c.b16 %v420, %v416
        %v465 = vpack.c.b16 %v421, %v417
        %v466 = vpack.c.b16 %v422, %v418
        %v467 = vpack.c.b16 %v423, %v419
        %v468 = vpack.c.b16 %v428, %v424
        %v469 = vpack.c.b16 %v429, %v425
        %v470 = vpack.c.b16 %v430, %v426
        %v471 = vpack.c.b16 %v431, %v427
        %v472 = vpack.c.b16 %v436, %v432
        %v473 = vpack.c.b16 %v437, %v433
        %v474 = vpack.c.b16 %v438, %v434
        %v475 = vpack.c.b16 %v439, %v435
        %vm512 = vcmask 130048
        %v514 = vsel %vm512, %v330, 0
        %516 = vmatprep.subr.bf16.mxu0 %v441
        %517 = vmatpush1.bf16.msra.mxu0 %v440
        %518 = vmatprep.subr.bf16.mxu0 %v445
        %519 = vmatpush1.bf16.msra.mxu0 %v444
        %520 = vmatprep.subr.bf16.mxu0 %v449
        %521 = vmatpush1.bf16.msra.mxu0 %v448
        %522 = vmatprep.subr.bf16.mxu0 %v453
        %523 = vmatpush1.bf16.msra.mxu0 %v452
        %524 = vmatprep.subr.bf16.mxu0 %v457
        %525 = vmatpush1.bf16.msra.mxu0 %v456
        %526 = vmatprep.subr.bf16.mxu0 %v461
        %527 = vmatpush1.bf16.msra.mxu0 %v460
        %528 = vmatprep.subr.bf16.mxu0 %v465
        %529 = vmatpush1.bf16.msra.mxu0 %v464
        %530 = vmatprep.subr.bf16.mxu0 %v469
        %531 = vmatpush1.bf16.msra.mxu0 %v468
        %532 = vmatprep.subr.bf16.mxu0 %v473
        %533 = vmatpush1.bf16.msra.mxu0 %v472
        %534 = vmatprep.subr.bf16.mxu0 0
        %535 = vmatpush1.bf16.msra.mxu0 0
        %536 = vmatprep.subr.bf16.mxu0 0
        %537 = vmatpush1.bf16.msra.mxu0 0
        %538 = vmatprep.subr.bf16.mxu0 0
        %539 = vmatpush1.bf16.msra.mxu0 0
        %540 = vmatprep.subr.bf16.mxu0 0
        %541 = vmatpush1.bf16.msra.mxu0 0
        %542 = vmatprep.subr.bf16.mxu0 0
        %543 = vmatpush1.bf16.msra.mxu0 0
        %544 = vmatprep.subr.bf16.mxu0 0
        %545 = vmatpush1.bf16.msra.mxu0 0
        %546 = vmatprep.subr.bf16.mxu0 0
        %547 = vmatpush1.bf16.msra.mxu0 0
        %548 = vmatprep.mubr.bf16.mxu0 %v514
        %549 = vmatmul.mubr.bf16.gmra.mrb[0].mxu0 %v329
        %v550 = vpop.f32.mrb[0].mxu0
        %v551 = vadd.f32 0.0, %v550
        %v552 = vpop.f32.mrb[0].mxu0
        %v553 = vadd.f32 0.0, %v552
        %v554 = vpop.f32.mrb[0].mxu0
        %v555 = vadd.f32 0.0, %v554
        %v556 = vpop.f32.mrb[0].mxu0
        %v557 = vadd.f32 0.0, %v556
        %558 = vdwg.mxu0
        %559 = vmatprep.subr.bf16.mxu0 %v443
        %560 = vmatpush1.bf16.msra.mxu0 %v442
        %561 = vmatprep.subr.bf16.mxu0 %v447
        %562 = vmatpush1.bf16.msra.mxu0 %v446
        %563 = vmatprep.subr.bf16.mxu0 %v451
        %564 = vmatpush1.bf16.msra.mxu0 %v450
        %565 = vmatprep.subr.bf16.mxu0 %v455
        %566 = vmatpush1.bf16.msra.mxu0 %v454
        %567 = vmatprep.subr.bf16.mxu0 %v459
        %568 = vmatpush1.bf16.msra.mxu0 %v458
        %569 = vmatprep.subr.bf16.mxu0 %v463
        %570 = vmatpush1.bf16.msra.mxu0 %v462
        %571 = vmatprep.subr.bf16.mxu0 %v467
        %572 = vmatpush1.bf16.msra.mxu0 %v466
        %573 = vmatprep.subr.bf16.mxu0 %v471
        %574 = vmatpush1.bf16.msra.mxu0 %v470
        %575 = vmatprep.subr.bf16.mxu0 %v475
        %576 = vmatpush1.bf16.msra.mxu0 %v474
        %577 = vmatprep.subr.bf16.mxu0 0
        %578 = vmatpush1.bf16.msra.mxu0 0
        %579 = vmatprep.subr.bf16.mxu0 0
        %580 = vmatpush1.bf16.msra.mxu0 0
        %581 = vmatprep.subr.bf16.mxu0 0
        %582 = vmatpush1.bf16.msra.mxu0 0
        %583 = vmatprep.subr.bf16.mxu0 0
        %584 = vmatpush1.bf16.msra.mxu0 0
        %585 = vmatprep.subr.bf16.mxu0 0
        %586 = vmatpush1.bf16.msra.mxu0 0
        %587 = vmatprep.subr.bf16.mxu0 0
        %588 = vmatpush1.bf16.msra.mxu0 0
        %589 = vmatprep.subr.bf16.mxu0 0
        %590 = vmatpush1.bf16.msra.mxu0 0
        %591 = vmatprep.mubr.bf16.mxu0 %v514
        %592 = vmatmul.mubr.bf16.gmra.mrb[0].mxu0 %v329
        %v593 = vpop.f32.mrb[0].mxu0
        %v594 = vadd.f32 0.0, %v593
        %v595 = vpop.f32.mrb[0].mxu0
        %v596 = vadd.f32 0.0, %v595
        %v597 = vpop.f32.mrb[0].mxu0
        %v598 = vadd.f32 0.0, %v597
        %v599 = vpop.f32.mrb[0].mxu0
        %v600 = vadd.f32 0.0, %v599
        %601 = vdwg.mxu0
        %v602 = vld [vmem:[%s2] sm:$0xff]
        %v603 = vld [vmem:[%s2 + $0x8] sm:$0xff]
        %605 = vset.pattern.permute.xlu0 0
        %606 = vperm.xlu0 %605, %v602
        %v607 = vpop.permute.xlu0 %606
        %610 = vset.pattern.permute.xlu0 0
        %611 = vperm.xlu0 %610, %v603
        %v612 = vpop.permute.xlu0 %611
        %v614 = vmul.f32 %v551, %v607
        %v615 = vmul.f32 %v553, %v607
        %v616 = vmul.f32 %v594, %v607
        %v617 = vmul.f32 %v596, %v607
        %v618 = vmul.f32 %v555, %v612
        %v619 = vmul.f32 %v557, %v612
        %v620 = vmul.f32 %v598, %v612
        %v621 = vmul.f32 %v600, %v612
        %v622 = vld [vmem:[%s3] sm:$0xff]
        %v623 = vld [vmem:[%s3 + $0x8] sm:$0xff]
        %625 = vset.pattern.permute.xlu0 0
        %626 = vperm.xlu0 %625, %v622
        %v627 = vpop.permute.xlu0 %626
        %630 = vset.pattern.permute.xlu0 0
        %631 = vperm.xlu0 %630, %v623
        %v632 = vpop.permute.xlu0 %631
        %v634 = vadd.f32 %v614, %v627
        %v635 = vadd.f32 %v615, %v627
        %v636 = vadd.f32 %v616, %v627
        %v637 = vadd.f32 %v617, %v627
        %v638 = vadd.f32 %v618, %v632
        %v639 = vadd.f32 %v619, %v632
        %v640 = vadd.f32 %v620, %v632
        %v641 = vadd.f32 %v621, %v632
        %v642 = vmax.f32 %v634, 0.0
        %v643 = vmax.f32 %v635, 0.0
        %v644 = vmax.f32 %v636, 0.0
        %v645 = vmax.f32 %v637, 0.0
        %v646 = vmax.f32 %v638, 0.0
        %v647 = vmax.f32 %v639, 0.0
        %v648 = vmax.f32 %v640, 0.0
        %v649 = vmax.f32 %v641, 0.0
        %v650 = vpack.c.bf16 %v646, %v642
        %v651 = vpack.c.bf16 %v647, %v643
        %v652 = vpack.c.bf16 %v648, %v644
        %v653 = vpack.c.bf16 %v649, %v645
        %v658 = vunpack.c.l.b16 %v650
        %v659 = vunpack.c.l.b16 %v651
        %v660 = vunpack.c.l.b16 %v652
        %v661 = vunpack.c.l.b16 %v653
        %v662 = vunpack.c.h.b16 %v650
        %v663 = vunpack.c.h.b16 %v651
        %v664 = vunpack.c.h.b16 %v652
        %v665 = vunpack.c.h.b16 %v653
        %v666 = vpack.c.b16 %v659, %v658
        %v667 = vpack.c.b16 %v661, %v660
        %v668 = vpack.c.b16 %v663, %v662
        %v669 = vpack.c.b16 %v665, %v664
        %674 = vst [vmem:[%s281] sm:$0xff] %v666
        %675 = vst [vmem:[%s281 + $0x8] sm:$0xff] %v667
        %676 = vst [vmem:[%s281 + $0x10] sm:$0xff] %v668
        %677 = vst [vmem:[%s281 + $0x18] sm:$0xff] %v669
        %s678 = sand.u32 %s112, 1
        %s679 = sand.u32 %s112, 1
        %s680 = smul.addr %s679, 32
        %s681 = scalar_lea.vmem [#allocation3], %s680
        // Predicated region
        $region60: #{_lambda_.9} parent=54 // pred_check
          %p682 = pneg %p122
        $region61: #{_lambda_.9} parent=54 // pred_check_branch
          %684 = sbr.rel (%p682) target = $region63
        $region62: #{_lambda_.9} parent=54 // pred_region
          %s685 = smul.u32 4, %s15
          %s686 = smul.addr %s685, 4
          %s687 = scalar_lea.vmem %s4, %s686
          // Predicated region
          $region64: #{_lambda_.9} parent=62 // pred_check
            _
          $region65: #{_lambda_.9} parent=62 // pred_check_branch
            %689 = sbr.rel (0) target = $region67
          $region66: #{_lambda_.9} parent=62 // pred_region
            // Predicated region
            $region68: #{_lambda_.9} parent=66 // pred_check
              _
            $region69: #{_lambda_.9} parent=66 // pred_check_branch
              %691 = sbr.rel (0) target = $region71
            $region70: #{_lambda_.9} parent=66 // pred_region
              loop: start=0, step=1, limit=1
              $region72: #{_lambda_.9} parent=70 // loop_pre_header
                _
              $region73: #{_lambda_.9} parent=70 // loop_header
                %s693 = sphi 0, %s697
                %p694 = scmp.ge.s32.totalorder %s693, 1
                %s698 = sphi %s681, %s681
                %s699 = sphi %s687, %s687
              $region74: #{_lambda_.9} parent=70 // loop_header_branch
                %696 = sbr.rel (%p694) target = $region78
              $region75: #{_lambda_.9} parent=70 // loop_body
                %v700 = vld [vmem:[%s698] sm:$0xff]
                %701 = vst [vmem:[%s699] sm:$0xff] %v700
                %v702 = vld [vmem:[%s698 + $0x8] sm:$0xff]
                %703 = vst [vmem:[%s699 + $0x8] sm:$0xff] %v702
                %v704 = vld [vmem:[%s698 + $0x10] sm:$0xff]
                %705 = vst [vmem:[%s699 + $0x40] sm:$0xff] %v704
                %v706 = vld [vmem:[%s698 + $0x18] sm:$0xff]
                %707 = vst [vmem:[%s699 + $0x48] sm:$0xff] %v706
              $region76: #{_lambda_.9} parent=70 // loop_footer
                %s697 = sadd.s32 1, %s693
              $region77: #{_lambda_.9} parent=70 // loop_footer_branch
                %692 = sbr.rel target = $region73
              $region78: #{_lambda_.9} parent=70 // loop_exit
                _
            $region71: #{_lambda_.9} parent=66 // pred_fallthru
              _
            // Predicated region
            $region79: #{_lambda_.9} parent=66 // pred_check
              _
            $region80: #{_lambda_.9} parent=66 // pred_check_branch
              %709 = sbr.rel target = $region82
            $region81: #{_lambda_.9} parent=66 // pred_region
              _
            $region82: #{_lambda_.9} parent=66 // pred_fallthru
              _
          $region67: #{_lambda_.9} parent=62 // pred_fallthru
            _
          %710 = vnop
        $region63: #{_lambda_.9} parent=54 // pred_fallthru
          _
      $region55: #{_lambda_.9} parent=5 // pred_fallthru
        _
      %p711 = scmp.le.s32.totalorder 2, %s10
      // Predicated region
      $region83: #{_lambda_.9} parent=5 // pred_check
        %p712 = pneg %p711
      $region84: #{_lambda_.9} parent=5 // pred_check_branch
        %714 = sbr.rel (%p712) target = $region86
      $region85: #{_lambda_.9} parent=5 // pred_region
        %s715 = ssub.s32 %s10, 2
        // Predicated region
        $region87: #{_lambda_.9} parent=85 // pred_check
          %p716 = pneg %p128
        $region88: #{_lambda_.9} parent=85 // pred_check_branch
          %718 = sbr.rel (%p716) target = $region90
        $region89: #{_lambda_.9} parent=85 // pred_region
          %s719 = sand.u32 %s113, 1
          %s720 = sand.u32 %s113, 1
          %s721 = smul.addr %s720, 32
          %s722 = scalar_lea.vmem [#allocation3], %s721
        $region90: #{_lambda_.9} parent=85 // pred_fallthru
          _
      $region86: #{_lambda_.9} parent=5 // pred_fallthru
        _
    $region6: #{_lambda_.9} parent=1 // loop_footer
      %s14 = sadd.s32 1, %s10
    $region7: #{_lambda_.9} parent=1 // loop_footer_branch
      %9 = sbr.rel target = $region3
    $region8: #{_lambda_.9} parent=1 // loop_exit
      _

// kernel: _lambda_.11
$region0: #{_lambda_.11}
  #allocation0 [shape = 'u32[]', space=smem, size = 0x4, offset = 0x4, fixed_abs, tag = 'smem constant byte address 0x4 - core index']
  #allocation1 [shape = 'u32[144,128]{1,0:T(1,128)}', space=vmem, size = 0x12000, scoped, tag = 'internal scratch']
  %s0 = inlined_call_operand.vmem [shape: bf16[144,512], index: 0, kind: input, shape index: {}]
  %s1 = inlined_call_operand.vmem [shape: bf16[32,144], index: 1, kind: input, shape index: {}]
  %s2 = inlined_call_operand.vmem [shape: f32[32,1], index: 2, kind: input, shape index: {}]
  %s3 = inlined_call_operand.vmem [shape: f32[32,1], index: 3, kind: input, shape index: {}]
  %s4 = inlined_call_operand.vmem [shape: bf16[32,512], index: 4, kind: output, shape index: {}]
  %s5 = sld [smem:[#allocation0]]
  $region26: #{_lambda_.11} parent=0
    _
  %s7 = ssub.s32 1, %s5
  %s8 = scalar_select 0, %s7, %s5
  // Predicated region
  $region2: #{_lambda_.11} parent=0 // pred_check
    _
  $region3: #{_lambda_.11} parent=0 // pred_check_branch
    %10 = sbr.rel (0) target = $region5
  $region4: #{_lambda_.11} parent=0 // pred_region
    _
  $region5: #{_lambda_.11} parent=0 // pred_fallthru
    _
  // Predicated region
  $region6: #{_lambda_.11} parent=0 // pred_check
    _
  $region7: #{_lambda_.11} parent=0 // pred_check_branch
    %12 = sbr.rel (0) target = $region9
  $region8: #{_lambda_.11} parent=0 // pred_region
    _
  $region9: #{_lambda_.11} parent=0 // pred_fallthru
    _
  // Predicated region
  $region10: #{_lambda_.11} parent=0 // pred_check
    _
  $region11: #{_lambda_.11} parent=0 // pred_check_branch
    %14 = sbr.rel (0) target = $region13
  $region12: #{_lambda_.11} parent=0 // pred_region
    _
  $region13: #{_lambda_.11} parent=0 // pred_fallthru
    _
  // Predicated region
  $region14: #{_lambda_.11} parent=0 // pred_check
    _
  $region15: #{_lambda_.11} parent=0 // pred_check_branch
    %16 = sbr.rel (0) target = $region17
  $region16: #{_lambda_.11} parent=0 // pred_region
    _
  $region17: #{_lambda_.11} parent=0 // pred_fallthru
    _
  %v18 = vld [vmem:[%s1] sm:$0xff]
  %v19 = vld [vmem:[%s1 + $0x8] sm:$0xff]
  %v20 = vld [vmem:[%s1 + $0x10] sm:$0xff]
  %v21 = vld [vmem:[%s1 + $0x18] sm:$0xff]
  %v22 = vld [vmem:[%s0] sm:$0xff]
  %v23 = vld [vmem:[%s0 + $0x8] sm:$0xff]
  %v24 = vld [vmem:[%s0 + $0x10] sm:$0xff]
  %v25 = vld [vmem:[%s0 + $0x18] sm:$0xff]
  %v26 = vld [vmem:[%s0 + $0x20] sm:$0xff]
  %v27 = vld [vmem:[%s0 + $0x28] sm:$0xff]
  %v28 = vld [vmem:[%s0 + $0x30] sm:$0xff]
  %v29 = vld [vmem:[%s0 + $0x38] sm:$0xff]
  %v30 = vld [vmem:[%s0 + $0x40] sm:$0xff]
  %v31 = vld [vmem:[%s0 + $0x48] sm:$0xff]
  %v32 = vld [vmem:[%s0 + $0x50] sm:$0xff]
  %v33 = vld [vmem:[%s0 + $0x58] sm:$0xff]
  %v34 = vld [vmem:[%s0 + $0x60] sm:$0xff]
  %v35 = vld [vmem:[%s0 + $0x68] sm:$0xff]
  %v36 = vld [vmem:[%s0 + $0x70] sm:$0xff]
  %v37 = vld [vmem:[%s0 + $0x78] sm:$0xff]
  %v38 = vld [vmem:[%s0 + $0x80] sm:$0xff]
  %v39 = vld [vmem:[%s0 + $0x88] sm:$0xff]
  %v40 = vld [vmem:[%s0 + $0x90] sm:$0xff]
  %v41 = vld [vmem:[%s0 + $0x98] sm:$0xff]
  %v42 = vld [vmem:[%s0 + $0xa0] sm:$0xff]
  %v43 = vld [vmem:[%s0 + $0xa8] sm:$0xff]
  %v44 = vld [vmem:[%s0 + $0xb0] sm:$0xff]
  %v45 = vld [vmem:[%s0 + $0xb8] sm:$0xff]
  %v46 = vld [vmem:[%s0 + $0xc0] sm:$0xff]
  %v47 = vld [vmem:[%s0 + $0xc8] sm:$0xff]
  %v48 = vld [vmem:[%s0 + $0xd0] sm:$0xff]
  %v49 = vld [vmem:[%s0 + $0xd8] sm:$0xff]
  %v50 = vld [vmem:[%s0 + $0xe0] sm:$0xff]
  %v51 = vld [vmem:[%s0 + $0xe8] sm:$0xff]
  %v52 = vld [vmem:[%s0 + $0xf0] sm:$0xff]
  %v53 = vld [vmem:[%s0 + $0xf8] sm:$0xff]
  %v54 = vld [vmem:[%s0 + $0x100] sm:$0xff]
  %v55 = vld [vmem:[%s0 + $0x108] sm:$0xff]
  %v56 = vld [vmem:[%s0 + $0x110] sm:$0xff]
  %v57 = vld [vmem:[%s0 + $0x118] sm:$0xff]
  %v62 = vunpack.c.l.b16 %v18
  %v63 = vunpack.c.h.b16 %v18
  %v64 = vunpack.c.l.b16 %v19
  %v65 = vunpack.c.h.b16 %v19
  %v66 = vunpack.c.l.b16 %v20
  %v67 = vunpack.c.h.b16 %v20
  %v68 = vunpack.c.l.b16 %v21
  %v69 = vunpack.c.h.b16 %v21
  %v70 = vpack.c.b16 %v64, %v62
  %v71 = vpack.c.b16 %v65, %v63
  %v72 = vpack.c.b16 %v68, %v66
  %v73 = vpack.c.b16 %v69, %v67
  %v112 = vunpack.c.l.b16 %v22
  %v113 = vunpack.c.h.b16 %v22
  %v114 = vunpack.c.l.b16 %v23
  %v115 = vunpack.c.h.b16 %v23
  %v116 = vunpack.c.l.b16 %v24
  %v117 = vunpack.c.h.b16 %v24
  %v118 = vunpack.c.l.b16 %v25
  %v119 = vunpack.c.h.b16 %v25
  %v120 = vunpack.c.l.b16 %v26
  %v121 = vunpack.c.h.b16 %v26
  %v122 = vunpack.c.l.b16 %v27
  %v123 = vunpack.c.h.b16 %v27
  %v124 = vunpack.c.l.b16 %v28
  %v125 = vunpack.c.h.b16 %v28
  %v126 = vunpack.c.l.b16 %v29
  %v127 = vunpack.c.h.b16 %v29
  %v128 = vunpack.c.l.b16 %v30
  %v129 = vunpack.c.h.b16 %v30
  %v130 = vunpack.c.l.b16 %v31
  %v131 = vunpack.c.h.b16 %v31
  %v132 = vunpack.c.l.b16 %v32
  %v133 = vunpack.c.h.b16 %v32
  %v134 = vunpack.c.l.b16 %v33
  %v135 = vunpack.c.h.b16 %v33
  %v136 = vunpack.c.l.b16 %v34
  %v137 = vunpack.c.h.b16 %v34
  %v138 = vunpack.c.l.b16 %v35
  %v139 = vunpack.c.h.b16 %v35
  %v140 = vunpack.c.l.b16 %v36
  %v141 = vunpack.c.h.b16 %v36
  %v142 = vunpack.c.l.b16 %v37
  %v143 = vunpack.c.h.b16 %v37
  %v144 = vunpack.c.l.b16 %v38
  %v145 = vunpack.c.h.b16 %v38
  %v146 = vunpack.c.l.b16 %v39
  %v147 = vunpack.c.h.b16 %v39
  %v148 = vunpack.c.l.b16 %v40
  %v149 = vunpack.c.h.b16 %v40
  %v150 = vunpack.c.l.b16 %v41
  %v151 = vunpack.c.h.b16 %v41
  %v152 = vunpack.c.l.b16 %v42
  %v153 = vunpack.c.h.b16 %v42
  %v154 = vunpack.c.l.b16 %v43
  %v155 = vunpack.c.h.b16 %v43
  %v156 = vunpack.c.l.b16 %v44
  %v157 = vunpack.c.h.b16 %v44
  %v158 = vunpack.c.l.b16 %v45
  %v159 = vunpack.c.h.b16 %v45
  %v160 = vunpack.c.l.b16 %v46
  %v161 = vunpack.c.h.b16 %v46
  %v162 = vunpack.c.l.b16 %v47
  %v163 = vunpack.c.h.b16 %v47
  %v164 = vunpack.c.l.b16 %v48
  %v165 = vunpack.c.h.b16 %v48
  %v166 = vunpack.c.l.b16 %v49
  %v167 = vunpack.c.h.b16 %v49
  %v168 = vunpack.c.l.b16 %v50
  %v169 = vunpack.c.h.b16 %v50
  %v170 = vunpack.c.l.b16 %v51
  %v171 = vunpack.c.h.b16 %v51
  %v172 = vunpack.c.l.b16 %v52
  %v173 = vunpack.c.h.b16 %v52
  %v174 = vunpack.c.l.b16 %v53
  %v175 = vunpack.c.h.b16 %v53
  %v176 = vunpack.c.l.b16 %v54
  %v177 = vunpack.c.h.b16 %v54
  %v178 = vunpack.c.l.b16 %v55
  %v179 = vunpack.c.h.b16 %v55
  %v180 = vunpack.c.l.b16 %v56
  %v181 = vunpack.c.h.b16 %v56
  %v182 = vunpack.c.l.b16 %v57
  %v183 = vunpack.c.h.b16 %v57
  %v184 = vpack.c.b16 %v116, %v112
  %v185 = vpack.c.b16 %v117, %v113
  %v186 = vpack.c.b16 %v118, %v114
  %v187 = vpack.c.b16 %v119, %v115
  %v188 = vpack.c.b16 %v124, %v120
  %v189 = vpack.c.b16 %v125, %v121
  %v190 = vpack.c.b16 %v126, %v122
  %v191 = vpack.c.b16 %v127, %v123
  %v192 = vpack.c.b16 %v132, %v128
  %v193 = vpack.c.b16 %v133, %v129
  %v194 = vpack.c.b16 %v134, %v130
  %v195 = vpack.c.b16 %v135, %v131
  %v196 = vpack.c.b16 %v140, %v136
  %v197 = vpack.c.b16 %v141, %v137
  %v198 = vpack.c.b16 %v142, %v138
  %v199 = vpack.c.b16 %v143, %v139
  %v200 = vpack.c.b16 %v148, %v144
  %v201 = vpack.c.b16 %v149, %v145
  %v202 = vpack.c.b16 %v150, %v146
  %v203 = vpack.c.b16 %v151, %v147
  %v204 = vpack.c.b16 %v156, %v152
  %v205 = vpack.c.b16 %v157, %v153
  %v206 = vpack.c.b16 %v158, %v154
  %v207 = vpack.c.b16 %v159, %v155
  %v208 = vpack.c.b16 %v164, %v160
  %v209 = vpack.c.b16 %v165, %v161
  %v210 = vpack.c.b16 %v166, %v162
  %v211 = vpack.c.b16 %v167, %v163
  %v212 = vpack.c.b16 %v172, %v168
  %v213 = vpack.c.b16 %v173, %v169
  %v214 = vpack.c.b16 %v174, %v170
  %v215 = vpack.c.b16 %v175, %v171
  %v216 = vpack.c.b16 %v180, %v176
  %v217 = vpack.c.b16 %v181, %v177
  %v218 = vpack.c.b16 %v182, %v178
  %v219 = vpack.c.b16 %v183, %v179
  %vm256 = vcmask 130048
  %v258 = vsel %vm256, %v71, 0
  %v261 = vsel %vm256, %v73, 0
  %263 = vmatprep.subr.bf16.mxu0 %v185
  %264 = vmatpush1.bf16.msra.mxu0 %v184
  %265 = vmatprep.subr.bf16.mxu0 %v189
  %266 = vmatpush1.bf16.msra.mxu0 %v188
  %267 = vmatprep.subr.bf16.mxu0 %v193
  %268 = vmatpush1.bf16.msra.mxu0 %v192
  %269 = vmatprep.subr.bf16.mxu0 %v197
  %270 = vmatpush1.bf16.msra.mxu0 %v196
  %271 = vmatprep.subr.bf16.mxu0 %v201
  %272 = vmatpush1.bf16.msra.mxu0 %v200
  %273 = vmatprep.subr.bf16.mxu0 %v205
  %274 = vmatpush1.bf16.msra.mxu0 %v204
  %275 = vmatprep.subr.bf16.mxu0 %v209
  %276 = vmatpush1.bf16.msra.mxu0 %v208
  %277 = vmatprep.subr.bf16.mxu0 %v213
  %278 = vmatpush1.bf16.msra.mxu0 %v212
  %279 = vmatprep.subr.bf16.mxu0 %v217
  %280 = vmatpush1.bf16.msra.mxu0 %v216
  %281 = vmatprep.subr.bf16.mxu0 0
  %282 = vmatpush1.bf16.msra.mxu0 0
  %283 = vmatprep.subr.bf16.mxu0 0
  %284 = vmatpush1.bf16.msra.mxu0 0
  %285 = vmatprep.subr.bf16.mxu0 0
  %286 = vmatpush1.bf16.msra.mxu0 0
  %287 = vmatprep.subr.bf16.mxu0 0
  %288 = vmatpush1.bf16.msra.mxu0 0
  %289 = vmatprep.subr.bf16.mxu0 0
  %290 = vmatpush1.bf16.msra.mxu0 0
  %291 = vmatprep.subr.bf16.mxu0 0
  %292 = vmatpush1.bf16.msra.mxu0 0
  %293 = vmatprep.subr.bf16.mxu0 0
  %294 = vmatpush1.bf16.msra.mxu0 0
  %295 = vmatprep.mubr.bf16.mxu0 %v258
  %296 = vmatmul.mubr.bf16.gmra.mrb[0].mxu0 %v70
  %v297 = vpop.f32.mrb[0].mxu0
  %v298 = vadd.f32 0.0, %v297
  %v299 = vpop.f32.mrb[0].mxu0
  %v300 = vadd.f32 0.0, %v299
  %v301 = vpop.f32.mrb[0].mxu0
  %v302 = vadd.f32 0.0, %v301
  %v303 = vpop.f32.mrb[0].mxu0
  %v304 = vadd.f32 0.0, %v303
  %305 = vmatprep.mubr.bf16.mxu0 %v261
  %306 = vmatmul.mubr.bf16.gmra.mrb[0].mxu0 %v72
  %v307 = vpop.f32.mrb[0].mxu0
  %v308 = vadd.f32 0.0, %v307
  %v309 = vpop.f32.mrb[0].mxu0
  %v310 = vadd.f32 0.0, %v309
  %v311 = vpop.f32.mrb[0].mxu0
  %v312 = vadd.f32 0.0, %v311
  %v313 = vpop.f32.mrb[0].mxu0
  %v314 = vadd.f32 0.0, %v313
  %315 = vdwg.mxu0
  %316 = vmatprep.subr.bf16.mxu0 %v187
  %317 = vmatpush1.bf16.msra.mxu0 %v186
  %318 = vmatprep.subr.bf16.mxu0 %v191
  %319 = vmatpush1.bf16.msra.mxu0 %v190
  %320 = vmatprep.subr.bf16.mxu0 %v195
  %321 = vmatpush1.bf16.msra.mxu0 %v194
  %322 = vmatprep.subr.bf16.mxu0 %v199
  %323 = vmatpush1.bf16.msra.mxu0 %v198
  %324 = vmatprep.subr.bf16.mxu0 %v203
  %325 = vmatpush1.bf16.msra.mxu0 %v202
  %326 = vmatprep.subr.bf16.mxu0 %v207
  %327 = vmatpush1.bf16.msra.mxu0 %v206
  %328 = vmatprep.subr.bf16.mxu0 %v211
  %329 = vmatpush1.bf16.msra.mxu0 %v210
  %330 = vmatprep.subr.bf16.mxu0 %v215
  %331 = vmatpush1.bf16.msra.mxu0 %v214
  %332 = vmatprep.subr.bf16.mxu0 %v219
  %333 = vmatpush1.bf16.msra.mxu0 %v218
  %334 = vmatprep.subr.bf16.mxu0 0
  %335 = vmatpush1.bf16.msra.mxu0 0
  %336 = vmatprep.subr.bf16.mxu0 0
  %337 = vmatpush1.bf16.msra.mxu0 0
  %338 = vmatprep.subr.bf16.mxu0 0
  %339 = vmatpush1.bf16.msra.mxu0 0
  %340 = vmatprep.subr.bf16.mxu0 0
  %341 = vmatpush1.bf16.msra.mxu0 0
  %342 = vmatprep.subr.bf16.mxu0 0
  %343 = vmatpush1.bf16.msra.mxu0 0
  %344 = vmatprep.subr.bf16.mxu0 0
  %345 = vmatpush1.bf16.msra.mxu0 0
  %346 = vmatprep.subr.bf16.mxu0 0
  %347 = vmatpush1.bf16.msra.mxu0 0
  %348 = vmatprep.mubr.bf16.mxu0 %v258
  %349 = vmatmul.mubr.bf16.gmra.mrb[0].mxu0 %v70
  %v350 = vpop.f32.mrb[0].mxu0
  %v351 = vadd.f32 0.0, %v350
  %v352 = vpop.f32.mrb[0].mxu0
  %v353 = vadd.f32 0.0, %v352
  %v354 = vpop.f32.mrb[0].mxu0
  %v355 = vadd.f32 0.0, %v354
  %v356 = vpop.f32.mrb[0].mxu0
  %v357 = vadd.f32 0.0, %v356
  %358 = vmatprep.mubr.bf16.mxu0 %v261
  %359 = vmatmul.mubr.bf16.gmra.mrb[0].mxu0 %v72
  %v360 = vpop.f32.mrb[0].mxu0
  %v361 = vadd.f32 0.0, %v360
  %v362 = vpop.f32.mrb[0].mxu0
  %v363 = vadd.f32 0.0, %v362
  %v364 = vpop.f32.mrb[0].mxu0
  %v365 = vadd.f32 0.0, %v364
  %v366 = vpop.f32.mrb[0].mxu0
  %v367 = vadd.f32 0.0, %v366
  %368 = vdwg.mxu0
  %v369 = vld [vmem:[%s2] sm:$0xff]
  %v370 = vld [vmem:[%s2 + $0x8] sm:$0xff]
  %v371 = vld [vmem:[%s2 + $0x10] sm:$0xff]
  %v372 = vld [vmem:[%s2 + $0x18] sm:$0xff]
  %374 = vset.pattern.permute.xlu0 0
  %375 = vperm.xlu0 %374, %v369
  %v376 = vpop.permute.xlu0 %375
  %379 = vset.pattern.permute.xlu0 0
  %380 = vperm.xlu0 %379, %v370
  %v381 = vpop.permute.xlu0 %380
  %384 = vset.pattern.permute.xlu0 0
  %385 = vperm.xlu0 %384, %v371
  %v386 = vpop.permute.xlu0 %385
  %389 = vset.pattern.permute.xlu0 0
  %390 = vperm.xlu0 %389, %v372
  %v391 = vpop.permute.xlu0 %390
  %v393 = vmul.f32 %v298, %v376
  %v394 = vmul.f32 %v300, %v376
  %v395 = vmul.f32 %v351, %v376
  %v396 = vmul.f32 %v353, %v376
  %v397 = vmul.f32 %v302, %v381
  %v398 = vmul.f32 %v304, %v381
  %v399 = vmul.f32 %v355, %v381
  %v400 = vmul.f32 %v357, %v381
  %v401 = vmul.f32 %v308, %v386
  %v402 = vmul.f32 %v310, %v386
  %v403 = vmul.f32 %v361, %v386
  %v404 = vmul.f32 %v363, %v386
  %v405 = vmul.f32 %v312, %v391
  %v406 = vmul.f32 %v314, %v391
  %v407 = vmul.f32 %v365, %v391
  %v408 = vmul.f32 %v367, %v391
  %v409 = vld [vmem:[%s3] sm:$0xff]
  %v410 = vld [vmem:[%s3 + $0x8] sm:$0xff]
  %v411 = vld [vmem:[%s3 + $0x10] sm:$0xff]
  %v412 = vld [vmem:[%s3 + $0x18] sm:$0xff]
  %414 = vset.pattern.permute.xlu0 0
  %415 = vperm.xlu0 %414, %v409
  %v416 = vpop.permute.xlu0 %415
  %419 = vset.pattern.permute.xlu0 0
  %420 = vperm.xlu0 %419, %v410
  %v421 = vpop.permute.xlu0 %420
  %424 = vset.pattern.permute.xlu0 0
  %425 = vperm.xlu0 %424, %v411
  %v426 = vpop.permute.xlu0 %425
  %429 = vset.pattern.permute.xlu0 0
  %430 = vperm.xlu0 %429, %v412
  %v431 = vpop.permute.xlu0 %430
  %v433 = vadd.f32 %v393, %v416
  %v434 = vadd.f32 %v394, %v416
  %v435 = vadd.f32 %v395, %v416
  %v436 = vadd.f32 %v396, %v416
  %v437 = vadd.f32 %v397, %v421
  %v438 = vadd.f32 %v398, %v421
  %v439 = vadd.f32 %v399, %v421
  %v440 = vadd.f32 %v400, %v421
  %v441 = vadd.f32 %v401, %v426
  %v442 = vadd.f32 %v402, %v426
  %v443 = vadd.f32 %v403, %v426
  %v444 = vadd.f32 %v404, %v426
  %v445 = vadd.f32 %v405, %v431
  %v446 = vadd.f32 %v406, %v431
  %v447 = vadd.f32 %v407, %v431
  %v448 = vadd.f32 %v408, %v431
  %v449 = vmax.f32 %v433, 0.0
  %v450 = vmax.f32 %v434, 0.0
  %v451 = vmax.f32 %v435, 0.0
  %v452 = vmax.f32 %v436, 0.0
  %v453 = vmax.f32 %v437, 0.0
  %v454 = vmax.f32 %v438, 0.0
  %v455 = vmax.f32 %v439, 0.0
  %v456 = vmax.f32 %v440, 0.0
  %v457 = vmax.f32 %v441, 0.0
  %v458 = vmax.f32 %v442, 0.0
  %v459 = vmax.f32 %v443, 0.0
  %v460 = vmax.f32 %v444, 0.0
  %v461 = vmax.f32 %v445, 0.0
  %v462 = vmax.f32 %v446, 0.0
  %v463 = vmax.f32 %v447, 0.0
  %v464 = vmax.f32 %v448, 0.0
  %v465 = vpack.c.bf16 %v453, %v449
  %v466 = vpack.c.bf16 %v454, %v450
  %v467 = vpack.c.bf16 %v455, %v451
  %v468 = vpack.c.bf16 %v456, %v452
  %v469 = vpack.c.bf16 %v461, %v457
  %v470 = vpack.c.bf16 %v462, %v458
  %v471 = vpack.c.bf16 %v463, %v459
  %v472 = vpack.c.bf16 %v464, %v460
  %v481 = vunpack.c.l.b16 %v465
  %v482 = vunpack.c.l.b16 %v466
  %v483 = vunpack.c.l.b16 %v467
  %v484 = vunpack.c.l.b16 %v468
  %v485 = vunpack.c.h.b16 %v465
  %v486 = vunpack.c.h.b16 %v466
  %v487 = vunpack.c.h.b16 %v467
  %v488 = vunpack.c.h.b16 %v468
  %v489 = vunpack.c.l.b16 %v469
  %v490 = vunpack.c.l.b16 %v470
  %v491 = vunpack.c.l.b16 %v471
  %v492 = vunpack.c.l.b16 %v472
  %v493 = vunpack.c.h.b16 %v469
  %v494 = vunpack.c.h.b16 %v470
  %v495 = vunpack.c.h.b16 %v471
  %v496 = vunpack.c.h.b16 %v472
  %v497 = vpack.c.b16 %v482, %v481
  %v498 = vpack.c.b16 %v484, %v483
  %v499 = vpack.c.b16 %v486, %v485
  %v500 = vpack.c.b16 %v488, %v487
  %v501 = vpack.c.b16 %v490, %v489
  %v502 = vpack.c.b16 %v492, %v491
  %v503 = vpack.c.b16 %v494, %v493
  %v504 = vpack.c.b16 %v496, %v495
  %513 = vst [vmem:[%s4] sm:$0xff] %v497
  %514 = vst [vmem:[%s4 + $0x8] sm:$0xff] %v498
  %515 = vst [vmem:[%s4 + $0x10] sm:$0xff] %v499
  %516 = vst [vmem:[%s4 + $0x18] sm:$0xff] %v500
  %517 = vst [vmem:[%s4 + $0x20] sm:$0xff] %v501
  %518 = vst [vmem:[%s4 + $0x28] sm:$0xff] %v502
  %519 = vst [vmem:[%s4 + $0x30] sm:$0xff] %v503
  %520 = vst [vmem:[%s4 + $0x38] sm:$0xff] %v504
  // Predicated region
  $region18: #{_lambda_.11} parent=0 // pred_check
    _
  $region19: #{_lambda_.11} parent=0 // pred_check_branch
    %522 = sbr.rel (0) target = $region21
  $region20: #{_lambda_.11} parent=0 // pred_region
    _
  $region21: #{_lambda_.11} parent=0 // pred_fallthru
    _
  // Predicated region
  $region22: #{_lambda_.11} parent=0 // pred_check
    _
  $region23: #{_lambda_.11} parent=0 // pred_check_branch
    %524 = sbr.rel (0) target = $region25
  $region24: #{_lambda_.11} parent=0 // pred_region
    _
  $region25: #{_lambda_.11} parent=0 // pred_fallthru
    _

// kernel: _lambda_.12
$region0: #{_lambda_.12}
  #allocation0 [shape = 'u32[]', space=smem, size = 0x4, offset = 0x4, fixed_abs, tag = 'smem constant byte address 0x4 - core index']
  #allocation1 [shape = 'u32[144,128]{1,0:T(1,128)}', space=vmem, size = 0x12000, scoped, tag = 'internal scratch']
  %s0 = inlined_call_operand.vmem [shape: bf16[288,512], index: 0, kind: input, shape index: {}]
  %s1 = inlined_call_operand.vmem [shape: bf16[32,288], index: 1, kind: input, shape index: {}]
  %s2 = inlined_call_operand.vmem [shape: f32[32,1], index: 2, kind: input, shape index: {}]
  %s3 = inlined_call_operand.vmem [shape: f32[32,1], index: 3, kind: input, shape index: {}]
  %s4 = inlined_call_operand.vmem [shape: f32[32,512], index: 4, kind: input, shape index: {}]
  %s5 = inlined_call_operand.vmem [shape: f32[32,512], index: 5, kind: output, shape index: {0}]
  %s6 = inlined_call_operand.vmem [shape: bf16[32,512], index: 6, kind: output, shape index: {1}]
  %7 = xla_tuple %s5, %s6
  %s8 = sld [smem:[#allocation0]]
  $region38: #{_lambda_.12} parent=0
    _
  %s10 = ssub.s32 1, %s8
  %s11 = scalar_select 0, %s10, %s8
  // Predicated region
  $region2: #{_lambda_.12} parent=0 // pred_check
    _
  $region3: #{_lambda_.12} parent=0 // pred_check_branch
    %13 = sbr.rel (0) target = $region5
  $region4: #{_lambda_.12} parent=0 // pred_region
    _
  $region5: #{_lambda_.12} parent=0 // pred_fallthru
    _
  // Predicated region
  $region6: #{_lambda_.12} parent=0 // pred_check
    _
  $region7: #{_lambda_.12} parent=0 // pred_check_branch
    %15 = sbr.rel (0) target = $region9
  $region8: #{_lambda_.12} parent=0 // pred_region
    _
  $region9: #{_lambda_.12} parent=0 // pred_fallthru
    _
  // Predicated region
  $region10: #{_lambda_.12} parent=0 // pred_check
    _
  $region11: #{_lambda_.12} parent=0 // pred_check_branch
    %17 = sbr.rel (0) target = $region13
  $region12: #{_lambda_.12} parent=0 // pred_region
    _
  $region13: #{_lambda_.12} parent=0 // pred_fallthru
    _
  // Predicated region
  $region14: #{_lambda_.12} parent=0 // pred_check
    _
  $region15: #{_lambda_.12} parent=0 // pred_check_branch
    %19 = sbr.rel (0) target = $region17
  $region16: #{_lambda_.12} parent=0 // pred_region
    _
  $region17: #{_lambda_.12} parent=0 // pred_fallthru
    _
  // Predicated region
  $region18: #{_lambda_.12} parent=0 // pred_check
    _
  $region19: #{_lambda_.12} parent=0 // pred_check_branch
    %21 = sbr.rel (0) target = $region21
  $region20: #{_lambda_.12} parent=0 // pred_region
    _
  $region21: #{_lambda_.12} parent=0 // pred_fallthru
    _
  %v23 = vld [vmem:[%s1] sm:$0xff]
  %v24 = vld [vmem:[%s1 + $0x8] sm:$0xf]
  %v25 = vld [vmem:[%s1 + $0xc] sm:$0xff]
  %v26 = vld [vmem:[%s1 + $0x14] sm:$0xf]
  %v27 = vld [vmem:[%s1 + $0x18] sm:$0xff]
  %v28 = vld [vmem:[%s1 + $0x20] sm:$0xf]
  %v29 = vld [vmem:[%s1 + $0x24] sm:$0xff]
  %v30 = vld [vmem:[%s1 + $0x2c] sm:$0xf]
  %v31 = vld [vmem:[%s0] sm:$0xff]
  %v32 = vld [vmem:[%s0 + $0x8] sm:$0xff]
  %v33 = vld [vmem:[%s0 + $0x10] sm:$0xff]
  %v34 = vld [vmem:[%s0 + $0x18] sm:$0xff]
  %v35 = vld [vmem:[%s0 + $0x20] sm:$0xff]
  %v36 = vld [vmem:[%s0 + $0x28] sm:$0xff]
  %v37 = vld [vmem:[%s0 + $0x30] sm:$0xff]
  %v38 = vld [vmem:[%s0 + $0x38] sm:$0xff]
  %v39 = vld [vmem:[%s0 + $0x40] sm:$0xff]
  %v40 = vld [vmem:[%s0 + $0x48] sm:$0xff]
  %v41 = vld [vmem:[%s0 + $0x50] sm:$0xff]
  %v42 = vld [vmem:[%s0 + $0x58] sm:$0xff]
  %v43 = vld [vmem:[%s0 + $0x60] sm:$0xff]
  %v44 = vld [vmem:[%s0 + $0x68] sm:$0xff]
  %v45 = vld [vmem:[%s0 + $0x70] sm:$0xff]
  %v46 = vld [vmem:[%s0 + $0x78] sm:$0xff]
  %v47 = vld [vmem:[%s0 + $0x80] sm:$0xff]
  %v48 = vld [vmem:[%s0 + $0x88] sm:$0xff]
  %v49 = vld [vmem:[%s0 + $0x90] sm:$0xff]
  %v50 = vld [vmem:[%s0 + $0x98] sm:$0xff]
  %v51 = vld [vmem:[%s0 + $0xa0] sm:$0xff]
  %v52 = vld [vmem:[%s0 + $0xa8] sm:$0xff]
  %v53 = vld [vmem:[%s0 + $0xb0] sm:$0xff]
  %v54 = vld [vmem:[%s0 + $0xb8] sm:$0xff]
  %v55 = vld [vmem:[%s0 + $0xc0] sm:$0xff]
  %v56 = vld [vmem:[%s0 + $0xc8] sm:$0xff]
  %v57 = vld [vmem:[%s0 + $0xd0] sm:$0xff]
  %v58 = vld [vmem:[%s0 + $0xd8] sm:$0xff]
  %v59 = vld [vmem:[%s0 + $0xe0] sm:$0xff]
  %v60 = vld [vmem:[%s0 + $0xe8] sm:$0xff]
  %v61 = vld [vmem:[%s0 + $0xf0] sm:$0xff]
  %v62 = vld [vmem:[%s0 + $0xf8] sm:$0xff]
  %v63 = vld [vmem:[%s0 + $0x100] sm:$0xff]
  %v64 = vld [vmem:[%s0 + $0x108] sm:$0xff]
  %v65 = vld [vmem:[%s0 + $0x110] sm:$0xff]
  %v66 = vld [vmem:[%s0 + $0x118] sm:$0xff]
  %v67 = vld [vmem:[%s0 + $0x120] sm:$0xff]
  %v68 = vld [vmem:[%s0 + $0x128] sm:$0xff]
  %v69 = vld [vmem:[%s0 + $0x130] sm:$0xff]
  %v70 = vld [vmem:[%s0 + $0x138] sm:$0xff]
  %v71 = vld [vmem:[%s0 + $0x140] sm:$0xff]
  %v72 = vld [vmem:[%s0 + $0x148] sm:$0xff]
  %v73 = vld [vmem:[%s0 + $0x150] sm:$0xff]
  %v74 = vld [vmem:[%s0 + $0x158] sm:$0xff]
  %v75 = vld [vmem:[%s0 + $0x160] sm:$0xff]
  %v76 = vld [vmem:[%s0 + $0x168] sm:$0xff]
  %v77 = vld [vmem:[%s0 + $0x170] sm:$0xff]
  %v78 = vld [vmem:[%s0 + $0x178] sm:$0xff]
  %v79 = vld [vmem:[%s0 + $0x180] sm:$0xff]
  %v80 = vld [vmem:[%s0 + $0x188] sm:$0xff]
  %v81 = vld [vmem:[%s0 + $0x190] sm:$0xff]
  %v82 = vld [vmem:[%s0 + $0x198] sm:$0xff]
  %v83 = vld [vmem:[%s0 + $0x1a0] sm:$0xff]
  %v84 = vld [vmem:[%s0 + $0x1a8] sm:$0xff]
  %v85 = vld [vmem:[%s0 + $0x1b0] sm:$0xff]
  %v86 = vld [vmem:[%s0 + $0x1b8] sm:$0xff]
  %v87 = vld [vmem:[%s0 + $0x1c0] sm:$0xff]
  %v88 = vld [vmem:[%s0 + $0x1c8] sm:$0xff]
  %v89 = vld [vmem:[%s0 + $0x1d0] sm:$0xff]
  %v90 = vld [vmem:[%s0 + $0x1d8] sm:$0xff]
  %v91 = vld [vmem:[%s0 + $0x1e0] sm:$0xff]
  %v92 = vld [vmem:[%s0 + $0x1e8] sm:$0xff]
  %v93 = vld [vmem:[%s0 + $0x1f0] sm:$0xff]
  %v94 = vld [vmem:[%s0 + $0x1f8] sm:$0xff]
  %v95 = vld [vmem:[%s0 + $0x200] sm:$0xff]
  %v96 = vld [vmem:[%s0 + $0x208] sm:$0xff]
  %v97 = vld [vmem:[%s0 + $0x210] sm:$0xff]
  %v98 = vld [vmem:[%s0 + $0x218] sm:$0xff]
  %v99 = vld [vmem:[%s0 + $0x220] sm:$0xff]
  %v100 = vld [vmem:[%s0 + $0x228] sm:$0xff]
  %v101 = vld [vmem:[%s0 + $0x230] sm:$0xff]
  %v102 = vld [vmem:[%s0 + $0x238] sm:$0xff]
  %v103 = vld [vmem:[%s4] sm:$0xff]
  %v104 = vld [vmem:[%s4 + $0x8] sm:$0xff]
  %v105 = vld [vmem:[%s4 + $0x10] sm:$0xff]
  %v106 = vld [vmem:[%s4 + $0x18] sm:$0xff]
  %v107 = vld [vmem:[%s4 + $0x20] sm:$0xff]
  %v108 = vld [vmem:[%s4 + $0x28] sm:$0xff]
  %v109 = vld [vmem:[%s4 + $0x30] sm:$0xff]
  %v110 = vld [vmem:[%s4 + $0x38] sm:$0xff]
  %v111 = vld [vmem:[%s4 + $0x40] sm:$0xff]
  %v112 = vld [vmem:[%s4 + $0x48] sm:$0xff]
  %v113 = vld [vmem:[%s4 + $0x50] sm:$0xff]
  %v114 = vld [vmem:[%s4 + $0x58] sm:$0xff]
  %v115 = vld [vmem:[%s4 + $0x60] sm:$0xff]
  %v116 = vld [vmem:[%s4 + $0x68] sm:$0xff]
  %v117 = vld [vmem:[%s4 + $0x70] sm:$0xff]
  %v118 = vld [vmem:[%s4 + $0x78] sm:$0xff]
  %v127 = vunpack.c.l.b16 %v23
  %v128 = vunpack.c.h.b16 %v23
  %v129 = vunpack.c.l.b16 %v24
  %v130 = vunpack.c.l.b16 %v25
  %v131 = vunpack.c.h.b16 %v25
  %v132 = vunpack.c.l.b16 %v26
  %v133 = vunpack.c.l.b16 %v27
  %v134 = vunpack.c.h.b16 %v27
  %v135 = vunpack.c.l.b16 %v28
  %v136 = vunpack.c.l.b16 %v29
  %v137 = vunpack.c.h.b16 %v29
  %v138 = vunpack.c.l.b16 %v30
  %v139 = vpack.c.b16 %v130, %v127
  %v140 = vpack.c.b16 %v131, %v128
  %v141 = vpack.c.b16 %v132, %v129
  %v142 = vpack.c.b16 %v136, %v133
  %v143 = vpack.c.b16 %v137, %v134
  %v144 = vpack.c.b16 %v138, %v135
  %v221 = vunpack.c.l.b16 %v31
  %v222 = vunpack.c.h.b16 %v31
  %v223 = vunpack.c.l.b16 %v32
  %v224 = vunpack.c.h.b16 %v32
  %v225 = vunpack.c.l.b16 %v33
  %v226 = vunpack.c.h.b16 %v33
  %v227 = vunpack.c.l.b16 %v34
  %v228 = vunpack.c.h.b16 %v34
  %v229 = vunpack.c.l.b16 %v35
  %v230 = vunpack.c.h.b16 %v35
  %v231 = vunpack.c.l.b16 %v36
  %v232 = vunpack.c.h.b16 %v36
  %v233 = vunpack.c.l.b16 %v37
  %v234 = vunpack.c.h.b16 %v37
  %v235 = vunpack.c.l.b16 %v38
  %v236 = vunpack.c.h.b16 %v38
  %v237 = vunpack.c.l.b16 %v39
  %v238 = vunpack.c.h.b16 %v39
  %v239 = vunpack.c.l.b16 %v40
  %v240 = vunpack.c.h.b16 %v40
  %v241 = vunpack.c.l.b16 %v41
  %v242 = vunpack.c.h.b16 %v41
  %v243 = vunpack.c.l.b16 %v42
  %v244 = vunpack.c.h.b16 %v42
  %v245 = vunpack.c.l.b16 %v43
  %v246 = vunpack.c.h.b16 %v43
  %v247 = vunpack.c.l.b16 %v44
  %v248 = vunpack.c.h.b16 %v44
  %v249 = vunpack.c.l.b16 %v45
  %v250 = vunpack.c.h.b16 %v45
  %v251 = vunpack.c.l.b16 %v46
  %v252 = vunpack.c.h.b16 %v46
  %v253 = vunpack.c.l.b16 %v47
  %v254 = vunpack.c.h.b16 %v47
  %v255 = vunpack.c.l.b16 %v48
  %v256 = vunpack.c.h.b16 %v48
  %v257 = vunpack.c.l.b16 %v49
  %v258 = vunpack.c.h.b16 %v49
  %v259 = vunpack.c.l.b16 %v50
  %v260 = vunpack.c.h.b16 %v50
  %v261 = vunpack.c.l.b16 %v51
  %v262 = vunpack.c.h.b16 %v51
  %v263 = vunpack.c.l.b16 %v52
  %v264 = vunpack.c.h.b16 %v52
  %v265 = vunpack.c.l.b16 %v53
  %v266 = vunpack.c.h.b16 %v53
  %v267 = vunpack.c.l.b16 %v54
  %v268 = vunpack.c.h.b16 %v54
  %v269 = vunpack.c.l.b16 %v55
  %v270 = vunpack.c.h.b16 %v55
  %v271 = vunpack.c.l.b16 %v56
  %v272 = vunpack.c.h.b16 %v56
  %v273 = vunpack.c.l.b16 %v57
  %v274 = vunpack.c.h.b16 %v57
  %v275 = vunpack.c.l.b16 %v58
  %v276 = vunpack.c.h.b16 %v58
  %v277 = vunpack.c.l.b16 %v59
  %v278 = vunpack.c.h.b16 %v59
  %v279 = vunpack.c.l.b16 %v60
  %v280 = vunpack.c.h.b16 %v60
  %v281 = vunpack.c.l.b16 %v61
  %v282 = vunpack.c.h.b16 %v61
  %v283 = vunpack.c.l.b16 %v62
  %v284 = vunpack.c.h.b16 %v62
  %v285 = vunpack.c.l.b16 %v63
  %v286 = vunpack.c.h.b16 %v63
  %v287 = vunpack.c.l.b16 %v64
  %v288 = vunpack.c.h.b16 %v64
  %v289 = vunpack.c.l.b16 %v65
  %v290 = vunpack.c.h.b16 %v65
  %v291 = vunpack.c.l.b16 %v66
  %v292 = vunpack.c.h.b16 %v66
  %v293 = vunpack.c.l.b16 %v67
  %v294 = vunpack.c.h.b16 %v67
  %v295 = vunpack.c.l.b16 %v68
  %v296 = vunpack.c.h.b16 %v68
  %v297 = vunpack.c.l.b16 %v69
  %v298 = vunpack.c.h.b16 %v69
  %v299 = vunpack.c.l.b16 %v70
  %v300 = vunpack.c.h.b16 %v70
  %v301 = vunpack.c.l.b16 %v71
  %v302 = vunpack.c.h.b16 %v71
  %v303 = vunpack.c.l.b16 %v72
  %v304 = vunpack.c.h.b16 %v72
  %v305 = vunpack.c.l.b16 %v73
  %v306 = vunpack.c.h.b16 %v73
  %v307 = vunpack.c.l.b16 %v74
  %v308 = vunpack.c.h.b16 %v74
  %v309 = vunpack.c.l.b16 %v75
  %v310 = vunpack.c.h.b16 %v75
  %v311 = vunpack.c.l.b16 %v76
  %v312 = vunpack.c.h.b16 %v76
  %v313 = vunpack.c.l.b16 %v77
  %v314 = vunpack.c.h.b16 %v77
  %v315 = vunpack.c.l.b16 %v78
  %v316 = vunpack.c.h.b16 %v78
  %v317 = vunpack.c.l.b16 %v79
  %v318 = vunpack.c.h.b16 %v79
  %v319 = vunpack.c.l.b16 %v80
  %v320 = vunpack.c.h.b16 %v80
  %v321 = vunpack.c.l.b16 %v81
  %v322 = vunpack.c.h.b16 %v81
  %v323 = vunpack.c.l.b16 %v82
  %v324 = vunpack.c.h.b16 %v82
  %v325 = vunpack.c.l.b16 %v83
  %v326 = vunpack.c.h.b16 %v83
  %v327 = vunpack.c.l.b16 %v84
  %v328 = vunpack.c.h.b16 %v84
  %v329 = vunpack.c.l.b16 %v85
  %v330 = vunpack.c.h.b16 %v85
  %v331 = vunpack.c.l.b16 %v86
  %v332 = vunpack.c.h.b16 %v86
  %v333 = vunpack.c.l.b16 %v87
  %v334 = vunpack.c.h.b16 %v87
  %v335 = vunpack.c.l.b16 %v88
  %v336 = vunpack.c.h.b16 %v88
  %v337 = vunpack.c.l.b16 %v89
  %v338 = vunpack.c.h.b16 %v89
  %v339 = vunpack.c.l.b16 %v90
  %v340 = vunpack.c.h.b16 %v90
  %v341 = vunpack.c.l.b16 %v91
  %v342 = vunpack.c.h.b16 %v91
  %v343 = vunpack.c.l.b16 %v92
  %v344 = vunpack.c.h.b16 %v92
  %v345 = vunpack.c.l.b16 %v93
  %v346 = vunpack.c.h.b16 %v93
  %v347 = vunpack.c.l.b16 %v94
  %v348 = vunpack.c.h.b16 %v94
  %v349 = vunpack.c.l.b16 %v95
  %v350 = vunpack.c.h.b16 %v95
  %v351 = vunpack.c.l.b16 %v96
  %v352 = vunpack.c.h.b16 %v96
  %v353 = vunpack.c.l.b16 %v97
  %v354 = vunpack.c.h.b16 %v97
  %v355 = vunpack.c.l.b16 %v98
  %v356 = vunpack.c.h.b16 %v98
  %v357 = vunpack.c.l.b16 %v99
  %v358 = vunpack.c.h.b16 %v99
  %v359 = vunpack.c.l.b16 %v100
  %v360 = vunpack.c.h.b16 %v100
  %v361 = vunpack.c.l.b16 %v101
  %v362 = vunpack.c.h.b16 %v101
  %v363 = vunpack.c.l.b16 %v102
  %v364 = vunpack.c.h.b16 %v102
  %v365 = vpack.c.b16 %v225, %v221
  %v366 = vpack.c.b16 %v226, %v222
  %v367 = vpack.c.b16 %v227, %v223
  %v368 = vpack.c.b16 %v228, %v224
  %v369 = vpack.c.b16 %v233, %v229
  %v370 = vpack.c.b16 %v234, %v230
  %v371 = vpack.c.b16 %v235, %v231
  %v372 = vpack.c.b16 %v236, %v232
  %v373 = vpack.c.b16 %v241, %v237
  %v374 = vpack.c.b16 %v242, %v238
  %v375 = vpack.c.b16 %v243, %v239
  %v376 = vpack.c.b16 %v244, %v240
  %v377 = vpack.c.b16 %v249, %v245
  %v378 = vpack.c.b16 %v250, %v246
  %v379 = vpack.c.b16 %v251, %v247
  %v380 = vpack.c.b16 %v252, %v248
  %v381 = vpack.c.b16 %v257, %v253
  %v382 = vpack.c.b16 %v258, %v254
  %v383 = vpack.c.b16 %v259, %v255
  %v384 = vpack.c.b16 %v260, %v256
  %v385 = vpack.c.b16 %v265, %v261
  %v386 = vpack.c.b16 %v266, %v262
  %v387 = vpack.c.b16 %v267, %v263
  %v388 = vpack.c.b16 %v268, %v264
  %v389 = vpack.c.b16 %v273, %v269
  %v390 = vpack.c.b16 %v274, %v270
  %v391 = vpack.c.b16 %v275, %v271
  %v392 = vpack.c.b16 %v276, %v272
  %v393 = vpack.c.b16 %v281, %v277
  %v394 = vpack.c.b16 %v282, %v278
  %v395 = vpack.c.b16 %v283, %v279
  %v396 = vpack.c.b16 %v284, %v280
  %v397 = vpack.c.b16 %v289, %v285
  %v398 = vpack.c.b16 %v290, %v286
  %v399 = vpack.c.b16 %v291, %v287
  %v400 = vpack.c.b16 %v292, %v288
  %v401 = vpack.c.b16 %v297, %v293
  %v402 = vpack.c.b16 %v298, %v294
  %v403 = vpack.c.b16 %v299, %v295
  %v404 = vpack.c.b16 %v300, %v296
  %v405 = vpack.c.b16 %v305, %v301
  %v406 = vpack.c.b16 %v306, %v302
  %v407 = vpack.c.b16 %v307, %v303
  %v408 = vpack.c.b16 %v308, %v304
  %v409 = vpack.c.b16 %v313, %v309
  %v410 = vpack.c.b16 %v314, %v310
  %v411 = vpack.c.b16 %v315, %v311
  %v412 = vpack.c.b16 %v316, %v312
  %v413 = vpack.c.b16 %v321, %v317
  %v414 = vpack.c.b16 %v322, %v318
  %v415 = vpack.c.b16 %v323, %v319
  %v416 = vpack.c.b16 %v324, %v320
  %v417 = vpack.c.b16 %v329, %v325
  %v418 = vpack.c.b16 %v330, %v326
  %v419 = vpack.c.b16 %v331, %v327
  %v420 = vpack.c.b16 %v332, %v328
  %v421 = vpack.c.b16 %v337, %v333
  %v422 = vpack.c.b16 %v338, %v334
  %v423 = vpack.c.b16 %v339, %v335
  %v424 = vpack.c.b16 %v340, %v336
  %v425 = vpack.c.b16 %v345, %v341
  %v426 = vpack.c.b16 %v346, %v342
  %v427 = vpack.c.b16 %v347, %v343
  %v428 = vpack.c.b16 %v348, %v344
  %v429 = vpack.c.b16 %v353, %v349
  %v430 = vpack.c.b16 %v354, %v350
  %v431 = vpack.c.b16 %v355, %v351
  %v432 = vpack.c.b16 %v356, %v352
  %v433 = vpack.c.b16 %v361, %v357
  %v434 = vpack.c.b16 %v362, %v358
  %v435 = vpack.c.b16 %v363, %v359
  %v436 = vpack.c.b16 %v364, %v360
  %vm509 = vcmask 261120
  %v511 = vsel %vm509, %v141, 0
  %v514 = vsel %vm509, %v144, 0
  %516 = vmatprep.subr.bf16.mxu0 %v366
  %517 = vmatpush1.bf16.msra.mxu0 %v365
  %518 = vmatprep.subr.bf16.mxu0 %v370
  %519 = vmatpush1.bf16.msra.mxu0 %v369
  %520 = vmatprep.subr.bf16.mxu0 %v374
  %521 = vmatpush1.bf16.msra.mxu0 %v373
  %522 = vmatprep.subr.bf16.mxu0 %v378
  %523 = vmatpush1.bf16.msra.mxu0 %v377
  %524 = vmatprep.subr.bf16.mxu0 %v382
  %525 = vmatpush1.bf16.msra.mxu0 %v381
  %526 = vmatprep.subr.bf16.mxu0 %v386
  %527 = vmatpush1.bf16.msra.mxu0 %v385
  %528 = vmatprep.subr.bf16.mxu0 %v390
  %529 = vmatpush1.bf16.msra.mxu0 %v389
  %530 = vmatprep.subr.bf16.mxu0 %v394
  %531 = vmatpush1.bf16.msra.mxu0 %v393
  %532 = vmatprep.subr.bf16.mxu0 %v398
  %533 = vmatpush1.bf16.msra.mxu0 %v397
  %534 = vmatprep.subr.bf16.mxu0 %v402
  %535 = vmatpush1.bf16.msra.mxu0 %v401
  %536 = vmatprep.subr.bf16.mxu0 %v406
  %537 = vmatpush1.bf16.msra.mxu0 %v405
  %538 = vmatprep.subr.bf16.mxu0 %v410
  %539 = vmatpush1.bf16.msra.mxu0 %v409
  %540 = vmatprep.subr.bf16.mxu0 %v414
  %541 = vmatpush1.bf16.msra.mxu0 %v413
  %542 = vmatprep.subr.bf16.mxu0 %v418
  %543 = vmatpush1.bf16.msra.mxu0 %v417
  %544 = vmatprep.subr.bf16.mxu0 %v422
  %545 = vmatpush1.bf16.msra.mxu0 %v421
  %546 = vmatprep.subr.bf16.mxu0 %v426
  %547 = vmatpush1.bf16.msra.mxu0 %v425
  %548 = vmatprep.mubr.bf16.mxu0 %v140
  %549 = vmatmul.mubr.bf16.gmra.mrb[0].mxu0 %v139
  %v550 = vpop.f32.mrb[0].mxu0
  %v551 = vadd.f32 %v103, %v550
  %v552 = vpop.f32.mrb[0].mxu0
  %v553 = vadd.f32 %v104, %v552
  %v554 = vpop.f32.mrb[0].mxu0
  %v555 = vadd.f32 %v107, %v554
  %v556 = vpop.f32.mrb[0].mxu0
  %v557 = vadd.f32 %v108, %v556
  %558 = vmatprep.mubr.bf16.mxu0 %v143
  %559 = vmatmul.mubr.bf16.gmra.mrb[0].mxu0 %v142
  %v560 = vpop.f32.mrb[0].mxu0
  %v561 = vadd.f32 %v111, %v560
  %v562 = vpop.f32.mrb[0].mxu0
  %v563 = vadd.f32 %v112, %v562
  %v564 = vpop.f32.mrb[0].mxu0
  %v565 = vadd.f32 %v115, %v564
  %v566 = vpop.f32.mrb[0].mxu0
  %v567 = vadd.f32 %v116, %v566
  %568 = vdwg.mxu0
  %569 = vmatprep.subr.bf16.mxu0 %v430
  %570 = vmatpush1.bf16.msra.mxu0 %v429
  %571 = vmatprep.subr.bf16.mxu0 %v434
  %572 = vmatpush1.bf16.msra.mxu0 %v433
  %573 = vmatprep.subr.bf16.mxu0 0
  %574 = vmatpush1.bf16.msra.mxu0 0
  %575 = vmatprep.subr.bf16.mxu0 0
  %576 = vmatpush1.bf16.msra.mxu0 0
  %577 = vmatprep.subr.bf16.mxu0 0
  %578 = vmatpush1.bf16.msra.mxu0 0
  %579 = vmatprep.subr.bf16.mxu0 0
  %580 = vmatpush1.bf16.msra.mxu0 0
  %581 = vmatprep.subr.bf16.mxu0 0
  %582 = vmatpush1.bf16.msra.mxu0 0
  %583 = vmatprep.subr.bf16.mxu0 0
  %584 = vmatpush1.bf16.msra.mxu0 0
  %585 = vmatprep.subr.bf16.mxu0 0
  %586 = vmatpush1.bf16.msra.mxu0 0
  %587 = vmatprep.subr.bf16.mxu0 0
  %588 = vmatpush1.bf16.msra.mxu0 0
  %589 = vmatprep.subr.bf16.mxu0 0
  %590 = vmatpush1.bf16.msra.mxu0 0
  %591 = vmatprep.subr.bf16.mxu0 0
  %592 = vmatpush1.bf16.msra.mxu0 0
  %593 = vmatprep.subr.bf16.mxu0 0
  %594 = vmatpush1.bf16.msra.mxu0 0
  %595 = vmatprep.subr.bf16.mxu0 0
  %596 = vmatpush1.bf16.msra.mxu0 0
  %597 = vmatprep.subr.bf16.mxu0 0
  %598 = vmatpush1.bf16.msra.mxu0 0
  %599 = vmatprep.subr.bf16.mxu0 0
  %600 = vmatpush1.bf16.msra.mxu0 0
  %601 = vmatprep.mubr.bf16.mxu0 0
  %602 = vmatmul.mubr.bf16.gmra.mrb[0].mxu0 %v511
  %v603 = vpop.f32.mrb[0].mxu0
  %v604 = vadd.f32 %v551, %v603
  %v605 = vpop.f32.mrb[0].mxu0
  %v606 = vadd.f32 %v553, %v605
  %v607 = vpop.f32.mrb[0].mxu0
  %v608 = vadd.f32 %v555, %v607
  %v609 = vpop.f32.mrb[0].mxu0
  %v610 = vadd.f32 %v557, %v609
  %611 = vmatprep.mubr.bf16.mxu0 0
  %612 = vmatmul.mubr.bf16.gmra.mrb[0].mxu0 %v514
  %v613 = vpop.f32.mrb[0].mxu0
  %v614 = vadd.f32 %v561, %v613
  %v615 = vpop.f32.mrb[0].mxu0
  %v616 = vadd.f32 %v563, %v615
  %v617 = vpop.f32.mrb[0].mxu0
  %v618 = vadd.f32 %v565, %v617
  %v619 = vpop.f32.mrb[0].mxu0
  %v620 = vadd.f32 %v567, %v619
  %621 = vdwg.mxu0
  %622 = vmatprep.subr.bf16.mxu0 %v368
  %623 = vmatpush1.bf16.msra.mxu0 %v367
  %624 = vmatprep.subr.bf16.mxu0 %v372
  %625 = vmatpush1.bf16.msra.mxu0 %v371
  %626 = vmatprep.subr.bf16.mxu0 %v376
  %627 = vmatpush1.bf16.msra.mxu0 %v375
  %628 = vmatprep.subr.bf16.mxu0 %v380
  %629 = vmatpush1.bf16.msra.mxu0 %v379
  %630 = vmatprep.subr.bf16.mxu0 %v384
  %631 = vmatpush1.bf16.msra.mxu0 %v383
  %632 = vmatprep.subr.bf16.mxu0 %v388
  %633 = vmatpush1.bf16.msra.mxu0 %v387
  %634 = vmatprep.subr.bf16.mxu0 %v392
  %635 = vmatpush1.bf16.msra.mxu0 %v391
  %636 = vmatprep.subr.bf16.mxu0 %v396
  %637 = vmatpush1.bf16.msra.mxu0 %v395
  %638 = vmatprep.subr.bf16.mxu0 %v400
  %639 = vmatpush1.bf16.msra.mxu0 %v399
  %640 = vmatprep.subr.bf16.mxu0 %v404
  %641 = vmatpush1.bf16.msra.mxu0 %v403
  %642 = vmatprep.subr.bf16.mxu0 %v408
  %643 = vmatpush1.bf16.msra.mxu0 %v407
  %644 = vmatprep.subr.bf16.mxu0 %v412
  %645 = vmatpush1.bf16.msra.mxu0 %v411
  %646 = vmatprep.subr.bf16.mxu0 %v416
  %647 = vmatpush1.bf16.msra.mxu0 %v415
  %648 = vmatprep.subr.bf16.mxu0 %v420
  %649 = vmatpush1.bf16.msra.mxu0 %v419
  %650 = vmatprep.subr.bf16.mxu0 %v424
  %651 = vmatpush1.bf16.msra.mxu0 %v423
  %652 = vmatprep.subr.bf16.mxu0 %v428
  %653 = vmatpush1.bf16.msra.mxu0 %v427
  %654 = vmatprep.mubr.bf16.mxu0 %v140
  %655 = vmatmul.mubr.bf16.gmra.mrb[0].mxu0 %v139
  %v656 = vpop.f32.mrb[0].mxu0
  %v657 = vadd.f32 %v105, %v656
  %v658 = vpop.f32.mrb[0].mxu0
  %v659 = vadd.f32 %v106, %v658
  %v660 = vpop.f32.mrb[0].mxu0
  %v661 = vadd.f32 %v109, %v660
  %v662 = vpop.f32.mrb[0].mxu0
  %v663 = vadd.f32 %v110, %v662
  %664 = vmatprep.mubr.bf16.mxu0 %v143
  %665 = vmatmul.mubr.bf16.gmra.mrb[0].mxu0 %v142
  %v666 = vpop.f32.mrb[0].mxu0
  %v667 = vadd.f32 %v113, %v666
  %v668 = vpop.f32.mrb[0].mxu0
  %v669 = vadd.f32 %v114, %v668
  %v670 = vpop.f32.mrb[0].mxu0
  %v671 = vadd.f32 %v117, %v670
  %v672 = vpop.f32.mrb[0].mxu0
  %v673 = vadd.f32 %v118, %v672
  %674 = vdwg.mxu0
  %675 = vmatprep.subr.bf16.mxu0 %v432
  %676 = vmatpush1.bf16.msra.mxu0 %v431
  %677 = vmatprep.subr.bf16.mxu0 %v436
  %678 = vmatpush1.bf16.msra.mxu0 %v435
  %679 = vmatprep.subr.bf16.mxu0 0
  %680 = vmatpush1.bf16.msra.mxu0 0
  %681 = vmatprep.subr.bf16.mxu0 0
  %682 = vmatpush1.bf16.msra.mxu0 0
  %683 = vmatprep.subr.bf16.mxu0 0
  %684 = vmatpush1.bf16.msra.mxu0 0
  %685 = vmatprep.subr.bf16.mxu0 0
  %686 = vmatpush1.bf16.msra.mxu0 0
  %687 = vmatprep.subr.bf16.mxu0 0
  %688 = vmatpush1.bf16.msra.mxu0 0
  %689 = vmatprep.subr.bf16.mxu0 0
  %690 = vmatpush1.bf16.msra.mxu0 0
  %691 = vmatprep.subr.bf16.mxu0 0
  %692 = vmatpush1.bf16.msra.mxu0 0
  %693 = vmatprep.subr.bf16.mxu0 0
  %694 = vmatpush1.bf16.msra.mxu0 0
  %695 = vmatprep.subr.bf16.mxu0 0
  %696 = vmatpush1.bf16.msra.mxu0 0
  %697 = vmatprep.subr.bf16.mxu0 0
  %698 = vmatpush1.bf16.msra.mxu0 0
  %699 = vmatprep.subr.bf16.mxu0 0
  %700 = vmatpush1.bf16.msra.mxu0 0
  %701 = vmatprep.subr.bf16.mxu0 0
  %702 = vmatpush1.bf16.msra.mxu0 0
  %703 = vmatprep.subr.bf16.mxu0 0
  %704 = vmatpush1.bf16.msra.mxu0 0
  %705 = vmatprep.subr.bf16.mxu0 0
  %706 = vmatpush1.bf16.msra.mxu0 0
  %707 = vmatprep.mubr.bf16.mxu0 0
  %708 = vmatmul.mubr.bf16.gmra.mrb[0].mxu0 %v511
  %v709 = vpop.f32.mrb[0].mxu0
  %v710 = vadd.f32 %v657, %v709
  %v711 = vpop.f32.mrb[0].mxu0
  %v712 = vadd.f32 %v659, %v711
  %v713 = vpop.f32.mrb[0].mxu0
  %v714 = vadd.f32 %v661, %v713
  %v715 = vpop.f32.mrb[0].mxu0
  %v716 = vadd.f32 %v663, %v715
  %717 = vmatprep.mubr.bf16.mxu0 0
  %718 = vmatmul.mubr.bf16.gmra.mrb[0].mxu0 %v514
  %v719 = vpop.f32.mrb[0].mxu0
  %v720 = vadd.f32 %v667, %v719
  %v721 = vpop.f32.mrb[0].mxu0
  %v722 = vadd.f32 %v669, %v721
  %v723 = vpop.f32.mrb[0].mxu0
  %v724 = vadd.f32 %v671, %v723
  %v725 = vpop.f32.mrb[0].mxu0
  %v726 = vadd.f32 %v673, %v725
  %727 = vdwg.mxu0
  %v728 = vld [vmem:[%s2] sm:$0xff]
  %v729 = vld [vmem:[%s2 + $0x8] sm:$0xff]
  %v730 = vld [vmem:[%s2 + $0x10] sm:$0xff]
  %v731 = vld [vmem:[%s2 + $0x18] sm:$0xff]
  %733 = vset.pattern.permute.xlu0 0
  %734 = vperm.xlu0 %733, %v728
  %v735 = vpop.permute.xlu0 %734
  %738 = vset.pattern.permute.xlu0 0
  %739 = vperm.xlu0 %738, %v729
  %v740 = vpop.permute.xlu0 %739
  %743 = vset.pattern.permute.xlu0 0
  %744 = vperm.xlu0 %743, %v730
  %v745 = vpop.permute.xlu0 %744
  %748 = vset.pattern.permute.xlu0 0
  %749 = vperm.xlu0 %748, %v731
  %v750 = vpop.permute.xlu0 %749
  %v752 = vmul.f32 %v604, %v735
  %v753 = vmul.f32 %v606, %v735
  %v754 = vmul.f32 %v710, %v735
  %v755 = vmul.f32 %v712, %v735
  %v756 = vmul.f32 %v608, %v740
  %v757 = vmul.f32 %v610, %v740
  %v758 = vmul.f32 %v714, %v740
  %v759 = vmul.f32 %v716, %v740
  %v760 = vmul.f32 %v614, %v745
  %v761 = vmul.f32 %v616, %v745
  %v762 = vmul.f32 %v720, %v745
  %v763 = vmul.f32 %v722, %v745
  %v764 = vmul.f32 %v618, %v750
  %v765 = vmul.f32 %v620, %v750
  %v766 = vmul.f32 %v724, %v750
  %v767 = vmul.f32 %v726, %v750
  %v768 = vld [vmem:[%s3] sm:$0xff]
  %v769 = vld [vmem:[%s3 + $0x8] sm:$0xff]
  %v770 = vld [vmem:[%s3 + $0x10] sm:$0xff]
  %v771 = vld [vmem:[%s3 + $0x18] sm:$0xff]
  %773 = vset.pattern.permute.xlu0 0
  %774 = vperm.xlu0 %773, %v768
  %v775 = vpop.permute.xlu0 %774
  %778 = vset.pattern.permute.xlu0 0
  %779 = vperm.xlu0 %778, %v769
  %v780 = vpop.permute.xlu0 %779
  %783 = vset.pattern.permute.xlu0 0
  %784 = vperm.xlu0 %783, %v770
  %v785 = vpop.permute.xlu0 %784
  %788 = vset.pattern.permute.xlu0 0
  %789 = vperm.xlu0 %788, %v771
  %v790 = vpop.permute.xlu0 %789
  %v792 = vadd.f32 %v752, %v775
  %v793 = vadd.f32 %v753, %v775
  %v794 = vadd.f32 %v754, %v775
  %v795 = vadd.f32 %v755, %v775
  %v796 = vadd.f32 %v756, %v780
  %v797 = vadd.f32 %v757, %v780
  %v798 = vadd.f32 %v758, %v780
  %v799 = vadd.f32 %v759, %v780
  %v800 = vadd.f32 %v760, %v785
  %v801 = vadd.f32 %v761, %v785
  %v802 = vadd.f32 %v762, %v785
  %v803 = vadd.f32 %v763, %v785
  %v804 = vadd.f32 %v764, %v790
  %v805 = vadd.f32 %v765, %v790
  %v806 = vadd.f32 %v766, %v790
  %v807 = vadd.f32 %v767, %v790
  %v808 = vmax.f32 %v792, 0.0
  %v809 = vmax.f32 %v793, 0.0
  %v810 = vmax.f32 %v794, 0.0
  %v811 = vmax.f32 %v795, 0.0
  %v812 = vmax.f32 %v796, 0.0
  %v813 = vmax.f32 %v797, 0.0
  %v814 = vmax.f32 %v798, 0.0
  %v815 = vmax.f32 %v799, 0.0
  %v816 = vmax.f32 %v800, 0.0
  %v817 = vmax.f32 %v801, 0.0
  %v818 = vmax.f32 %v802, 0.0
  %v819 = vmax.f32 %v803, 0.0
  %v820 = vmax.f32 %v804, 0.0
  %v821 = vmax.f32 %v805, 0.0
  %v822 = vmax.f32 %v806, 0.0
  %v823 = vmax.f32 %v807, 0.0
  %v824 = vpack.c.bf16 %v812, %v808
  %v825 = vpack.c.bf16 %v813, %v809
  %v826 = vpack.c.bf16 %v814, %v810
  %v827 = vpack.c.bf16 %v815, %v811
  %v828 = vpack.c.bf16 %v820, %v816
  %v829 = vpack.c.bf16 %v821, %v817
  %v830 = vpack.c.bf16 %v822, %v818
  %v831 = vpack.c.bf16 %v823, %v819
  %832 = vst [vmem:[%s5] sm:$0xff] %v604
  %833 = vst [vmem:[%s5 + $0x8] sm:$0xff] %v606
  %834 = vst [vmem:[%s5 + $0x10] sm:$0xff] %v710
  %835 = vst [vmem:[%s5 + $0x18] sm:$0xff] %v712
  %836 = vst [vmem:[%s5 + $0x20] sm:$0xff] %v608
  %837 = vst [vmem:[%s5 + $0x28] sm:$0xff] %v610
  %838 = vst [vmem:[%s5 + $0x30] sm:$0xff] %v714
  %839 = vst [vmem:[%s5 + $0x38] sm:$0xff] %v716
  %840 = vst [vmem:[%s5 + $0x40] sm:$0xff] %v614
  %841 = vst [vmem:[%s5 + $0x48] sm:$0xff] %v616
  %842 = vst [vmem:[%s5 + $0x50] sm:$0xff] %v720
  %843 = vst [vmem:[%s5 + $0x58] sm:$0xff] %v722
  %844 = vst [vmem:[%s5 + $0x60] sm:$0xff] %v618
  %845 = vst [vmem:[%s5 + $0x68] sm:$0xff] %v620
  %846 = vst [vmem:[%s5 + $0x70] sm:$0xff] %v724
  %847 = vst [vmem:[%s5 + $0x78] sm:$0xff] %v726
  %v856 = vunpack.c.l.b16 %v824
  %v857 = vunpack.c.l.b16 %v825
  %v858 = vunpack.c.l.b16 %v826
  %v859 = vunpack.c.l.b16 %v827
  %v860 = vunpack.c.h.b16 %v824
  %v861 = vunpack.c.h.b16 %v825
  %v862 = vunpack.c.h.b16 %v826
  %v863 = vunpack.c.h.b16 %v827
  %v864 = vunpack.c.l.b16 %v828
  %v865 = vunpack.c.l.b16 %v829
  %v866 = vunpack.c.l.b16 %v830
  %v867 = vunpack.c.l.b16 %v831
  %v868 = vunpack.c.h.b16 %v828
  %v869 = vunpack.c.h.b16 %v829
  %v870 = vunpack.c.h.b16 %v830
  %v871 = vunpack.c.h.b16 %v831
  %v872 = vpack.c.b16 %v857, %v856
  %v873 = vpack.c.b16 %v859, %v858
  %v874 = vpack.c.b16 %v861, %v860
  %v875 = vpack.c.b16 %v863, %v862
  %v876 = vpack.c.b16 %v865, %v864
  %v877 = vpack.c.b16 %v867, %v866
  %v878 = vpack.c.b16 %v869, %v868
  %v879 = vpack.c.b16 %v871, %v870
  %888 = vst [vmem:[%s6] sm:$0xff] %v872
  %889 = vst [vmem:[%s6 + $0x8] sm:$0xff] %v873
  %890 = vst [vmem:[%s6 + $0x10] sm:$0xff] %v874
  %891 = vst [vmem:[%s6 + $0x18] sm:$0xff] %v875
  %892 = vst [vmem:[%s6 + $0x20] sm:$0xff] %v876
  %893 = vst [vmem:[%s6 + $0x28] sm:$0xff] %v877
  %894 = vst [vmem:[%s6 + $0x30] sm:$0xff] %v878
  %895 = vst [vmem:[%s6 + $0x38] sm:$0xff] %v879
  // Predicated region
  $region22: #{_lambda_.12} parent=0 // pred_check
    _
  $region23: #{_lambda_.12} parent=0 // pred_check_branch
    %897 = sbr.rel (0) target = $region25
  $region24: #{_lambda_.12} parent=0 // pred_region
    _
  $region25: #{_lambda_.12} parent=0 // pred_fallthru
    _
  // Predicated region
  $region26: #{_lambda_.12} parent=0 // pred_check
    _
  $region27: #{_lambda_.12} parent=0 // pred_check_branch
    %899 = sbr.rel (0) target = $region29
  $region28: #{_lambda_.12} parent=0 // pred_region
    _
  $region29: #{_lambda_.12} parent=0 // pred_fallthru
    _
  // Predicated region
  $region30: #{_lambda_.12} parent=0 // pred_check
    _
  $region31: #{_lambda_.12} parent=0 // pred_check_branch
    %901 = sbr.rel (0) target = $region33
  $region32: #{_lambda_.12} parent=0 // pred_region
    _
  $region33: #{_lambda_.12} parent=0 // pred_fallthru
    _
  // Predicated region
  $region34: #{_lambda_.12} parent=0 // pred_check
    _
  $region35: #{_lambda_.12} parent=0 // pred_check_branch
    %903 = sbr.rel (0) target = $region37
  $region36: #{_lambda_.12} parent=0 // pred_region
    _
  $region37: #{_lambda_.12} parent=0 // pred_fallthru
    _

// kernel: _lambda_.13
$region0: #{_lambda_.13}
  #allocation0 [shape = 'u32[]', space=smem, size = 0x4, offset = 0x4, fixed_abs, tag = 'smem constant byte address 0x4 - core index']
  #allocation1 [shape = 'u32[144,128]{1,0:T(1,128)}', space=vmem, size = 0x12000, scoped, tag = 'internal scratch']
  %s0 = inlined_call_operand.vmem [shape: bf16[288,128], index: 0, kind: input, shape index: {}]
  %s1 = inlined_call_operand.vmem [shape: bf16[64,288], index: 1, kind: input, shape index: {}]
  %s2 = inlined_call_operand.vmem [shape: f32[64,1], index: 2, kind: input, shape index: {}]
  %s3 = inlined_call_operand.vmem [shape: f32[64,1], index: 3, kind: input, shape index: {}]
  %s4 = inlined_call_operand.vmem [shape: bf16[64,128], index: 4, kind: output, shape index: {}]
  %s5 = sld [smem:[#allocation0]]
  $region26: #{_lambda_.13} parent=0
    _
  %s7 = ssub.s32 1, %s5
  %s8 = scalar_select 0, %s7, %s5
  // Predicated region
  $region2: #{_lambda_.13} parent=0 // pred_check
    _
  $region3: #{_lambda_.13} parent=0 // pred_check_branch
    %10 = sbr.rel (0) target = $region5
  $region4: #{_lambda_.13} parent=0 // pred_region
    _
  $region5: #{_lambda_.13} parent=0 // pred_fallthru
    _
  // Predicated region
  $region6: #{_lambda_.13} parent=0 // pred_check
    _
  $region7: #{_lambda_.13} parent=0 // pred_check_branch
    %12 = sbr.rel (0) target = $region9
  $region8: #{_lambda_.13} parent=0 // pred_region
    _
  $region9: #{_lambda_.13} parent=0 // pred_fallthru
    _
  // Predicated region
  $region10: #{_lambda_.13} parent=0 // pred_check
    _
  $region11: #{_lambda_.13} parent=0 // pred_check_branch
    %14 = sbr.rel (0) target = $region13
  $region12: #{_lambda_.13} parent=0 // pred_region
    _
  $region13: #{_lambda_.13} parent=0 // pred_fallthru
    _
  // Predicated region
  $region14: #{_lambda_.13} parent=0 // pred_check
    _
  $region15: #{_lambda_.13} parent=0 // pred_check_branch
    %16 = sbr.rel (0) target = $region17
  $region16: #{_lambda_.13} parent=0 // pred_region
    _
  $region17: #{_lambda_.13} parent=0 // pred_fallthru
    _
  %v18 = vld [vmem:[%s1] sm:$0xff]
  %v19 = vld [vmem:[%s1 + $0x8] sm:$0xf]
  %v20 = vld [vmem:[%s1 + $0xc] sm:$0xff]
  %v21 = vld [vmem:[%s1 + $0x14] sm:$0xf]
  %v22 = vld [vmem:[%s1 + $0x18] sm:$0xff]
  %v23 = vld [vmem:[%s1 + $0x20] sm:$0xf]
  %v24 = vld [vmem:[%s1 + $0x24] sm:$0xff]
  %v25 = vld [vmem:[%s1 + $0x2c] sm:$0xf]
  %v26 = vld [vmem:[%s1 + $0x30] sm:$0xff]
  %v27 = vld [vmem:[%s1 + $0x38] sm:$0xf]
  %v28 = vld [vmem:[%s1 + $0x3c] sm:$0xff]
  %v29 = vld [vmem:[%s1 + $0x44] sm:$0xf]
  %v30 = vld [vmem:[%s1 + $0x48] sm:$0xff]
  %v31 = vld [vmem:[%s1 + $0x50] sm:$0xf]
  %v32 = vld [vmem:[%s1 + $0x54] sm:$0xff]
  %v33 = vld [vmem:[%s1 + $0x5c] sm:$0xf]
  %v34 = vld [vmem:[%s0] sm:$0xf]
  %v35 = vld [vmem:[%s0 + $0x4] sm:$0xf]
  %v36 = vld [vmem:[%s0 + $0x8] sm:$0xf]
  %v37 = vld [vmem:[%s0 + $0xc] sm:$0xf]
  %v38 = vld [vmem:[%s0 + $0x10] sm:$0xf]
  %v39 = vld [vmem:[%s0 + $0x14] sm:$0xf]
  %v40 = vld [vmem:[%s0 + $0x18] sm:$0xf]
  %v41 = vld [vmem:[%s0 + $0x1c] sm:$0xf]
  %v42 = vld [vmem:[%s0 + $0x20] sm:$0xf]
  %v43 = vld [vmem:[%s0 + $0x24] sm:$0xf]
  %v44 = vld [vmem:[%s0 + $0x28] sm:$0xf]
  %v45 = vld [vmem:[%s0 + $0x2c] sm:$0xf]
  %v46 = vld [vmem:[%s0 + $0x30] sm:$0xf]
  %v47 = vld [vmem:[%s0 + $0x34] sm:$0xf]
  %v48 = vld [vmem:[%s0 + $0x38] sm:$0xf]
  %v49 = vld [vmem:[%s0 + $0x3c] sm:$0xf]
  %v50 = vld [vmem:[%s0 + $0x40] sm:$0xf]
  %v51 = vld [vmem:[%s0 + $0x44] sm:$0xf]
  %v52 = vld [vmem:[%s0 + $0x48] sm:$0xf]
  %v53 = vld [vmem:[%s0 + $0x4c] sm:$0xf]
  %v54 = vld [vmem:[%s0 + $0x50] sm:$0xf]
  %v55 = vld [vmem:[%s0 + $0x54] sm:$0xf]
  %v56 = vld [vmem:[%s0 + $0x58] sm:$0xf]
  %v57 = vld [vmem:[%s0 + $0x5c] sm:$0xf]
  %v58 = vld [vmem:[%s0 + $0x60] sm:$0xf]
  %v59 = vld [vmem:[%s0 + $0x64] sm:$0xf]
  %v60 = vld [vmem:[%s0 + $0x68] sm:$0xf]
  %v61 = vld [vmem:[%s0 + $0x6c] sm:$0xf]
  %v62 = vld [vmem:[%s0 + $0x70] sm:$0xf]
  %v63 = vld [vmem:[%s0 + $0x74] sm:$0xf]
  %v64 = vld [vmem:[%s0 + $0x78] sm:$0xf]
  %v65 = vld [vmem:[%s0 + $0x7c] sm:$0xf]
  %v66 = vld [vmem:[%s0 + $0x80] sm:$0xf]
  %v67 = vld [vmem:[%s0 + $0x84] sm:$0xf]
  %v68 = vld [vmem:[%s0 + $0x88] sm:$0xf]
  %v69 = vld [vmem:[%s0 + $0x8c] sm:$0xf]
  %v86 = vunpack.c.l.b16 %v18
  %v87 = vunpack.c.h.b16 %v18
  %v88 = vunpack.c.l.b16 %v19
  %v89 = vunpack.c.l.b16 %v20
  %v90 = vunpack.c.h.b16 %v20
  %v91 = vunpack.c.l.b16 %v21
  %v92 = vunpack.c.l.b16 %v22
  %v93 = vunpack.c.h.b16 %v22
  %v94 = vunpack.c.l.b16 %v23
  %v95 = vunpack.c.l.b16 %v24
  %v96 = vunpack.c.h.b16 %v24
  %v97 = vunpack.c.l.b16 %v25
  %v98 = vunpack.c.l.b16 %v26
  %v99 = vunpack.c.h.b16 %v26
  %v100 = vunpack.c.l.b16 %v27
  %v101 = vunpack.c.l.b16 %v28
  %v102 = vunpack.c.h.b16 %v28
  %v103 = vunpack.c.l.b16 %v29
  %v104 = vunpack.c.l.b16 %v30
  %v105 = vunpack.c.h.b16 %v30
  %v106 = vunpack.c.l.b16 %v31
  %v107 = vunpack.c.l.b16 %v32
  %v108 = vunpack.c.h.b16 %v32
  %v109 = vunpack.c.l.b16 %v33
  %v110 = vpack.c.b16 %v89, %v86
  %v111 = vpack.c.b16 %v90, %v87
  %v112 = vpack.c.b16 %v91, %v88
  %v113 = vpack.c.b16 %v95, %v92
  %v114 = vpack.c.b16 %v96, %v93
  %v115 = vpack.c.b16 %v97, %v94
  %v116 = vpack.c.b16 %v101, %v98
  %v117 = vpack.c.b16 %v102, %v99
  %v118 = vpack.c.b16 %v103, %v100
  %v119 = vpack.c.b16 %v107, %v104
  %v120 = vpack.c.b16 %v108, %v105
  %v121 = vpack.c.b16 %v109, %v106
  %v166 = vunpack.c.l.b16 %v34
  %v167 = vunpack.c.l.b16 %v35
  %v168 = vunpack.c.l.b16 %v36
  %v169 = vunpack.c.l.b16 %v37
  %v170 = vunpack.c.l.b16 %v38
  %v171 = vunpack.c.l.b16 %v39
  %v172 = vunpack.c.l.b16 %v40
  %v173 = vunpack.c.l.b16 %v41
  %v174 = vunpack.c.l.b16 %v42
  %v175 = vunpack.c.l.b16 %v43
  %v176 = vunpack.c.l.b16 %v44
  %v177 = vunpack.c.l.b16 %v45
  %v178 = vunpack.c.l.b16 %v46
  %v179 = vunpack.c.l.b16 %v47
  %v180 = vunpack.c.l.b16 %v48
  %v181 = vunpack.c.l.b16 %v49
  %v182 = vunpack.c.l.b16 %v50
  %v183 = vunpack.c.l.b16 %v51
  %v184 = vunpack.c.l.b16 %v52
  %v185 = vunpack.c.l.b16 %v53
  %v186 = vunpack.c.l.b16 %v54
  %v187 = vunpack.c.l.b16 %v55
  %v188 = vunpack.c.l.b16 %v56
  %v189 = vunpack.c.l.b16 %v57
  %v190 = vunpack.c.l.b16 %v58
  %v191 = vunpack.c.l.b16 %v59
  %v192 = vunpack.c.l.b16 %v60
  %v193 = vunpack.c.l.b16 %v61
  %v194 = vunpack.c.l.b16 %v62
  %v195 = vunpack.c.l.b16 %v63
  %v196 = vunpack.c.l.b16 %v64
  %v197 = vunpack.c.l.b16 %v65
  %v198 = vunpack.c.l.b16 %v66
  %v199 = vunpack.c.l.b16 %v67
  %v200 = vunpack.c.l.b16 %v68
  %v201 = vunpack.c.l.b16 %v69
  %v202 = vpack.c.b16 %v167, %v166
  %v203 = vpack.c.b16 %v169, %v168
  %v204 = vpack.c.b16 %v171, %v170
  %v205 = vpack.c.b16 %v173, %v172
  %v206 = vpack.c.b16 %v175, %v174
  %v207 = vpack.c.b16 %v177, %v176
  %v208 = vpack.c.b16 %v179, %v178
  %v209 = vpack.c.b16 %v181, %v180
  %v210 = vpack.c.b16 %v183, %v182
  %v211 = vpack.c.b16 %v185, %v184
  %v212 = vpack.c.b16 %v187, %v186
  %v213 = vpack.c.b16 %v189, %v188
  %v214 = vpack.c.b16 %v191, %v190
  %v215 = vpack.c.b16 %v193, %v192
  %v216 = vpack.c.b16 %v195, %v194
  %v217 = vpack.c.b16 %v197, %v196
  %v218 = vpack.c.b16 %v199, %v198
  %v219 = vpack.c.b16 %v201, %v200
  %vm238 = vcmask 261120
  %v240 = vsel %vm238, %v112, 0
  %v243 = vsel %vm238, %v115, 0
  %v246 = vsel %vm238, %v118, 0
  %v249 = vsel %vm238, %v121, 0
  %251 = vmatprep.subr.bf16.mxu0 0
  %252 = vmatpush1.bf16.msra.mxu0 %v202
  %253 = vmatprep.subr.bf16.mxu0 0
  %254 = vmatpush1.bf16.msra.mxu0 %v203
  %255 = vmatprep.subr.bf16.mxu0 0
  %256 = vmatpush1.bf16.msra.mxu0 %v204
  %257 = vmatprep.subr.bf16.mxu0 0
  %258 = vmatpush1.bf16.msra.mxu0 %v205
  %259 = vmatprep.subr.bf16.mxu0 0
  %260 = vmatpush1.bf16.msra.mxu0 %v206
  %261 = vmatprep.subr.bf16.mxu0 0
  %262 = vmatpush1.bf16.msra.mxu0 %v207
  %263 = vmatprep.subr.bf16.mxu0 0
  %264 = vmatpush1.bf16.msra.mxu0 %v208
  %265 = vmatprep.subr.bf16.mxu0 0
  %266 = vmatpush1.bf16.msra.mxu0 %v209
  %267 = vmatprep.subr.bf16.mxu0 0
  %268 = vmatpush1.bf16.msra.mxu0 %v210
  %269 = vmatprep.subr.bf16.mxu0 0
  %270 = vmatpush1.bf16.msra.mxu0 %v211
  %271 = vmatprep.subr.bf16.mxu0 0
  %272 = vmatpush1.bf16.msra.mxu0 %v212
  %273 = vmatprep.subr.bf16.mxu0 0
  %274 = vmatpush1.bf16.msra.mxu0 %v213
  %275 = vmatprep.subr.bf16.mxu0 0
  %276 = vmatpush1.bf16.msra.mxu0 %v214
  %277 = vmatprep.subr.bf16.mxu0 0
  %278 = vmatpush1.bf16.msra.mxu0 %v215
  %279 = vmatprep.subr.bf16.mxu0 0
  %280 = vmatpush1.bf16.msra.mxu0 %v216
  %281 = vmatprep.subr.bf16.mxu0 0
  %282 = vmatpush1.bf16.msra.mxu0 %v217
  %283 = vmatprep.mubr.bf16.mxu0 %v111
  %284 = vmatmul.mubr.bf16.gmra.mrb[0].mxu0 %v110
  %v285 = vpop.f32.mrb[0].mxu0
  %v286 = vadd.f32 0.0, %v285
  %v287 = vpop.f32.mrb[0].mxu0
  %v288 = vpop.f32.mrb[0].mxu0
  %v289 = vadd.f32 0.0, %v288
  %v290 = vpop.f32.mrb[0].mxu0
  %291 = vmatprep.mubr.bf16.mxu0 %v114
  %292 = vmatmul.mubr.bf16.gmra.mrb[0].mxu0 %v113
  %v293 = vpop.f32.mrb[0].mxu0
  %v294 = vadd.f32 0.0, %v293
  %v295 = vpop.f32.mrb[0].mxu0
  %v296 = vpop.f32.mrb[0].mxu0
  %v297 = vadd.f32 0.0, %v296
  %v298 = vpop.f32.mrb[0].mxu0
  %299 = vmatprep.mubr.bf16.mxu0 %v117
  %300 = vmatmul.mubr.bf16.gmra.mrb[0].mxu0 %v116
  %v301 = vpop.f32.mrb[0].mxu0
  %v302 = vadd.f32 0.0, %v301
  %v303 = vpop.f32.mrb[0].mxu0
  %v304 = vpop.f32.mrb[0].mxu0
  %v305 = vadd.f32 0.0, %v304
  %v306 = vpop.f32.mrb[0].mxu0
  %307 = vmatprep.mubr.bf16.mxu0 %v120
  %308 = vmatmul.mubr.bf16.gmra.mrb[0].mxu0 %v119
  %v309 = vpop.f32.mrb[0].mxu0
  %v310 = vadd.f32 0.0, %v309
  %v311 = vpop.f32.mrb[0].mxu0
  %v312 = vpop.f32.mrb[0].mxu0
  %v313 = vadd.f32 0.0, %v312
  %v314 = vpop.f32.mrb[0].mxu0
  %315 = vdwg.mxu0
  %316 = vmatprep.subr.bf16.mxu0 0
  %317 = vmatpush1.bf16.msra.mxu0 %v218
  %318 = vmatprep.subr.bf16.mxu0 0
  %319 = vmatpush1.bf16.msra.mxu0 %v219
  %320 = vmatprep.subr.bf16.mxu0 0
  %321 = vmatpush1.bf16.msra.mxu0 0
  %322 = vmatprep.subr.bf16.mxu0 0
  %323 = vmatpush1.bf16.msra.mxu0 0
  %324 = vmatprep.subr.bf16.mxu0 0
  %325 = vmatpush1.bf16.msra.mxu0 0
  %326 = vmatprep.subr.bf16.mxu0 0
  %327 = vmatpush1.bf16.msra.mxu0 0
  %328 = vmatprep.subr.bf16.mxu0 0
  %329 = vmatpush1.bf16.msra.mxu0 0
  %330 = vmatprep.subr.bf16.mxu0 0
  %331 = vmatpush1.bf16.msra.mxu0 0
  %332 = vmatprep.subr.bf16.mxu0 0
  %333 = vmatpush1.bf16.msra.mxu0 0
  %334 = vmatprep.subr.bf16.mxu0 0
  %335 = vmatpush1.bf16.msra.mxu0 0
  %336 = vmatprep.subr.bf16.mxu0 0
  %337 = vmatpush1.bf16.msra.mxu0 0
  %338 = vmatprep.subr.bf16.mxu0 0
  %339 = vmatpush1.bf16.msra.mxu0 0
  %340 = vmatprep.subr.bf16.mxu0 0
  %341 = vmatpush1.bf16.msra.mxu0 0
  %342 = vmatprep.subr.bf16.mxu0 0
  %343 = vmatpush1.bf16.msra.mxu0 0
  %344 = vmatprep.subr.bf16.mxu0 0
  %345 = vmatpush1.bf16.msra.mxu0 0
  %346 = vmatprep.subr.bf16.mxu0 0
  %347 = vmatpush1.bf16.msra.mxu0 0
  %348 = vmatprep.mubr.bf16.mxu0 0
  %349 = vmatmul.mubr.bf16.gmra.mrb[0].mxu0 %v240
  %v350 = vpop.f32.mrb[0].mxu0
  %v351 = vadd.f32 %v286, %v350
  %v352 = vpop.f32.mrb[0].mxu0
  %v353 = vpop.f32.mrb[0].mxu0
  %v354 = vadd.f32 %v289, %v353
  %v355 = vpop.f32.mrb[0].mxu0
  %356 = vmatprep.mubr.bf16.mxu0 0
  %357 = vmatmul.mubr.bf16.gmra.mrb[0].mxu0 %v243
  %v358 = vpop.f32.mrb[0].mxu0
  %v359 = vadd.f32 %v294, %v358
  %v360 = vpop.f32.mrb[0].mxu0
  %v361 = vpop.f32.mrb[0].mxu0
  %v362 = vadd.f32 %v297, %v361
  %v363 = vpop.f32.mrb[0].mxu0
  %364 = vmatprep.mubr.bf16.mxu0 0
  %365 = vmatmul.mubr.bf16.gmra.mrb[0].mxu0 %v246
  %v366 = vpop.f32.mrb[0].mxu0
  %v367 = vadd.f32 %v302, %v366
  %v368 = vpop.f32.mrb[0].mxu0
  %v369 = vpop.f32.mrb[0].mxu0
  %v370 = vadd.f32 %v305, %v369
  %v371 = vpop.f32.mrb[0].mxu0
  %372 = vmatprep.mubr.bf16.mxu0 0
  %373 = vmatmul.mubr.bf16.gmra.mrb[0].mxu0 %v249
  %v374 = vpop.f32.mrb[0].mxu0
  %v375 = vadd.f32 %v310, %v374
  %v376 = vpop.f32.mrb[0].mxu0
  %v377 = vpop.f32.mrb[0].mxu0
  %v378 = vadd.f32 %v313, %v377
  %v379 = vpop.f32.mrb[0].mxu0
  %380 = vdwg.mxu0
  %v381 = vld [vmem:[%s2] sm:$0xff]
  %v382 = vld [vmem:[%s2 + $0x8] sm:$0xff]
  %v383 = vld [vmem:[%s2 + $0x10] sm:$0xff]
  %v384 = vld [vmem:[%s2 + $0x18] sm:$0xff]
  %v385 = vld [vmem:[%s2 + $0x20] sm:$0xff]
  %v386 = vld [vmem:[%s2 + $0x28] sm:$0xff]
  %v387 = vld [vmem:[%s2 + $0x30] sm:$0xff]
  %v388 = vld [vmem:[%s2 + $0x38] sm:$0xff]
  %390 = vset.pattern.permute.xlu0 0
  %391 = vperm.xlu0 %390, %v381
  %v392 = vpop.permute.xlu0 %391
  %395 = vset.pattern.permute.xlu0 0
  %396 = vperm.xlu0 %395, %v382
  %v397 = vpop.permute.xlu0 %396
  %400 = vset.pattern.permute.xlu0 0
  %401 = vperm.xlu0 %400, %v383
  %v402 = vpop.permute.xlu0 %401
  %405 = vset.pattern.permute.xlu0 0
  %406 = vperm.xlu0 %405, %v384
  %v407 = vpop.permute.xlu0 %406
  %410 = vset.pattern.permute.xlu0 0
  %411 = vperm.xlu0 %410, %v385
  %v412 = vpop.permute.xlu0 %411
  %415 = vset.pattern.permute.xlu0 0
  %416 = vperm.xlu0 %415, %v386
  %v417 = vpop.permute.xlu0 %416
  %420 = vset.pattern.permute.xlu0 0
  %421 = vperm.xlu0 %420, %v387
  %v422 = vpop.permute.xlu0 %421
  %425 = vset.pattern.permute.xlu0 0
  %426 = vperm.xlu0 %425, %v388
  %v427 = vpop.permute.xlu0 %426
  %v429 = vmul.f32 %v351, %v392
  %v430 = vmul.f32 %v354, %v397
  %v431 = vmul.f32 %v359, %v402
  %v432 = vmul.f32 %v362, %v407
  %v433 = vmul.f32 %v367, %v412
  %v434 = vmul.f32 %v370, %v417
  %v435 = vmul.f32 %v375, %v422
  %v436 = vmul.f32 %v378, %v427
  %v437 = vld [vmem:[%s3] sm:$0xff]
  %v438 = vld [vmem:[%s3 + $0x8] sm:$0xff]
  %v439 = vld [vmem:[%s3 + $0x10] sm:$0xff]
  %v440 = vld [vmem:[%s3 + $0x18] sm:$0xff]
  %v441 = vld [vmem:[%s3 + $0x20] sm:$0xff]
  %v442 = vld [vmem:[%s3 + $0x28] sm:$0xff]
  %v443 = vld [vmem:[%s3 + $0x30] sm:$0xff]
  %v444 = vld [vmem:[%s3 + $0x38] sm:$0xff]
  %446 = vset.pattern.permute.xlu0 0
  %447 = vperm.xlu0 %446, %v437
  %v448 = vpop.permute.xlu0 %447
  %451 = vset.pattern.permute.xlu0 0
  %452 = vperm.xlu0 %451, %v438
  %v453 = vpop.permute.xlu0 %452
  %456 = vset.pattern.permute.xlu0 0
  %457 = vperm.xlu0 %456, %v439
  %v458 = vpop.permute.xlu0 %457
  %461 = vset.pattern.permute.xlu0 0
  %462 = vperm.xlu0 %461, %v440
  %v463 = vpop.permute.xlu0 %462
  %466 = vset.pattern.permute.xlu0 0
  %467 = vperm.xlu0 %466, %v441
  %v468 = vpop.permute.xlu0 %467
  %471 = vset.pattern.permute.xlu0 0
  %472 = vperm.xlu0 %471, %v442
  %v473 = vpop.permute.xlu0 %472
  %476 = vset.pattern.permute.xlu0 0
  %477 = vperm.xlu0 %476, %v443
  %v478 = vpop.permute.xlu0 %477
  %481 = vset.pattern.permute.xlu0 0
  %482 = vperm.xlu0 %481, %v444
  %v483 = vpop.permute.xlu0 %482
  %v485 = vadd.f32 %v429, %v448
  %v486 = vadd.f32 %v430, %v453
  %v487 = vadd.f32 %v431, %v458
  %v488 = vadd.f32 %v432, %v463
  %v489 = vadd.f32 %v433, %v468
  %v490 = vadd.f32 %v434, %v473
  %v491 = vadd.f32 %v435, %v478
  %v492 = vadd.f32 %v436, %v483
  %v493 = vmax.f32 %v485, 0.0
  %v494 = vmax.f32 %v486, 0.0
  %v495 = vmax.f32 %v487, 0.0
  %v496 = vmax.f32 %v488, 0.0
  %v497 = vmax.f32 %v489, 0.0
  %v498 = vmax.f32 %v490, 0.0
  %v499 = vmax.f32 %v491, 0.0
  %v500 = vmax.f32 %v492, 0.0
  %v501 = vpack.c.bf16 %v494, %v493
  %v502 = vpack.c.bf16 %v496, %v495
  %v503 = vpack.c.bf16 %v498, %v497
  %v504 = vpack.c.bf16 %v500, %v499
  %v509 = vunpack.c.l.b16 %v501
  %v510 = vunpack.c.h.b16 %v501
  %v511 = vunpack.c.l.b16 %v502
  %v512 = vunpack.c.h.b16 %v502
  %v513 = vunpack.c.l.b16 %v503
  %v514 = vunpack.c.h.b16 %v503
  %v515 = vunpack.c.l.b16 %v504
  %v516 = vunpack.c.h.b16 %v504
  %v517 = vpack.c.b16 %v509, %v509
  %v518 = vpack.c.b16 %v510, %v510
  %v519 = vpack.c.b16 %v511, %v511
  %v520 = vpack.c.b16 %v512, %v512
  %v521 = vpack.c.b16 %v513, %v513
  %v522 = vpack.c.b16 %v514, %v514
  %v523 = vpack.c.b16 %v515, %v515
  %v524 = vpack.c.b16 %v516, %v516
  %533 = vst [vmem:[%s4] sm:$0xf] %v517
  %534 = vst [vmem:[%s4 + $0x4] sm:$0xf] %v518
  %535 = vst [vmem:[%s4 + $0x8] sm:$0xf] %v519
  %536 = vst [vmem:[%s4 + $0xc] sm:$0xf] %v520
  %537 = vst [vmem:[%s4 + $0x10] sm:$0xf] %v521
  %538 = vst [vmem:[%s4 + $0x14] sm:$0xf] %v522
  %539 = vst [vmem:[%s4 + $0x18] sm:$0xf] %v523
  %540 = vst [vmem:[%s4 + $0x1c] sm:$0xf] %v524
  // Predicated region
  $region18: #{_lambda_.13} parent=0 // pred_check
    _
  $region19: #{_lambda_.13} parent=0 // pred_check_branch
    %542 = sbr.rel (0) target = $region21
  $region20: #{_lambda_.13} parent=0 // pred_region
    _
  $region21: #{_lambda_.13} parent=0 // pred_fallthru
    _
  // Predicated region
  $region22: #{_lambda_.13} parent=0 // pred_check
    _
  $region23: #{_lambda_.13} parent=0 // pred_check_branch
    %544 = sbr.rel (0) target = $region25
  $region24: #{_lambda_.13} parent=0 // pred_region
    _
  $region25: #{_lambda_.13} parent=0 // pred_fallthru
    _

// kernel: _lambda_.14
$region0: #{_lambda_.14}
  #allocation0 [shape = 'u32[]', space=smem, size = 0x4, offset = 0x4, fixed_abs, tag = 'smem constant byte address 0x4 - core index']
  #allocation1 [shape = 'u32[144,128]{1,0:T(1,128)}', space=vmem, size = 0x12000, scoped, tag = 'internal scratch']
  %s0 = inlined_call_operand.vmem [shape: bf16[576,128], index: 0, kind: input, shape index: {}]
  %s1 = inlined_call_operand.vmem [shape: bf16[64,576], index: 1, kind: input, shape index: {}]
  %s2 = inlined_call_operand.vmem [shape: f32[64,1], index: 2, kind: input, shape index: {}]
  %s3 = inlined_call_operand.vmem [shape: f32[64,1], index: 3, kind: input, shape index: {}]
  %s4 = inlined_call_operand.vmem [shape: f32[64,128], index: 4, kind: input, shape index: {}]
  %s5 = inlined_call_operand.hbm [shape: f32[64,128], index: 5, kind: output, shape index: {0}]
  %s6 = inlined_call_operand.vmem [shape: bf16[64,128], index: 6, kind: output, shape index: {1}]
  %7 = xla_tuple %s5, %s6
  %s8 = sld [smem:[#allocation0]]
  $region38: #{_lambda_.14} parent=0
    _
  %s10 = ssub.s32 1, %s8
  %s11 = scalar_select 0, %s10, %s8
  $region1: #{_lambda_.14} parent=0
    #allocation2 [shape = 'u8[32768]{0}', space=vmem, size = 0x8000, scoped, tag = 'output window, operand 0, single buffered']
    #allocation3 [shape = 's32[1]{0}', space=sflag, size = 0x4, scoped, tag = 'scoped memory for _lambda_.14']
    %12 = vsyncpa [#allocation3], 0
    // Predicated region
    $region2: #{_lambda_.14} parent=1 // pred_check
      _
    $region3: #{_lambda_.14} parent=1 // pred_check_branch
      %14 = sbr.rel (0) target = $region5
    $region4: #{_lambda_.14} parent=1 // pred_region
      _
    $region5: #{_lambda_.14} parent=1 // pred_fallthru
      _
    // Predicated region
    $region6: #{_lambda_.14} parent=1 // pred_check
      _
    $region7: #{_lambda_.14} parent=1 // pred_check_branch
      %16 = sbr.rel (0) target = $region9
    $region8: #{_lambda_.14} parent=1 // pred_region
      _
    $region9: #{_lambda_.14} parent=1 // pred_fallthru
      _
    // Predicated region
    $region10: #{_lambda_.14} parent=1 // pred_check
      _
    $region11: #{_lambda_.14} parent=1 // pred_check_branch
      %18 = sbr.rel (0) target = $region13
    $region12: #{_lambda_.14} parent=1 // pred_region
      _
    $region13: #{_lambda_.14} parent=1 // pred_fallthru
      _
    // Predicated region
    $region14: #{_lambda_.14} parent=1 // pred_check
      _
    $region15: #{_lambda_.14} parent=1 // pred_check_branch
      %20 = sbr.rel (0) target = $region17
    $region16: #{_lambda_.14} parent=1 // pred_region
      _
    $region17: #{_lambda_.14} parent=1 // pred_fallthru
      _
    // Predicated region
    $region18: #{_lambda_.14} parent=1 // pred_check
      _
    $region19: #{_lambda_.14} parent=1 // pred_check_branch
      %22 = sbr.rel (0) target = $region21
    $region20: #{_lambda_.14} parent=1 // pred_region
      _
    $region21: #{_lambda_.14} parent=1 // pred_fallthru
      _
    %v24 = vld [vmem:[%s1] sm:$0xff]
    %v25 = vld [vmem:[%s1 + $0x8] sm:$0xff]
    %v26 = vld [vmem:[%s1 + $0x10] sm:$0xf]
    %v27 = vld [vmem:[%s1 + $0x14] sm:$0xff]
    %v28 = vld [vmem:[%s1 + $0x1c] sm:$0xff]
    %v29 = vld [vmem:[%s1 + $0x24] sm:$0xf]
    %v30 = vld [vmem:[%s1 + $0x28] sm:$0xff]
    %v31 = vld [vmem:[%s1 + $0x30] sm:$0xff]
    %v32 = vld [vmem:[%s1 + $0x38] sm:$0xf]
    %v33 = vld [vmem:[%s1 + $0x3c] sm:$0xff]
    %v34 = vld [vmem:[%s1 + $0x44] sm:$0xff]
    %v35 = vld [vmem:[%s1 + $0x4c] sm:$0xf]
    %v36 = vld [vmem:[%s1 + $0x50] sm:$0xff]
    %v37 = vld [vmem:[%s1 + $0x58] sm:$0xff]
    %v38 = vld [vmem:[%s1 + $0x60] sm:$0xf]
    %v39 = vld [vmem:[%s1 + $0x64] sm:$0xff]
    %v40 = vld [vmem:[%s1 + $0x6c] sm:$0xff]
    %v41 = vld [vmem:[%s1 + $0x74] sm:$0xf]
    %v42 = vld [vmem:[%s1 + $0x78] sm:$0xff]
    %v43 = vld [vmem:[%s1 + $0x80] sm:$0xff]
    %v44 = vld [vmem:[%s1 + $0x88] sm:$0xf]
    %v45 = vld [vmem:[%s1 + $0x8c] sm:$0xff]
    %v46 = vld [vmem:[%s1 + $0x94] sm:$0xff]
    %v47 = vld [vmem:[%s1 + $0x9c] sm:$0xf]
    %v48 = vld [vmem:[%s0] sm:$0xf]
    %v49 = vld [vmem:[%s0 + $0x4] sm:$0xf]
    %v50 = vld [vmem:[%s0 + $0x8] sm:$0xf]
    %v51 = vld [vmem:[%s0 + $0xc] sm:$0xf]
    %v52 = vld [vmem:[%s0 + $0x10] sm:$0xf]
    %v53 = vld [vmem:[%s0 + $0x14] sm:$0xf]
    %v54 = vld [vmem:[%s0 + $0x18] sm:$0xf]
    %v55 = vld [vmem:[%s0 + $0x1c] sm:$0xf]
    %v56 = vld [vmem:[%s0 + $0x20] sm:$0xf]
    %v57 = vld [vmem:[%s0 + $0x24] sm:$0xf]
    %v58 = vld [vmem:[%s0 + $0x28] sm:$0xf]
    %v59 = vld [vmem:[%s0 + $0x2c] sm:$0xf]
    %v60 = vld [vmem:[%s0 + $0x30] sm:$0xf]
    %v61 = vld [vmem:[%s0 + $0x34] sm:$0xf]
    %v62 = vld [vmem:[%s0 + $0x38] sm:$0xf]
    %v63 = vld [vmem:[%s0 + $0x3c] sm:$0xf]
    %v64 = vld [vmem:[%s0 + $0x40] sm:$0xf]
    %v65 = vld [vmem:[%s0 + $0x44] sm:$0xf]
    %v66 = vld [vmem:[%s0 + $0x48] sm:$0xf]
    %v67 = vld [vmem:[%s0 + $0x4c] sm:$0xf]
    %v68 = vld [vmem:[%s0 + $0x50] sm:$0xf]
    %v69 = vld [vmem:[%s0 + $0x54] sm:$0xf]
    %v70 = vld [vmem:[%s0 + $0x58] sm:$0xf]
    %v71 = vld [vmem:[%s0 + $0x5c] sm:$0xf]
    %v72 = vld [vmem:[%s0 + $0x60] sm:$0xf]
    %v73 = vld [vmem:[%s0 + $0x64] sm:$0xf]
    %v74 = vld [vmem:[%s0 + $0x68] sm:$0xf]
    %v75 = vld [vmem:[%s0 + $0x6c] sm:$0xf]
    %v76 = vld [vmem:[%s0 + $0x70] sm:$0xf]
    %v77 = vld [vmem:[%s0 + $0x74] sm:$0xf]
    %v78 = vld [vmem:[%s0 + $0x78] sm:$0xf]
    %v79 = vld [vmem:[%s0 + $0x7c] sm:$0xf]
    %v80 = vld [vmem:[%s0 + $0x80] sm:$0xf]
    %v81 = vld [vmem:[%s0 + $0x84] sm:$0xf]
    %v82 = vld [vmem:[%s0 + $0x88] sm:$0xf]
    %v83 = vld [vmem:[%s0 + $0x8c] sm:$0xf]
    %v84 = vld [vmem:[%s0 + $0x90] sm:$0xf]
    %v85 = vld [vmem:[%s0 + $0x94] sm:$0xf]
    %v86 = vld [vmem:[%s0 + $0x98] sm:$0xf]
    %v87 = vld [vmem:[%s0 + $0x9c] sm:$0xf]
    %v88 = vld [vmem:[%s0 + $0xa0] sm:$0xf]
    %v89 = vld [vmem:[%s0 + $0xa4] sm:$0xf]
    %v90 = vld [vmem:[%s0 + $0xa8] sm:$0xf]
    %v91 = vld [vmem:[%s0 + $0xac] sm:$0xf]
    %v92 = vld [vmem:[%s0 + $0xb0] sm:$0xf]
    %v93 = vld [vmem:[%s0 + $0xb4] sm:$0xf]
    %v94 = vld [vmem:[%s0 + $0xb8] sm:$0xf]
    %v95 = vld [vmem:[%s0 + $0xbc] sm:$0xf]
    %v96 = vld [vmem:[%s0 + $0xc0] sm:$0xf]
    %v97 = vld [vmem:[%s0 + $0xc4] sm:$0xf]
    %v98 = vld [vmem:[%s0 + $0xc8] sm:$0xf]
    %v99 = vld [vmem:[%s0 + $0xcc] sm:$0xf]
    %v100 = vld [vmem:[%s0 + $0xd0] sm:$0xf]
    %v101 = vld [vmem:[%s0 + $0xd4] sm:$0xf]
    %v102 = vld [vmem:[%s0 + $0xd8] sm:$0xf]
    %v103 = vld [vmem:[%s0 + $0xdc] sm:$0xf]
    %v104 = vld [vmem:[%s0 + $0xe0] sm:$0xf]
    %v105 = vld [vmem:[%s0 + $0xe4] sm:$0xf]
    %v106 = vld [vmem:[%s0 + $0xe8] sm:$0xf]
    %v107 = vld [vmem:[%s0 + $0xec] sm:$0xf]
    %v108 = vld [vmem:[%s0 + $0xf0] sm:$0xf]
    %v109 = vld [vmem:[%s0 + $0xf4] sm:$0xf]
    %v110 = vld [vmem:[%s0 + $0xf8] sm:$0xf]
    %v111 = vld [vmem:[%s0 + $0xfc] sm:$0xf]
    %v112 = vld [vmem:[%s0 + $0x100] sm:$0xf]
    %v113 = vld [vmem:[%s0 + $0x104] sm:$0xf]
    %v114 = vld [vmem:[%s0 + $0x108] sm:$0xf]
    %v115 = vld [vmem:[%s0 + $0x10c] sm:$0xf]
    %v116 = vld [vmem:[%s0 + $0x110] sm:$0xf]
    %v117 = vld [vmem:[%s0 + $0x114] sm:$0xf]
    %v118 = vld [vmem:[%s0 + $0x118] sm:$0xf]
    %v119 = vld [vmem:[%s0 + $0x11c] sm:$0xf]
    %v120 = vld [vmem:[%s4] sm:$0xff]
    %v121 = vld [vmem:[%s4 + $0x8] sm:$0xff]
    %v122 = vld [vmem:[%s4 + $0x10] sm:$0xff]
    %v123 = vld [vmem:[%s4 + $0x18] sm:$0xff]
    %v124 = vld [vmem:[%s4 + $0x20] sm:$0xff]
    %v125 = vld [vmem:[%s4 + $0x28] sm:$0xff]
    %v126 = vld [vmem:[%s4 + $0x30] sm:$0xff]
    %v127 = vld [vmem:[%s4 + $0x38] sm:$0xff]
    %v152 = vunpack.c.l.b16 %v24
    %v153 = vunpack.c.h.b16 %v24
    %v154 = vunpack.c.l.b16 %v25
    %v155 = vunpack.c.h.b16 %v25
    %v156 = vunpack.c.l.b16 %v26
    %v157 = vunpack.c.l.b16 %v27
    %v158 = vunpack.c.h.b16 %v27
    %v159 = vunpack.c.l.b16 %v28
    %v160 = vunpack.c.h.b16 %v28
    %v161 = vunpack.c.l.b16 %v29
    %v162 = vunpack.c.l.b16 %v30
    %v163 = vunpack.c.h.b16 %v30
    %v164 = vunpack.c.l.b16 %v31
    %v165 = vunpack.c.h.b16 %v31
    %v166 = vunpack.c.l.b16 %v32
    %v167 = vunpack.c.l.b16 %v33
    %v168 = vunpack.c.h.b16 %v33
    %v169 = vunpack.c.l.b16 %v34
    %v170 = vunpack.c.h.b16 %v34
    %v171 = vunpack.c.l.b16 %v35
    %v172 = vunpack.c.l.b16 %v36
    %v173 = vunpack.c.h.b16 %v36
    %v174 = vunpack.c.l.b16 %v37
    %v175 = vunpack.c.h.b16 %v37
    %v176 = vunpack.c.l.b16 %v38
    %v177 = vunpack.c.l.b16 %v39
    %v178 = vunpack.c.h.b16 %v39
    %v179 = vunpack.c.l.b16 %v40
    %v180 = vunpack.c.h.b16 %v40
    %v181 = vunpack.c.l.b16 %v41
    %v182 = vunpack.c.l.b16 %v42
    %v183 = vunpack.c.h.b16 %v42
    %v184 = vunpack.c.l.b16 %v43
    %v185 = vunpack.c.h.b16 %v43
    %v186 = vunpack.c.l.b16 %v44
    %v187 = vunpack.c.l.b16 %v45
    %v188 = vunpack.c.h.b16 %v45
    %v189 = vunpack.c.l.b16 %v46
    %v190 = vunpack.c.h.b16 %v46
    %v191 = vunpack.c.l.b16 %v47
    %v192 = vpack.c.b16 %v157, %v152
    %v193 = vpack.c.b16 %v158, %v153
    %v194 = vpack.c.b16 %v159, %v154
    %v195 = vpack.c.b16 %v160, %v155
    %v196 = vpack.c.b16 %v161, %v156
    %v197 = vpack.c.b16 %v167, %v162
    %v198 = vpack.c.b16 %v168, %v163
    %v199 = vpack.c.b16 %v169, %v164
    %v200 = vpack.c.b16 %v170, %v165
    %v201 = vpack.c.b16 %v171, %v166
    %v202 = vpack.c.b16 %v177, %v172
    %v203 = vpack.c.b16 %v178, %v173
    %v204 = vpack.c.b16 %v179, %v174
    %v205 = vpack.c.b16 %v180, %v175
    %v206 = vpack.c.b16 %v181, %v176
    %v207 = vpack.c.b16 %v187, %v182
    %v208 = vpack.c.b16 %v188, %v183
    %v209 = vpack.c.b16 %v189, %v184
    %v210 = vpack.c.b16 %v190, %v185
    %v211 = vpack.c.b16 %v191, %v186
    %v300 = vunpack.c.l.b16 %v48
    %v301 = vunpack.c.l.b16 %v49
    %v302 = vunpack.c.l.b16 %v50
    %v303 = vunpack.c.l.b16 %v51
    %v304 = vunpack.c.l.b16 %v52
    %v305 = vunpack.c.l.b16 %v53
    %v306 = vunpack.c.l.b16 %v54
    %v307 = vunpack.c.l.b16 %v55
    %v308 = vunpack.c.l.b16 %v56
    %v309 = vunpack.c.l.b16 %v57
    %v310 = vunpack.c.l.b16 %v58
    %v311 = vunpack.c.l.b16 %v59
    %v312 = vunpack.c.l.b16 %v60
    %v313 = vunpack.c.l.b16 %v61
    %v314 = vunpack.c.l.b16 %v62
    %v315 = vunpack.c.l.b16 %v63
    %v316 = vunpack.c.l.b16 %v64
    %v317 = vunpack.c.l.b16 %v65
    %v318 = vunpack.c.l.b16 %v66
    %v319 = vunpack.c.l.b16 %v67
    %v320 = vunpack.c.l.b16 %v68
    %v321 = vunpack.c.l.b16 %v69
    %v322 = vunpack.c.l.b16 %v70
    %v323 = vunpack.c.l.b16 %v71
    %v324 = vunpack.c.l.b16 %v72
    %v325 = vunpack.c.l.b16 %v73
    %v326 = vunpack.c.l.b16 %v74
    %v327 = vunpack.c.l.b16 %v75
    %v328 = vunpack.c.l.b16 %v76
    %v329 = vunpack.c.l.b16 %v77
    %v330 = vunpack.c.l.b16 %v78
    %v331 = vunpack.c.l.b16 %v79
    %v332 = vunpack.c.l.b16 %v80
    %v333 = vunpack.c.l.b16 %v81
    %v334 = vunpack.c.l.b16 %v82
    %v335 = vunpack.c.l.b16 %v83
    %v336 = vunpack.c.l.b16 %v84
    %v337 = vunpack.c.l.b16 %v85
    %v338 = vunpack.c.l.b16 %v86
    %v339 = vunpack.c.l.b16 %v87
    %v340 = vunpack.c.l.b16 %v88
    %v341 = vunpack.c.l.b16 %v89
    %v342 = vunpack.c.l.b16 %v90
    %v343 = vunpack.c.l.b16 %v91
    %v344 = vunpack.c.l.b16 %v92
    %v345 = vunpack.c.l.b16 %v93
    %v346 = vunpack.c.l.b16 %v94
    %v347 = vunpack.c.l.b16 %v95
    %v348 = vunpack.c.l.b16 %v96
    %v349 = vunpack.c.l.b16 %v97
    %v350 = vunpack.c.l.b16 %v98
    %v351 = vunpack.c.l.b16 %v99
    %v352 = vunpack.c.l.b16 %v100
    %v353 = vunpack.c.l.b16 %v101
    %v354 = vunpack.c.l.b16 %v102
    %v355 = vunpack.c.l.b16 %v103
    %v356 = vunpack.c.l.b16 %v104
    %v357 = vunpack.c.l.b16 %v105
    %v358 = vunpack.c.l.b16 %v106
    %v359 = vunpack.c.l.b16 %v107
    %v360 = vunpack.c.l.b16 %v108
    %v361 = vunpack.c.l.b16 %v109
    %v362 = vunpack.c.l.b16 %v110
    %v363 = vunpack.c.l.b16 %v111
    %v364 = vunpack.c.l.b16 %v112
    %v365 = vunpack.c.l.b16 %v113
    %v366 = vunpack.c.l.b16 %v114
    %v367 = vunpack.c.l.b16 %v115
    %v368 = vunpack.c.l.b16 %v116
    %v369 = vunpack.c.l.b16 %v117
    %v370 = vunpack.c.l.b16 %v118
    %v371 = vunpack.c.l.b16 %v119
    %v372 = vpack.c.b16 %v301, %v300
    %v373 = vpack.c.b16 %v303, %v302
    %v374 = vpack.c.b16 %v305, %v304
    %v375 = vpack.c.b16 %v307, %v306
    %v376 = vpack.c.b16 %v309, %v308
    %v377 = vpack.c.b16 %v311, %v310
    %v378 = vpack.c.b16 %v313, %v312
    %v379 = vpack.c.b16 %v315, %v314
    %v380 = vpack.c.b16 %v317, %v316
    %v381 = vpack.c.b16 %v319, %v318
    %v382 = vpack.c.b16 %v321, %v320
    %v383 = vpack.c.b16 %v323, %v322
    %v384 = vpack.c.b16 %v325, %v324
    %v385 = vpack.c.b16 %v327, %v326
    %v386 = vpack.c.b16 %v329, %v328
    %v387 = vpack.c.b16 %v331, %v330
    %v388 = vpack.c.b16 %v333, %v332
    %v389 = vpack.c.b16 %v335, %v334
    %v390 = vpack.c.b16 %v337, %v336
    %v391 = vpack.c.b16 %v339, %v338
    %v392 = vpack.c.b16 %v341, %v340
    %v393 = vpack.c.b16 %v343, %v342
    %v394 = vpack.c.b16 %v345, %v344
    %v395 = vpack.c.b16 %v347, %v346
    %v396 = vpack.c.b16 %v349, %v348
    %v397 = vpack.c.b16 %v351, %v350
    %v398 = vpack.c.b16 %v353, %v352
    %v399 = vpack.c.b16 %v355, %v354
    %v400 = vpack.c.b16 %v357, %v356
    %v401 = vpack.c.b16 %v359, %v358
    %v402 = vpack.c.b16 %v361, %v360
    %v403 = vpack.c.b16 %v363, %v362
    %v404 = vpack.c.b16 %v365, %v364
    %v405 = vpack.c.b16 %v367, %v366
    %v406 = vpack.c.b16 %v369, %v368
    %v407 = vpack.c.b16 %v371, %v370
    %vm444 = vcmask 523264
    %v446 = vsel %vm444, %v196, 0
    %v449 = vsel %vm444, %v201, 0
    %v452 = vsel %vm444, %v206, 0
    %v455 = vsel %vm444, %v211, 0
    %457 = vmatprep.subr.bf16.mxu0 0
    %458 = vmatpush1.bf16.msra.mxu0 %v372
    %459 = vmatprep.subr.bf16.mxu0 0
    %460 = vmatpush1.bf16.msra.mxu0 %v373
    %461 = vmatprep.subr.bf16.mxu0 0
    %462 = vmatpush1.bf16.msra.mxu0 %v374
    %463 = vmatprep.subr.bf16.mxu0 0
    %464 = vmatpush1.bf16.msra.mxu0 %v375
    %465 = vmatprep.subr.bf16.mxu0 0
    %466 = vmatpush1.bf16.msra.mxu0 %v376
    %467 = vmatprep.subr.bf16.mxu0 0
    %468 = vmatpush1.bf16.msra.mxu0 %v377
    %469 = vmatprep.subr.bf16.mxu0 0
    %470 = vmatpush1.bf16.msra.mxu0 %v378
    %471 = vmatprep.subr.bf16.mxu0 0
    %472 = vmatpush1.bf16.msra.mxu0 %v379
    %473 = vmatprep.subr.bf16.mxu0 0
    %474 = vmatpush1.bf16.msra.mxu0 %v380
    %475 = vmatprep.subr.bf16.mxu0 0
    %476 = vmatpush1.bf16.msra.mxu0 %v381
    %477 = vmatprep.subr.bf16.mxu0 0
    %478 = vmatpush1.bf16.msra.mxu0 %v382
    %479 = vmatprep.subr.bf16.mxu0 0
    %480 = vmatpush1.bf16.msra.mxu0 %v383
    %481 = vmatprep.subr.bf16.mxu0 0
    %482 = vmatpush1.bf16.msra.mxu0 %v384
    %483 = vmatprep.subr.bf16.mxu0 0
    %484 = vmatpush1.bf16.msra.mxu0 %v385
    %485 = vmatprep.subr.bf16.mxu0 0
    %486 = vmatpush1.bf16.msra.mxu0 %v386
    %487 = vmatprep.subr.bf16.mxu0 0
    %488 = vmatpush1.bf16.msra.mxu0 %v387
    %489 = vmatprep.mubr.bf16.mxu0 %v193
    %490 = vmatmul.mubr.bf16.gmra.mrb[0].mxu0 %v192
    %v491 = vpop.f32.mrb[0].mxu0
    %v492 = vadd.f32 %v120, %v491
    %v493 = vpop.f32.mrb[0].mxu0
    %v494 = vpop.f32.mrb[0].mxu0
    %v495 = vadd.f32 %v121, %v494
    %v496 = vpop.f32.mrb[0].mxu0
    %497 = vmatprep.mubr.bf16.mxu0 %v198
    %498 = vmatmul.mubr.bf16.gmra.mrb[0].mxu0 %v197
    %v499 = vpop.f32.mrb[0].mxu0
    %v500 = vadd.f32 %v122, %v499
    %v501 = vpop.f32.mrb[0].mxu0
    %v502 = vpop.f32.mrb[0].mxu0
    %v503 = vadd.f32 %v123, %v502
    %v504 = vpop.f32.mrb[0].mxu0
    %505 = vmatprep.mubr.bf16.mxu0 %v203
    %506 = vmatmul.mubr.bf16.gmra.mrb[0].mxu0 %v202
    %v507 = vpop.f32.mrb[0].mxu0
    %v508 = vadd.f32 %v124, %v507
    %v509 = vpop.f32.mrb[0].mxu0
    %v510 = vpop.f32.mrb[0].mxu0
    %v511 = vadd.f32 %v125, %v510
    %v512 = vpop.f32.mrb[0].mxu0
    %513 = vmatprep.mubr.bf16.mxu0 %v208
    %514 = vmatmul.mubr.bf16.gmra.mrb[0].mxu0 %v207
    %v515 = vpop.f32.mrb[0].mxu0
    %v516 = vadd.f32 %v126, %v515
    %v517 = vpop.f32.mrb[0].mxu0
    %v518 = vpop.f32.mrb[0].mxu0
    %v519 = vadd.f32 %v127, %v518
    %v520 = vpop.f32.mrb[0].mxu0
    %521 = vdwg.mxu0
    %522 = vmatprep.subr.bf16.mxu0 0
    %523 = vmatpush1.bf16.msra.mxu0 %v388
    %524 = vmatprep.subr.bf16.mxu0 0
    %525 = vmatpush1.bf16.msra.mxu0 %v389
    %526 = vmatprep.subr.bf16.mxu0 0
    %527 = vmatpush1.bf16.msra.mxu0 %v390
    %528 = vmatprep.subr.bf16.mxu0 0
    %529 = vmatpush1.bf16.msra.mxu0 %v391
    %530 = vmatprep.subr.bf16.mxu0 0
    %531 = vmatpush1.bf16.msra.mxu0 %v392
    %532 = vmatprep.subr.bf16.mxu0 0
    %533 = vmatpush1.bf16.msra.mxu0 %v393
    %534 = vmatprep.subr.bf16.mxu0 0
    %535 = vmatpush1.bf16.msra.mxu0 %v394
    %536 = vmatprep.subr.bf16.mxu0 0
    %537 = vmatpush1.bf16.msra.mxu0 %v395
    %538 = vmatprep.subr.bf16.mxu0 0
    %539 = vmatpush1.bf16.msra.mxu0 %v396
    %540 = vmatprep.subr.bf16.mxu0 0
    %541 = vmatpush1.bf16.msra.mxu0 %v397
    %542 = vmatprep.subr.bf16.mxu0 0
    %543 = vmatpush1.bf16.msra.mxu0 %v398
    %544 = vmatprep.subr.bf16.mxu0 0
    %545 = vmatpush1.bf16.msra.mxu0 %v399
    %546 = vmatprep.subr.bf16.mxu0 0
    %547 = vmatpush1.bf16.msra.mxu0 %v400
    %548 = vmatprep.subr.bf16.mxu0 0
    %549 = vmatpush1.bf16.msra.mxu0 %v401
    %550 = vmatprep.subr.bf16.mxu0 0
    %551 = vmatpush1.bf16.msra.mxu0 %v402
    %552 = vmatprep.subr.bf16.mxu0 0
    %553 = vmatpush1.bf16.msra.mxu0 %v403
    %554 = vmatprep.mubr.bf16.mxu0 %v195
    %555 = vmatmul.mubr.bf16.gmra.mrb[0].mxu0 %v194
    %v556 = vpop.f32.mrb[0].mxu0
    %v557 = vadd.f32 %v492, %v556
    %v558 = vpop.f32.mrb[0].mxu0
    %v559 = vpop.f32.mrb[0].mxu0
    %v560 = vadd.f32 %v495, %v559
    %v561 = vpop.f32.mrb[0].mxu0
    %562 = vmatprep.mubr.bf16.mxu0 %v200
    %563 = vmatmul.mubr.bf16.gmra.mrb[0].mxu0 %v199
    %v564 = vpop.f32.mrb[0].mxu0
    %v565 = vadd.f32 %v500, %v564
    %v566 = vpop.f32.mrb[0].mxu0
    %v567 = vpop.f32.mrb[0].mxu0
    %v568 = vadd.f32 %v503, %v567
    %v569 = vpop.f32.mrb[0].mxu0
    %570 = vmatprep.mubr.bf16.mxu0 %v205
    %571 = vmatmul.mubr.bf16.gmra.mrb[0].mxu0 %v204
    %v572 = vpop.f32.mrb[0].mxu0
    %v573 = vadd.f32 %v508, %v572
    %v574 = vpop.f32.mrb[0].mxu0
    %v575 = vpop.f32.mrb[0].mxu0
    %v576 = vadd.f32 %v511, %v575
    %v577 = vpop.f32.mrb[0].mxu0
    %578 = vmatprep.mubr.bf16.mxu0 %v210
    %579 = vmatmul.mubr.bf16.gmra.mrb[0].mxu0 %v209
    %v580 = vpop.f32.mrb[0].mxu0
    %v581 = vadd.f32 %v516, %v580
    %v582 = vpop.f32.mrb[0].mxu0
    %v583 = vpop.f32.mrb[0].mxu0
    %v584 = vadd.f32 %v519, %v583
    %v585 = vpop.f32.mrb[0].mxu0
    %586 = vdwg.mxu0
    %587 = vmatprep.subr.bf16.mxu0 0
    %588 = vmatpush1.bf16.msra.mxu0 %v404
    %589 = vmatprep.subr.bf16.mxu0 0
    %590 = vmatpush1.bf16.msra.mxu0 %v405
    %591 = vmatprep.subr.bf16.mxu0 0
    %592 = vmatpush1.bf16.msra.mxu0 %v406
    %593 = vmatprep.subr.bf16.mxu0 0
    %594 = vmatpush1.bf16.msra.mxu0 %v407
    %595 = vmatprep.subr.bf16.mxu0 0
    %596 = vmatpush1.bf16.msra.mxu0 0
    %597 = vmatprep.subr.bf16.mxu0 0
    %598 = vmatpush1.bf16.msra.mxu0 0
    %599 = vmatprep.subr.bf16.mxu0 0
    %600 = vmatpush1.bf16.msra.mxu0 0
    %601 = vmatprep.subr.bf16.mxu0 0
    %602 = vmatpush1.bf16.msra.mxu0 0
    %603 = vmatprep.subr.bf16.mxu0 0
    %604 = vmatpush1.bf16.msra.mxu0 0
    %605 = vmatprep.subr.bf16.mxu0 0
    %606 = vmatpush1.bf16.msra.mxu0 0
    %607 = vmatprep.subr.bf16.mxu0 0
    %608 = vmatpush1.bf16.msra.mxu0 0
    %609 = vmatprep.subr.bf16.mxu0 0
    %610 = vmatpush1.bf16.msra.mxu0 0
    %611 = vmatprep.subr.bf16.mxu0 0
    %612 = vmatpush1.bf16.msra.mxu0 0
    %613 = vmatprep.subr.bf16.mxu0 0
    %614 = vmatpush1.bf16.msra.mxu0 0
    %615 = vmatprep.subr.bf16.mxu0 0
    %616 = vmatpush1.bf16.msra.mxu0 0
    %617 = vmatprep.subr.bf16.mxu0 0
    %618 = vmatpush1.bf16.msra.mxu0 0
    %619 = vmatprep.mubr.bf16.mxu0 0
    %620 = vmatmul.mubr.bf16.gmra.mrb[0].mxu0 %v446
    %v621 = vpop.f32.mrb[0].mxu0
    %v622 = vadd.f32 %v557, %v621
    %v623 = vpop.f32.mrb[0].mxu0
    %v624 = vpop.f32.mrb[0].mxu0
    %v625 = vadd.f32 %v560, %v624
    %v626 = vpop.f32.mrb[0].mxu0
    %627 = vmatprep.mubr.bf16.mxu0 0
    %628 = vmatmul.mubr.bf16.gmra.mrb[0].mxu0 %v449
    %v629 = vpop.f32.mrb[0].mxu0
    %v630 = vadd.f32 %v565, %v629
    %v631 = vpop.f32.mrb[0].mxu0
    %v632 = vpop.f32.mrb[0].mxu0
    %v633 = vadd.f32 %v568, %v632
    %v634 = vpop.f32.mrb[0].mxu0
    %635 = vmatprep.mubr.bf16.mxu0 0
    %636 = vmatmul.mubr.bf16.gmra.mrb[0].mxu0 %v452
    %v637 = vpop.f32.mrb[0].mxu0
    %v638 = vadd.f32 %v573, %v637
    %v639 = vpop.f32.mrb[0].mxu0
    %v640 = vpop.f32.mrb[0].mxu0
    %v641 = vadd.f32 %v576, %v640
    %v642 = vpop.f32.mrb[0].mxu0
    %643 = vmatprep.mubr.bf16.mxu0 0
    %644 = vmatmul.mubr.bf16.gmra.mrb[0].mxu0 %v455
    %v645 = vpop.f32.mrb[0].mxu0
    %v646 = vadd.f32 %v581, %v645
    %v647 = vpop.f32.mrb[0].mxu0
    %v648 = vpop.f32.mrb[0].mxu0
    %v649 = vadd.f32 %v584, %v648
    %v650 = vpop.f32.mrb[0].mxu0
    %651 = vdwg.mxu0
    %v652 = vld [vmem:[%s2] sm:$0xff]
    %v653 = vld [vmem:[%s2 + $0x8] sm:$0xff]
    %v654 = vld [vmem:[%s2 + $0x10] sm:$0xff]
    %v655 = vld [vmem:[%s2 + $0x18] sm:$0xff]
    %v656 = vld [vmem:[%s2 + $0x20] sm:$0xff]
    %v657 = vld [vmem:[%s2 + $0x28] sm:$0xff]
    %v658 = vld [vmem:[%s2 + $0x30] sm:$0xff]
    %v659 = vld [vmem:[%s2 + $0x38] sm:$0xff]
    %661 = vset.pattern.permute.xlu0 0
    %662 = vperm.xlu0 %661, %v652
    %v663 = vpop.permute.xlu0 %662
    %666 = vset.pattern.permute.xlu0 0
    %667 = vperm.xlu0 %666, %v653
    %v668 = vpop.permute.xlu0 %667
    %671 = vset.pattern.permute.xlu0 0
    %672 = vperm.xlu0 %671, %v654
    %v673 = vpop.permute.xlu0 %672
    %676 = vset.pattern.permute.xlu0 0
    %677 = vperm.xlu0 %676, %v655
    %v678 = vpop.permute.xlu0 %677
    %681 = vset.pattern.permute.xlu0 0
    %682 = vperm.xlu0 %681, %v656
    %v683 = vpop.permute.xlu0 %682
    %686 = vset.pattern.permute.xlu0 0
    %687 = vperm.xlu0 %686, %v657
    %v688 = vpop.permute.xlu0 %687
    %691 = vset.pattern.permute.xlu0 0
    %692 = vperm.xlu0 %691, %v658
    %v693 = vpop.permute.xlu0 %692
    %696 = vset.pattern.permute.xlu0 0
    %697 = vperm.xlu0 %696, %v659
    %v698 = vpop.permute.xlu0 %697
    %v700 = vmul.f32 %v622, %v663
    %v701 = vmul.f32 %v625, %v668
    %v702 = vmul.f32 %v630, %v673
    %v703 = vmul.f32 %v633, %v678
    %v704 = vmul.f32 %v638, %v683
    %v705 = vmul.f32 %v641, %v688
    %v706 = vmul.f32 %v646, %v693
    %v707 = vmul.f32 %v649, %v698
    %v708 = vld [vmem:[%s3] sm:$0xff]
    %v709 = vld [vmem:[%s3 + $0x8] sm:$0xff]
    %v710 = vld [vmem:[%s3 + $0x10] sm:$0xff]
    %v711 = vld [vmem:[%s3 + $0x18] sm:$0xff]
    %v712 = vld [vmem:[%s3 + $0x20] sm:$0xff]
    %v713 = vld [vmem:[%s3 + $0x28] sm:$0xff]
    %v714 = vld [vmem:[%s3 + $0x30] sm:$0xff]
    %v715 = vld [vmem:[%s3 + $0x38] sm:$0xff]
    %717 = vset.pattern.permute.xlu0 0
    %718 = vperm.xlu0 %717, %v708
    %v719 = vpop.permute.xlu0 %718
    %722 = vset.pattern.permute.xlu0 0
    %723 = vperm.xlu0 %722, %v709
    %v724 = vpop.permute.xlu0 %723
    %727 = vset.pattern.permute.xlu0 0
    %728 = vperm.xlu0 %727, %v710
    %v729 = vpop.permute.xlu0 %728
    %732 = vset.pattern.permute.xlu0 0
    %733 = vperm.xlu0 %732, %v711
    %v734 = vpop.permute.xlu0 %733
    %737 = vset.pattern.permute.xlu0 0
    %738 = vperm.xlu0 %737, %v712
    %v739 = vpop.permute.xlu0 %738
    %742 = vset.pattern.permute.xlu0 0
    %743 = vperm.xlu0 %742, %v713
    %v744 = vpop.permute.xlu0 %743
    %747 = vset.pattern.permute.xlu0 0
    %748 = vperm.xlu0 %747, %v714
    %v749 = vpop.permute.xlu0 %748
    %752 = vset.pattern.permute.xlu0 0
    %753 = vperm.xlu0 %752, %v715
    %v754 = vpop.permute.xlu0 %753
    %v756 = vadd.f32 %v700, %v719
    %v757 = vadd.f32 %v701, %v724
    %v758 = vadd.f32 %v702, %v729
    %v759 = vadd.f32 %v703, %v734
    %v760 = vadd.f32 %v704, %v739
    %v761 = vadd.f32 %v705, %v744
    %v762 = vadd.f32 %v706, %v749
    %v763 = vadd.f32 %v707, %v754
    %v764 = vmax.f32 %v756, 0.0
    %v765 = vmax.f32 %v757, 0.0
    %v766 = vmax.f32 %v758, 0.0
    %v767 = vmax.f32 %v759, 0.0
    %v768 = vmax.f32 %v760, 0.0
    %v769 = vmax.f32 %v761, 0.0
    %v770 = vmax.f32 %v762, 0.0
    %v771 = vmax.f32 %v763, 0.0
    %v772 = vpack.c.bf16 %v765, %v764
    %v773 = vpack.c.bf16 %v767, %v766
    %v774 = vpack.c.bf16 %v769, %v768
    %v775 = vpack.c.bf16 %v771, %v770
    %776 = vst [vmem:[#allocation2] sm:$0xff] %v622
    %777 = vst [vmem:[#allocation2 + $0x8] sm:$0xff] %v625
    %778 = vst [vmem:[#allocation2 + $0x10] sm:$0xff] %v630
    %779 = vst [vmem:[#allocation2 + $0x18] sm:$0xff] %v633
    %780 = vst [vmem:[#allocation2 + $0x20] sm:$0xff] %v638
    %781 = vst [vmem:[#allocation2 + $0x28] sm:$0xff] %v641
    %782 = vst [vmem:[#allocation2 + $0x30] sm:$0xff] %v646
    %783 = vst [vmem:[#allocation2 + $0x38] sm:$0xff] %v649
    %v788 = vunpack.c.l.b16 %v772
    %v789 = vunpack.c.h.b16 %v772
    %v790 = vunpack.c.l.b16 %v773
    %v791 = vunpack.c.h.b16 %v773
    %v792 = vunpack.c.l.b16 %v774
    %v793 = vunpack.c.h.b16 %v774
    %v794 = vunpack.c.l.b16 %v775
    %v795 = vunpack.c.h.b16 %v775
    %v796 = vpack.c.b16 %v788, %v788
    %v797 = vpack.c.b16 %v789, %v789
    %v798 = vpack.c.b16 %v790, %v790
    %v799 = vpack.c.b16 %v791, %v791
    %v800 = vpack.c.b16 %v792, %v792
    %v801 = vpack.c.b16 %v793, %v793
    %v802 = vpack.c.b16 %v794, %v794
    %v803 = vpack.c.b16 %v795, %v795
    %812 = vst [vmem:[%s6] sm:$0xf] %v796
    %813 = vst [vmem:[%s6 + $0x4] sm:$0xf] %v797
    %814 = vst [vmem:[%s6 + $0x8] sm:$0xf] %v798
    %815 = vst [vmem:[%s6 + $0xc] sm:$0xf] %v799
    %816 = vst [vmem:[%s6 + $0x10] sm:$0xf] %v800
    %817 = vst [vmem:[%s6 + $0x14] sm:$0xf] %v801
    %818 = vst [vmem:[%s6 + $0x18] sm:$0xf] %v802
    %819 = vst [vmem:[%s6 + $0x1c] sm:$0xf] %v803
    // Predicated region
    $region22: #{_lambda_.14} parent=1 // pred_check
      _
    $region23: #{_lambda_.14} parent=1 // pred_check_branch
      %821 = sbr.rel (0) target = $region25
    $region24: #{_lambda_.14} parent=1 // pred_region
      %s823 = ssub.s32 1024, 1024
      %824 = vsyncadd [#allocation3], %s823
      %s825 = sshll.u32 [#allocation2], 4
      %s826 = int_to_ptr.vmem [resolvable:$true] %s825
      %831 = dma.vmem_to_hbm [thread:$0]  %s826, 1024, %s5, [#allocation3], 128, 128, 8
    $region25: #{_lambda_.14} parent=1 // pred_fallthru
      _
    // Predicated region
    $region26: #{_lambda_.14} parent=1 // pred_check
      _
    $region27: #{_lambda_.14} parent=1 // pred_check_branch
      %833 = sbr.rel (0) target = $region29
    $region28: #{_lambda_.14} parent=1 // pred_region
      _
    $region29: #{_lambda_.14} parent=1 // pred_fallthru
      _
    // Predicated region
    $region30: #{_lambda_.14} parent=1 // pred_check
      _
    $region31: #{_lambda_.14} parent=1 // pred_check_branch
      %835 = sbr.rel (0) target = $region33
    $region32: #{_lambda_.14} parent=1 // pred_region
      %836 = dma.done [#allocation3], 1024
    $region33: #{_lambda_.14} parent=1 // pred_fallthru
      _
    // Predicated region
    $region34: #{_lambda_.14} parent=1 // pred_check
      _
    $region35: #{_lambda_.14} parent=1 // pred_check_branch
      %838 = sbr.rel (0) target = $region37
    $region36: #{_lambda_.14} parent=1 // pred_region
      _
    $region37: #{_lambda_.14} parent=1 // pred_fallthru
      _
    %839 = vsyncpa [#allocation3], 1

// kernel: _lambda_.15
$region0: #{_lambda_.15}
  #allocation0 [shape = 'u32[]', space=smem, size = 0x4, offset = 0x4, fixed_abs, tag = 'smem constant byte address 0x4 - core index']
  #allocation1 [shape = 'u32[144,128]{1,0:T(1,128)}', space=vmem, size = 0x12000, scoped, tag = 'internal scratch']
  %s0 = inlined_call_operand.vmem [shape: bf16[64,128], index: 0, kind: input, shape index: {}]
  %s1 = inlined_call_operand.vmem [shape: bf16[128,2], index: 1, kind: input, shape index: {}]
  %s2 = inlined_call_operand.vmem [shape: f32[10,64], index: 2, kind: input, shape index: {}]
  %s3 = inlined_call_operand.vmem [shape: f32[10,1], index: 3, kind: input, shape index: {}]
  %s4 = inlined_call_operand.vmem [shape: f32[10,2], index: 4, kind: output, shape index: {}]
  %s5 = sld [smem:[#allocation0]]
  $region26: #{_lambda_.15} parent=0
    _
  %s7 = ssub.s32 1, %s5
  %s8 = scalar_select 0, %s7, %s5
  // Predicated region
  $region2: #{_lambda_.15} parent=0 // pred_check
    _
  $region3: #{_lambda_.15} parent=0 // pred_check_branch
    %10 = sbr.rel (0) target = $region5
  $region4: #{_lambda_.15} parent=0 // pred_region
    _
  $region5: #{_lambda_.15} parent=0 // pred_fallthru
    _
  // Predicated region
  $region6: #{_lambda_.15} parent=0 // pred_check
    _
  $region7: #{_lambda_.15} parent=0 // pred_check_branch
    %12 = sbr.rel (0) target = $region9
  $region8: #{_lambda_.15} parent=0 // pred_region
    _
  $region9: #{_lambda_.15} parent=0 // pred_fallthru
    _
  // Predicated region
  $region10: #{_lambda_.15} parent=0 // pred_check
    _
  $region11: #{_lambda_.15} parent=0 // pred_check_branch
    %14 = sbr.rel (0) target = $region13
  $region12: #{_lambda_.15} parent=0 // pred_region
    _
  $region13: #{_lambda_.15} parent=0 // pred_fallthru
    _
  // Predicated region
  $region14: #{_lambda_.15} parent=0 // pred_check
    _
  $region15: #{_lambda_.15} parent=0 // pred_check_branch
    %16 = sbr.rel (0) target = $region17
  $region16: #{_lambda_.15} parent=0 // pred_region
    _
  $region17: #{_lambda_.15} parent=0 // pred_fallthru
    _
  %v18 = vld [vmem:[%s0] sm:$0xf]
  %v19 = vld [vmem:[%s0 + $0x4] sm:$0xf]
  %v20 = vld [vmem:[%s0 + $0x8] sm:$0xf]
  %v21 = vld [vmem:[%s0 + $0xc] sm:$0xf]
  %v22 = vld [vmem:[%s0 + $0x10] sm:$0xf]
  %v23 = vld [vmem:[%s0 + $0x14] sm:$0xf]
  %v24 = vld [vmem:[%s0 + $0x18] sm:$0xf]
  %v25 = vld [vmem:[%s0 + $0x1c] sm:$0xf]
  %v26 = vld [vmem:[%s1] sm:$0xf]
  %v27 = vld [vmem:[%s1 + $0x4] sm:$0xf]
  %v28 = vld [vmem:[%s1 + $0x8] sm:$0xf]
  %v29 = vld [vmem:[%s1 + $0xc] sm:$0xf]
  %v30 = vld [vmem:[%s1 + $0x10] sm:$0xf]
  %v31 = vld [vmem:[%s1 + $0x14] sm:$0xf]
  %v32 = vld [vmem:[%s1 + $0x18] sm:$0xf]
  %v33 = vld [vmem:[%s1 + $0x1c] sm:$0xf]
  %v34 = vld [vmem:[%s1 + $0x20] sm:$0xf]
  %v35 = vld [vmem:[%s1 + $0x24] sm:$0xf]
  %v36 = vld [vmem:[%s1 + $0x28] sm:$0xf]
  %v37 = vld [vmem:[%s1 + $0x2c] sm:$0xf]
  %v38 = vld [vmem:[%s1 + $0x30] sm:$0xf]
  %v39 = vld [vmem:[%s1 + $0x34] sm:$0xf]
  %v40 = vld [vmem:[%s1 + $0x38] sm:$0xf]
  %v41 = vld [vmem:[%s1 + $0x3c] sm:$0xf]
  %v50 = vunpack.c.l.b16 %v18
  %v51 = vunpack.c.l.b16 %v19
  %v52 = vunpack.c.l.b16 %v20
  %v53 = vunpack.c.l.b16 %v21
  %v54 = vunpack.c.l.b16 %v22
  %v55 = vunpack.c.l.b16 %v23
  %v56 = vunpack.c.l.b16 %v24
  %v57 = vunpack.c.l.b16 %v25
  %v58 = vpack.c.b16 %v51, %v50
  %v59 = vpack.c.b16 %v53, %v52
  %v60 = vpack.c.b16 %v55, %v54
  %v61 = vpack.c.b16 %v57, %v56
  %v82 = vunpack.c.l.b16 %v26
  %v83 = vunpack.c.l.b16 %v27
  %v84 = vunpack.c.l.b16 %v28
  %v85 = vunpack.c.l.b16 %v29
  %v86 = vunpack.c.l.b16 %v30
  %v87 = vunpack.c.l.b16 %v31
  %v88 = vunpack.c.l.b16 %v32
  %v89 = vunpack.c.l.b16 %v33
  %v90 = vunpack.c.l.b16 %v34
  %v91 = vunpack.c.l.b16 %v35
  %v92 = vunpack.c.l.b16 %v36
  %v93 = vunpack.c.l.b16 %v37
  %v94 = vunpack.c.l.b16 %v38
  %v95 = vunpack.c.l.b16 %v39
  %v96 = vunpack.c.l.b16 %v40
  %v97 = vunpack.c.l.b16 %v41
  %v98 = vpack.c.b16 %v83, %v82
  %v99 = vpack.c.b16 %v85, %v84
  %v100 = vpack.c.b16 %v87, %v86
  %v101 = vpack.c.b16 %v89, %v88
  %v102 = vpack.c.b16 %v91, %v90
  %v103 = vpack.c.b16 %v93, %v92
  %v104 = vpack.c.b16 %v95, %v94
  %v105 = vpack.c.b16 %v97, %v96
  %114 = vmatprep.subr.bf16.mxu0 0
  %115 = vmatpush1.bf16.msra.mxu0 %v98
  %116 = vmatprep.subr.bf16.mxu0 0
  %117 = vmatpush1.bf16.msra.mxu0 %v99
  %118 = vmatprep.subr.bf16.mxu0 0
  %119 = vmatpush1.bf16.msra.mxu0 %v100
  %120 = vmatprep.subr.bf16.mxu0 0
  %121 = vmatpush1.bf16.msra.mxu0 %v101
  %122 = vmatprep.subr.bf16.mxu0 0
  %123 = vmatpush1.bf16.msra.mxu0 %v102
  %124 = vmatprep.subr.bf16.mxu0 0
  %125 = vmatpush1.bf16.msra.mxu0 %v103
  %126 = vmatprep.subr.bf16.mxu0 0
  %127 = vmatpush1.bf16.msra.mxu0 %v104
  %128 = vmatprep.subr.bf16.mxu0 0
  %129 = vmatpush1.bf16.msra.mxu0 %v105
  %130 = vmatprep.subr.bf16.mxu0 0
  %131 = vmatpush1.bf16.msra.mxu0 0
  %132 = vmatprep.subr.bf16.mxu0 0
  %133 = vmatpush1.bf16.msra.mxu0 0
  %134 = vmatprep.subr.bf16.mxu0 0
  %135 = vmatpush1.bf16.msra.mxu0 0
  %136 = vmatprep.subr.bf16.mxu0 0
  %137 = vmatpush1.bf16.msra.mxu0 0
  %138 = vmatprep.subr.bf16.mxu0 0
  %139 = vmatpush1.bf16.msra.mxu0 0
  %140 = vmatprep.subr.bf16.mxu0 0
  %141 = vmatpush1.bf16.msra.mxu0 0
  %142 = vmatprep.subr.bf16.mxu0 0
  %143 = vmatpush1.bf16.msra.mxu0 0
  %144 = vmatprep.subr.bf16.mxu0 0
  %145 = vmatpush1.bf16.msra.mxu0 0
  %146 = vmatprep.mubr.bf16.mxu0 0
  %147 = vmatmul.mubr.bf16.gmra.mrb[0].mxu0 %v58
  %v148 = vpop.f32.mrb[0].mxu0
  %v149 = vadd.f32 0.0, %v148
  %v150 = vpop.f32.mrb[0].mxu0
  %v151 = vpop.f32.mrb[0].mxu0
  %v152 = vadd.f32 0.0, %v151
  %v153 = vpop.f32.mrb[0].mxu0
  %154 = vmatprep.mubr.bf16.mxu0 0
  %155 = vmatmul.mubr.bf16.gmra.mrb[0].mxu0 %v59
  %v156 = vpop.f32.mrb[0].mxu0
  %v157 = vadd.f32 0.0, %v156
  %v158 = vpop.f32.mrb[0].mxu0
  %v159 = vpop.f32.mrb[0].mxu0
  %v160 = vadd.f32 0.0, %v159
  %v161 = vpop.f32.mrb[0].mxu0
  %162 = vmatprep.mubr.bf16.mxu0 0
  %163 = vmatmul.mubr.bf16.gmra.mrb[0].mxu0 %v60
  %v164 = vpop.f32.mrb[0].mxu0
  %v165 = vadd.f32 0.0, %v164
  %v166 = vpop.f32.mrb[0].mxu0
  %v167 = vpop.f32.mrb[0].mxu0
  %v168 = vadd.f32 0.0, %v167
  %v169 = vpop.f32.mrb[0].mxu0
  %170 = vmatprep.mubr.bf16.mxu0 0
  %171 = vmatmul.mubr.bf16.gmra.mrb[0].mxu0 %v61
  %v172 = vpop.f32.mrb[0].mxu0
  %v173 = vadd.f32 0.0, %v172
  %v174 = vpop.f32.mrb[0].mxu0
  %v175 = vpop.f32.mrb[0].mxu0
  %v176 = vadd.f32 0.0, %v175
  %v177 = vpop.f32.mrb[0].mxu0
  %178 = vdwg.mxu0
  %v179 = vld [vmem:[%s2] sm:$0xff]
  %v180 = vld [vmem:[%s2 + $0x8] sm:$0x3]
  %v181 = vld [vmem:[%s3] sm:$0xff]
  %v182 = vld [vmem:[%s3 + $0x8] sm:$0x3]
  %184 = vset.pattern.permute.xlu0 0
  %185 = vperm.xlu0 %184, %v181
  %v186 = vpop.permute.xlu0 %185
  %189 = vset.pattern.permute.xlu0 0
  %190 = vperm.xlu0 %189, %v182
  %v191 = vpop.permute.xlu0 %190
  %vm193 = vcmask 523264
  %v195 = vsel %vm193, %v179, 0
  %v198 = vsel %vm193, %v180, 0
  %200 = vmatprep.subr.mxu0 0.0
  %201 = vmatpush1.msra.mxu0 %v149
  %202 = vmatprep.subr.mxu0 0.0
  %203 = vmatpush1.msra.mxu0 %v152
  %204 = vmatprep.subr.mxu0 0.0
  %205 = vmatpush1.msra.mxu0 %v157
  %206 = vmatprep.subr.mxu0 0.0
  %207 = vmatpush1.msra.mxu0 %v160
  %208 = vmatprep.subr.mxu0 0.0
  %209 = vmatpush1.msra.mxu0 %v165
  %210 = vmatprep.subr.mxu0 0.0
  %211 = vmatpush1.msra.mxu0 %v168
  %212 = vmatprep.subr.mxu0 0.0
  %213 = vmatpush1.msra.mxu0 %v173
  %214 = vmatprep.subr.mxu0 0.0
  %215 = vmatpush1.msra.mxu0 %v176
  %216 = vmatprep.subr.mxu0 0.0
  %217 = vmatpush1.msra.mxu0 0.0
  %218 = vmatprep.subr.mxu0 0.0
  %219 = vmatpush1.msra.mxu0 0.0
  %220 = vmatprep.subr.mxu0 0.0
  %221 = vmatpush1.msra.mxu0 0.0
  %222 = vmatprep.subr.mxu0 0.0
  %223 = vmatpush1.msra.mxu0 0.0
  %224 = vmatprep.subr.mxu0 0.0
  %225 = vmatpush1.msra.mxu0 0.0
  %226 = vmatprep.subr.mxu0 0.0
  %227 = vmatpush1.msra.mxu0 0.0
  %228 = vmatprep.subr.mxu0 0.0
  %229 = vmatpush1.msra.mxu0 0.0
  %230 = vmatprep.subr.mxu0 0.0
  %231 = vmatpush1.msra.mxu0 0.0
  %232 = vmatprep.subr.mxu0 0.0
  %233 = vmatpush1.msra.mxu0 0.0
  %234 = vmatprep.subr.mxu0 0.0
  %235 = vmatpush1.msra.mxu0 0.0
  %236 = vmatprep.subr.mxu0 0.0
  %237 = vmatpush1.msra.mxu0 0.0
  %238 = vmatprep.subr.mxu0 0.0
  %239 = vmatpush1.msra.mxu0 0.0
  %240 = vmatprep.subr.mxu0 0.0
  %241 = vmatpush1.msra.mxu0 0.0
  %242 = vmatprep.subr.mxu0 0.0
  %243 = vmatpush1.msra.mxu0 0.0
  %244 = vmatprep.subr.mxu0 0.0
  %245 = vmatpush1.msra.mxu0 0.0
  %246 = vmatprep.subr.mxu0 0.0
  %247 = vmatpush1.msra.mxu0 0.0
  %248 = vmatprep.subr.mxu0 0.0
  %249 = vmatpush1.msra.mxu0 0.0
  %250 = vmatprep.subr.mxu0 0.0
  %251 = vmatpush1.msra.mxu0 0.0
  %252 = vmatprep.subr.mxu0 0.0
  %253 = vmatpush1.msra.mxu0 0.0
  %254 = vmatprep.subr.mxu0 0.0
  %255 = vmatpush1.msra.mxu0 0.0
  %256 = vmatprep.subr.mxu0 0.0
  %257 = vmatpush1.msra.mxu0 0.0
  %258 = vmatprep.subr.mxu0 0.0
  %259 = vmatpush1.msra.mxu0 0.0
  %260 = vmatprep.subr.mxu0 0.0
  %261 = vmatpush1.msra.mxu0 0.0
  %262 = vmatprep.subr.mxu0 0.0
  %263 = vmatpush1.msra.mxu0 0.0
  %264 = vmatprep.mubr.f32.mxu0 0.0
  %265 = vmatmul.mubr.f32.gmra.mrb[0].mxu0 %v195
  %v266 = vpop.f32.mrb[0].mxu0
  %v267 = vadd.f32 %v186, %v266
  %v268 = vpop.f32.mrb[0].mxu0
  %269 = vmatprep.mubr.f32.mxu0 0.0
  %270 = vmatmul.mubr.f32.gmra.mrb[0].mxu0 %v198
  %v271 = vpop.f32.mrb[0].mxu0
  %v272 = vadd.f32 %v191, %v271
  %v273 = vpop.f32.mrb[0].mxu0
  %274 = vdwg.mxu0
  %vm275 = vcmask 15360
  %276 = vst.msk [vmem:[%s4] sm:$0xff] %vm275, %v267
  %vm277 = vcmask 9216
  %278 = vst.msk [vmem:[%s4 + $0x8] sm:$0x3] %vm277, %v272
  // Predicated region
  $region18: #{_lambda_.15} parent=0 // pred_check
    _
  $region19: #{_lambda_.15} parent=0 // pred_check_branch
    %280 = sbr.rel (0) target = $region21
  $region20: #{_lambda_.15} parent=0 // pred_region
    _
  $region21: #{_lambda_.15} parent=0 // pred_fallthru
    _
  // Predicated region
  $region22: #{_lambda_.15} parent=0 // pred_check
    _
  $region23: #{_lambda_.15} parent=0 // pred_check_branch
    %282 = sbr.rel (0) target = $region25
  $region24: #{_lambda_.15} parent=0 // pred_region
    _
  $region25: #{_lambda_.15} parent=0 // pred_fallthru
    _

</llo_original>
